<compile_context>
chip_gen: v7x
topology: tpu7x:2x2x1
jax: 0.10.0
libtpu: 0.0.40
codegen_flags: <defaults>
</compile_context>

<pallas_src>
import jax
import jax.numpy as jnp
from jax.experimental import pallas as pl
from jax.experimental.pallas import tpu as pltpu

# Layer dims of Model500GELU: 2 -> 200 -> 300 -> 500 -> 500 -> 300 -> 200 -> 2
DIMS = [2, 200, 300, 500, 500, 300, 200, 2]
LANE = 128
SUB = 8


def _round_up(x, m):
    return (x + m - 1) // m * m


# Lane-padded *output* dim of each layer: [256, 384, 512, 512, 384, 256, 128]
PAD_OUT = [_round_up(d, LANE) for d in DIMS[1:]]


def mlp_kernel(x_ref,
               w1, b1, w2, b2, w3, b3, w4, b4, w5, b5, w6, b6, w7, b7,
               o_ref):
    """Fused 7-layer MLP on one batch tile.

    x_ref : [block_b, 2]   f32 (real input features, no lane padding)
    w1    : [8, 256]       f32 (rows 0,1 real; layer 1 runs on the VPU)
    w2..w7: [in_p, out_p]   bf16 (zero-padded, MXU matmuls, f32 accumulation)
    b_i   : [1, out_p]     f32 (zero-padded)
    o_ref : [block_b, 2]   f32 (only the real output columns)
    """
    x = x_ref[...]                                  # [bb, 2] f32
    w1v = w1[...]                                   # [8, 256] f32
    # Layer 1 on the VPU: h = x[:,0]*W1_row0 + x[:,1]*W1_row1 + b1
    h = x[:, 0:1] * w1v[0:1, :] + x[:, 1:2] * w1v[1:2, :] + b1[...]
    h = jnp.maximum(h, 0.0)
    # Layers 2..6: Linear + ReLU (bf16 MXU matmul, f32 accumulation)
    for w, b in ((w2, b2), (w3, b3), (w4, b4), (w5, b5), (w6, b6)):
        h = jnp.dot(h.astype(w.dtype), w[...],
                    preferred_element_type=jnp.float32) + b[...]
        h = jnp.maximum(h, 0.0)
    # Layer 7: Linear only; keep only the 2 real output columns.
    out = jnp.dot(h.astype(w7.dtype), w7[...],
                  preferred_element_type=jnp.float32) + b7[...]
    o_ref[...] = out[:, :o_ref.shape[-1]]


def pad_params(params, weight_dtype=jnp.bfloat16):
    """One-time setup: zero-pad to lane multiples; hidden weights -> bf16.

    Zero padding is exact: padded weight rows/cols contribute nothing.
    Layer-1's weight stays f32 (it is used on the VPU, not the MXU).
    """
    padded = []
    for i, (w, b) in enumerate(params):
        out_p = PAD_OUT[i]
        if i == 0:
            w_p = jnp.zeros((SUB, out_p), jnp.float32)
            w_p = w_p.at[:w.shape[0], :w.shape[1]].set(w.astype(jnp.float32))
        else:
            in_p = PAD_OUT[i - 1]
            w_p = jnp.zeros((in_p, out_p), weight_dtype)
            w_p = w_p.at[:w.shape[0], :w.shape[1]].set(w.astype(weight_dtype))
        b_p = jnp.zeros((1, out_p), jnp.float32)
        b_p = b_p.at[:, :b.shape[1]].set(b.astype(jnp.float32))
        padded.append((w_p, b_p))
    return padded


def model500gelu_forward(x, padded_params, *, max_block_b=2048):
    """x: [B, 2] float.  padded_params: output of pad_params()."""
    B = x.shape[0]
    B8 = _round_up(B, SUB)                         # f32 sublane multiple
    if B8 <= SUB:
        block_b = B8
    else:
        # >=2 tiles so both v7x TensorCores get work; cap the tile at 2048 rows.
        block_b = min(max_block_b, _round_up(pl.cdiv(B8, 2), SUB))
    B_pad = _round_up(B8, block_b)
    grid_b = B_pad // block_b

    x = x.astype(jnp.float32)
    if B_pad != B:
        x_in = jnp.zeros((B_pad, DIMS[0]), jnp.float32).at[:B].set(x)
    else:
        x_in = x

    flat_inputs = [x_in]
    in_specs = [pl.BlockSpec((block_b, DIMS[0]), lambda i: (i, 0))]
    for (w, b) in padded_params:
        flat_inputs.append(w)
        in_specs.append(pl.BlockSpec(w.shape, lambda i: (0, 0)))  # VMEM-resident
        flat_inputs.append(b)
        in_specs.append(pl.BlockSpec(b.shape, lambda i: (0, 0)))

    out = pl.pallas_call(
        mlp_kernel,
        out_shape=jax.ShapeDtypeStruct((B_pad, DIMS[-1]), jnp.float32),
        grid=(grid_b,),
        in_specs=in_specs,
        out_specs=pl.BlockSpec((block_b, DIMS[-1]), lambda i: (i, 0)),
        compiler_params=pltpu.CompilerParams(
            dimension_semantics=("parallel",),
            vmem_limit_bytes=48 * 1024 * 1024),
    )(*flat_inputs)

    # Padded rows (B..B_pad) carry bias/ReLU garbage; never consume them.
    return out[:B] if B_pad != B else out


def init_params(key):
    """Deterministic init mimicking PyTorch's default Linear init (U(-k, k)).

    Weights stored as [in, out] (transpose of PyTorch's [out, in]); bias [1, out].
    """
    params = []
    for i in range(len(DIMS) - 1):
        fan_in, fan_out = DIMS[i], DIMS[i + 1]
        key, kw, kb = jax.random.split(key, 3)
        bound = 1.0 / jnp.sqrt(fan_in)
        w = jax.random.uniform(kw, (fan_in, fan_out), jnp.float32,
                               minval=-bound, maxval=bound)
        b = jax.random.uniform(kb, (1, fan_out), jnp.float32,
                               minval=-bound, maxval=bound)
        params.append((w, b))
    return params


def reference_forward_f32(x, params):
    """Pure f32 reference (matches the PyTorch module's math)."""
    h = x.astype(jnp.float32)
    for i, (w, b) in enumerate(params):
        h = h @ w + b
        if i < len(params) - 1:
            h = jnp.maximum(h, 0.0)
    return h


def reference_forward_matched(x, params, weight_dtype=jnp.bfloat16):
    """Precision-matched reference: layer 1 in f32 (VPU path), layers 2..7
    with bf16 weights/activations and f32 accumulation (MXU path)."""
    h = x.astype(jnp.float32)
    for i, (w, b) in enumerate(params):
        if i == 0:
            h = h @ w.astype(jnp.float32) + b
        else:
            h = jnp.dot(h.astype(weight_dtype), w.astype(weight_dtype),
                        preferred_element_type=jnp.float32) + b
        if i < len(params) - 1:
            h = jnp.maximum(h, 0.0)
    return h


if __name__ == "__main__":
    key = jax.random.PRNGKey(0)
    key, kx = jax.random.split(key)

    batch = 8
    x = jax.random.normal(kx, (batch, DIMS[0]), jnp.float32)

    params = init_params(key)
    padded_params = pad_params(params)

    out = model500gelu_forward(x, padded_params)
    out = jax.block_until_ready(out)

    assert out.shape == (batch, DIMS[-1]), out.shape

    # Tight check against the precision-matched reference (what the kernel computes).
    ref_m = reference_forward_matched(x, params)
    assert jnp.allclose(out, ref_m, atol=2e-3, rtol=2e-3), \
        "mismatch vs precision-matched reference"

    # Loose check against the full-f32 reference (module semantics).
    ref_f32 = reference_forward_f32(x, params)
    assert jnp.allclose(out, ref_f32, atol=1e-1, rtol=1e-1), \
        "mismatch vs f32 reference"

    print("KERNEL_OK")
</pallas_src>

<mosaic_0001>
module attributes {stable_mosaic.version = 11 : i64} {
  func.func @mlp_kernel(%arg0: i32, %arg1: memref<8x2xf32, #tpu.memory_space<vmem>>, %arg2: memref<8x256xf32, #tpu.memory_space<vmem>>, %arg3: memref<1x256xf32, #tpu.memory_space<vmem>>, %arg4: memref<256x384xbf16, #tpu.memory_space<vmem>>, %arg5: memref<1x384xf32, #tpu.memory_space<vmem>>, %arg6: memref<384x512xbf16, #tpu.memory_space<vmem>>, %arg7: memref<1x512xf32, #tpu.memory_space<vmem>>, %arg8: memref<512x512xbf16, #tpu.memory_space<vmem>>, %arg9: memref<1x512xf32, #tpu.memory_space<vmem>>, %arg10: memref<512x384xbf16, #tpu.memory_space<vmem>>, %arg11: memref<1x384xf32, #tpu.memory_space<vmem>>, %arg12: memref<384x256xbf16, #tpu.memory_space<vmem>>, %arg13: memref<1x256xf32, #tpu.memory_space<vmem>>, %arg14: memref<256x128xbf16, #tpu.memory_space<vmem>>, %arg15: memref<1x128xf32, #tpu.memory_space<vmem>>, %arg16: memref<8x2xf32, #tpu.memory_space<vmem>>) attributes {dimension_semantics = [#tpu.dimension_semantics<parallel>], iteration_bounds = array<i64: 1>, scalar_prefetch = 0 : i64, scratch_operands = 0 : i64, tpu.core_type = #tpu.core_type<tc>, window_params = [{transform_indices = @transform_0, window_bounds = array<i64: 8, 2>}, {pipeline_mode = #tpu.pipeline_mode<synchronous>, transform_indices = @transform_1, window_bounds = array<i64: 8, 256>}, {pipeline_mode = #tpu.pipeline_mode<synchronous>, transform_indices = @transform_2, window_bounds = array<i64: 1, 256>}, {pipeline_mode = #tpu.pipeline_mode<synchronous>, transform_indices = @transform_3, window_bounds = array<i64: 256, 384>}, {pipeline_mode = #tpu.pipeline_mode<synchronous>, transform_indices = @transform_4, window_bounds = array<i64: 1, 384>}, {pipeline_mode = #tpu.pipeline_mode<synchronous>, transform_indices = @transform_5, window_bounds = array<i64: 384, 512>}, {pipeline_mode = #tpu.pipeline_mode<synchronous>, transform_indices = @transform_6, window_bounds = array<i64: 1, 512>}, {pipeline_mode = #tpu.pipeline_mode<synchronous>, transform_indices = @transform_7, window_bounds = array<i64: 512, 512>}, {pipeline_mode = #tpu.pipeline_mode<synchronous>, transform_indices = @transform_8, window_bounds = array<i64: 1, 512>}, {pipeline_mode = #tpu.pipeline_mode<synchronous>, transform_indices = @transform_9, window_bounds = array<i64: 512, 384>}, {pipeline_mode = #tpu.pipeline_mode<synchronous>, transform_indices = @transform_10, window_bounds = array<i64: 1, 384>}, {pipeline_mode = #tpu.pipeline_mode<synchronous>, transform_indices = @transform_11, window_bounds = array<i64: 384, 256>}, {pipeline_mode = #tpu.pipeline_mode<synchronous>, transform_indices = @transform_12, window_bounds = array<i64: 1, 256>}, {pipeline_mode = #tpu.pipeline_mode<synchronous>, transform_indices = @transform_13, window_bounds = array<i64: 256, 128>}, {pipeline_mode = #tpu.pipeline_mode<synchronous>, transform_indices = @transform_14, window_bounds = array<i64: 1, 128>}, {transform_indices = @transform_15, window_bounds = array<i64: 8, 2>}]} {
    %c0 = arith.constant 0 : index
    %c0_0 = arith.constant 0 : index
    %0 = vector.load %arg1[%c0, %c0_0] : memref<8x2xf32, #tpu.memory_space<vmem>>, vector<8x2xf32>
    %c0_1 = arith.constant 0 : index
    %c0_2 = arith.constant 0 : index
    %1 = vector.load %arg2[%c0_1, %c0_2] : memref<8x256xf32, #tpu.memory_space<vmem>>, vector<8x256xf32>
    %2 = vector.extract_strided_slice %0 {offsets = [0, 0], sizes = [8, 1], strides = [1, 1]} : vector<8x2xf32> to vector<8x1xf32>
    %3 = vector.extract_strided_slice %1 {offsets = [0, 0], sizes = [1, 256], strides = [1, 1]} : vector<8x256xf32> to vector<1x256xf32>
    %4 = vector.broadcast %2 : vector<8x1xf32> to vector<8x256xf32>
    %5 = vector.broadcast %3 : vector<1x256xf32> to vector<8x256xf32>
    %6 = arith.mulf %4, %5 : vector<8x256xf32>
    %7 = vector.extract_strided_slice %0 {offsets = [0, 1], sizes = [8, 1], strides = [1, 1]} : vector<8x2xf32> to vector<8x1xf32>
    %8 = vector.extract_strided_slice %1 {offsets = [1, 0], sizes = [1, 256], strides = [1, 1]} : vector<8x256xf32> to vector<1x256xf32>
    %9 = vector.broadcast %7 : vector<8x1xf32> to vector<8x256xf32>
    %10 = vector.broadcast %8 : vector<1x256xf32> to vector<8x256xf32>
    %11 = arith.mulf %9, %10 : vector<8x256xf32>
    %12 = arith.addf %6, %11 : vector<8x256xf32>
    %c0_3 = arith.constant 0 : index
    %c0_4 = arith.constant 0 : index
    %13 = vector.load %arg3[%c0_3, %c0_4] : memref<1x256xf32, #tpu.memory_space<vmem>>, vector<1x256xf32>
    %14 = vector.broadcast %13 : vector<1x256xf32> to vector<8x256xf32>
    %15 = arith.addf %12, %14 : vector<8x256xf32>
    %cst = arith.constant 0.000000e+00 : f32
    %16 = vector.broadcast %cst : f32 to vector<8x256xf32>
    %17 = arith.maximumf %15, %16 : vector<8x256xf32>
    %18 = arith.truncf %17 : vector<8x256xf32> to vector<8x256xbf16>
    %c0_5 = arith.constant 0 : index
    %c0_6 = arith.constant 0 : index
    %19 = vector.load %arg4[%c0_5, %c0_6] : memref<256x384xbf16, #tpu.memory_space<vmem>>, vector<256x384xbf16>
    %cst_7 = arith.constant dense<0.000000e+00> : vector<8x384xf32>
    %20 = tpu.matmul %18, %19, %cst_7 {dimension_numbers = #tpu.dot_dimension_numbers<[1], [0], [0], [1], [0, 0, 1, 1], [], []>} : vector<8x256xbf16>, vector<256x384xbf16>, vector<8x384xf32> -> vector<8x384xf32>
    %c0_8 = arith.constant 0 : index
    %c0_9 = arith.constant 0 : index
    %21 = vector.load %arg5[%c0_8, %c0_9] : memref<1x384xf32, #tpu.memory_space<vmem>>, vector<1x384xf32>
    %22 = vector.broadcast %21 : vector<1x384xf32> to vector<8x384xf32>
    %23 = arith.addf %20, %22 : vector<8x384xf32>
    %cst_10 = arith.constant 0.000000e+00 : f32
    %24 = vector.broadcast %cst_10 : f32 to vector<8x384xf32>
    %25 = arith.maximumf %23, %24 : vector<8x384xf32>
    %26 = arith.truncf %25 : vector<8x384xf32> to vector<8x384xbf16>
    %c0_11 = arith.constant 0 : index
    %c0_12 = arith.constant 0 : index
    %27 = vector.load %arg6[%c0_11, %c0_12] : memref<384x512xbf16, #tpu.memory_space<vmem>>, vector<384x512xbf16>
    %cst_13 = arith.constant dense<0.000000e+00> : vector<8x512xf32>
    %28 = tpu.matmul %26, %27, %cst_13 {dimension_numbers = #tpu.dot_dimension_numbers<[1], [0], [0], [1], [0, 0, 1, 1], [], []>} : vector<8x384xbf16>, vector<384x512xbf16>, vector<8x512xf32> -> vector<8x512xf32>
    %c0_14 = arith.constant 0 : index
    %c0_15 = arith.constant 0 : index
    %29 = vector.load %arg7[%c0_14, %c0_15] : memref<1x512xf32, #tpu.memory_space<vmem>>, vector<1x512xf32>
    %30 = vector.broadcast %29 : vector<1x512xf32> to vector<8x512xf32>
    %31 = arith.addf %28, %30 : vector<8x512xf32>
    %cst_16 = arith.constant 0.000000e+00 : f32
    %32 = vector.broadcast %cst_16 : f32 to vector<8x512xf32>
    %33 = arith.maximumf %31, %32 : vector<8x512xf32>
    %34 = arith.truncf %33 : vector<8x512xf32> to vector<8x512xbf16>
    %c0_17 = arith.constant 0 : index
    %c0_18 = arith.constant 0 : index
    %35 = vector.load %arg8[%c0_17, %c0_18] : memref<512x512xbf16, #tpu.memory_space<vmem>>, vector<512x512xbf16>
    %cst_19 = arith.constant dense<0.000000e+00> : vector<8x512xf32>
    %36 = tpu.matmul %34, %35, %cst_19 {dimension_numbers = #tpu.dot_dimension_numbers<[1], [0], [0], [1], [0, 0, 1, 1], [], []>} : vector<8x512xbf16>, vector<512x512xbf16>, vector<8x512xf32> -> vector<8x512xf32>
    %c0_20 = arith.constant 0 : index
    %c0_21 = arith.constant 0 : index
    %37 = vector.load %arg9[%c0_20, %c0_21] : memref<1x512xf32, #tpu.memory_space<vmem>>, vector<1x512xf32>
    %38 = vector.broadcast %37 : vector<1x512xf32> to vector<8x512xf32>
    %39 = arith.addf %36, %38 : vector<8x512xf32>
    %cst_22 = arith.constant 0.000000e+00 : f32
    %40 = vector.broadcast %cst_22 : f32 to vector<8x512xf32>
    %41 = arith.maximumf %39, %40 : vector<8x512xf32>
    %42 = arith.truncf %41 : vector<8x512xf32> to vector<8x512xbf16>
    %c0_23 = arith.constant 0 : index
    %c0_24 = arith.constant 0 : index
    %43 = vector.load %arg10[%c0_23, %c0_24] : memref<512x384xbf16, #tpu.memory_space<vmem>>, vector<512x384xbf16>
    %cst_25 = arith.constant dense<0.000000e+00> : vector<8x384xf32>
    %44 = tpu.matmul %42, %43, %cst_25 {dimension_numbers = #tpu.dot_dimension_numbers<[1], [0], [0], [1], [0, 0, 1, 1], [], []>} : vector<8x512xbf16>, vector<512x384xbf16>, vector<8x384xf32> -> vector<8x384xf32>
    %c0_26 = arith.constant 0 : index
    %c0_27 = arith.constant 0 : index
    %45 = vector.load %arg11[%c0_26, %c0_27] : memref<1x384xf32, #tpu.memory_space<vmem>>, vector<1x384xf32>
    %46 = vector.broadcast %45 : vector<1x384xf32> to vector<8x384xf32>
    %47 = arith.addf %44, %46 : vector<8x384xf32>
    %cst_28 = arith.constant 0.000000e+00 : f32
    %48 = vector.broadcast %cst_28 : f32 to vector<8x384xf32>
    %49 = arith.maximumf %47, %48 : vector<8x384xf32>
    %50 = arith.truncf %49 : vector<8x384xf32> to vector<8x384xbf16>
    %c0_29 = arith.constant 0 : index
    %c0_30 = arith.constant 0 : index
    %51 = vector.load %arg12[%c0_29, %c0_30] : memref<384x256xbf16, #tpu.memory_space<vmem>>, vector<384x256xbf16>
    %cst_31 = arith.constant dense<0.000000e+00> : vector<8x256xf32>
    %52 = tpu.matmul %50, %51, %cst_31 {dimension_numbers = #tpu.dot_dimension_numbers<[1], [0], [0], [1], [0, 0, 1, 1], [], []>} : vector<8x384xbf16>, vector<384x256xbf16>, vector<8x256xf32> -> vector<8x256xf32>
    %c0_32 = arith.constant 0 : index
    %c0_33 = arith.constant 0 : index
    %53 = vector.load %arg13[%c0_32, %c0_33] : memref<1x256xf32, #tpu.memory_space<vmem>>, vector<1x256xf32>
    %54 = vector.broadcast %53 : vector<1x256xf32> to vector<8x256xf32>
    %55 = arith.addf %52, %54 : vector<8x256xf32>
    %cst_34 = arith.constant 0.000000e+00 : f32
    %56 = vector.broadcast %cst_34 : f32 to vector<8x256xf32>
    %57 = arith.maximumf %55, %56 : vector<8x256xf32>
    %58 = arith.truncf %57 : vector<8x256xf32> to vector<8x256xbf16>
    %c0_35 = arith.constant 0 : index
    %c0_36 = arith.constant 0 : index
    %59 = vector.load %arg14[%c0_35, %c0_36] : memref<256x128xbf16, #tpu.memory_space<vmem>>, vector<256x128xbf16>
    %cst_37 = arith.constant dense<0.000000e+00> : vector<8x128xf32>
    %60 = tpu.matmul %58, %59, %cst_37 {dimension_numbers = #tpu.dot_dimension_numbers<[1], [0], [0], [1], [0, 0, 1, 1], [], []>} : vector<8x256xbf16>, vector<256x128xbf16>, vector<8x128xf32> -> vector<8x128xf32>
    %c0_38 = arith.constant 0 : index
    %c0_39 = arith.constant 0 : index
    %61 = vector.load %arg15[%c0_38, %c0_39] : memref<1x128xf32, #tpu.memory_space<vmem>>, vector<1x128xf32>
    %62 = vector.broadcast %61 : vector<1x128xf32> to vector<8x128xf32>
    %63 = arith.addf %60, %62 : vector<8x128xf32>
    %64 = vector.extract_strided_slice %63 {offsets = [0, 0], sizes = [8, 2], strides = [1, 1]} : vector<8x128xf32> to vector<8x2xf32>
    %c0_40 = arith.constant 0 : index
    %c0_41 = arith.constant 0 : index
    %65 = vector.load %arg16[%c0_40, %c0_41] : memref<8x2xf32, #tpu.memory_space<vmem>>, vector<8x2xf32>
    tpu.vector_store %arg16[%c0_40, %c0_41], %64 {strides = array<i32>} : memref<8x2xf32, #tpu.memory_space<vmem>>, vector<8x2xf32>,
    return
  }
  func.func @transform_0(%arg0: i32) -> (i32, i32) {
    %c0_i32 = arith.constant 0 : i32
    %c0_i32_0 = arith.constant 0 : i32
    return %arg0, %c0_i32 : i32, i32
  }
  func.func @transform_1(%arg0: i32) -> (i32, i32) {
    %c0_i32 = arith.constant 0 : i32
    %c0_i32_0 = arith.constant 0 : i32
    %c0_i32_1 = arith.constant 0 : i32
    return %c0_i32, %c0_i32_0 : i32, i32
  }
  func.func @transform_2(%arg0: i32) -> (i32, i32) {
    %c0_i32 = arith.constant 0 : i32
    %c0_i32_0 = arith.constant 0 : i32
    %c0_i32_1 = arith.constant 0 : i32
    return %c0_i32, %c0_i32_0 : i32, i32
  }
  func.func @transform_3(%arg0: i32) -> (i32, i32) {
    %c0_i32 = arith.constant 0 : i32
    %c0_i32_0 = arith.constant 0 : i32
    %c0_i32_1 = arith.constant 0 : i32
    return %c0_i32, %c0_i32_0 : i32, i32
  }
  func.func @transform_4(%arg0: i32) -> (i32, i32) {
    %c0_i32 = arith.constant 0 : i32
    %c0_i32_0 = arith.constant 0 : i32
    %c0_i32_1 = arith.constant 0 : i32
    return %c0_i32, %c0_i32_0 : i32, i32
  }
  func.func @transform_5(%arg0: i32) -> (i32, i32) {
    %c0_i32 = arith.constant 0 : i32
    %c0_i32_0 = arith.constant 0 : i32
    %c0_i32_1 = arith.constant 0 : i32
    return %c0_i32, %c0_i32_0 : i32, i32
  }
  func.func @transform_6(%arg0: i32) -> (i32, i32) {
    %c0_i32 = arith.constant 0 : i32
    %c0_i32_0 = arith.constant 0 : i32
    %c0_i32_1 = arith.constant 0 : i32
    return %c0_i32, %c0_i32_0 : i32, i32
  }
  func.func @transform_7(%arg0: i32) -> (i32, i32) {
    %c0_i32 = arith.constant 0 : i32
    %c0_i32_0 = arith.constant 0 : i32
    %c0_i32_1 = arith.constant 0 : i32
    return %c0_i32, %c0_i32_0 : i32, i32
  }
  func.func @transform_8(%arg0: i32) -> (i32, i32) {
    %c0_i32 = arith.constant 0 : i32
    %c0_i32_0 = arith.constant 0 : i32
    %c0_i32_1 = arith.constant 0 : i32
    return %c0_i32, %c0_i32_0 : i32, i32
  }
  func.func @transform_9(%arg0: i32) -> (i32, i32) {
    %c0_i32 = arith.constant 0 : i32
    %c0_i32_0 = arith.constant 0 : i32
    %c0_i32_1 = arith.constant 0 : i32
    return %c0_i32, %c0_i32_0 : i32, i32
  }
  func.func @transform_10(%arg0: i32) -> (i32, i32) {
    %c0_i32 = arith.constant 0 : i32
    %c0_i32_0 = arith.constant 0 : i32
    %c0_i32_1 = arith.constant 0 : i32
    return %c0_i32, %c0_i32_0 : i32, i32
  }
  func.func @transform_11(%arg0: i32) -> (i32, i32) {
    %c0_i32 = arith.constant 0 : i32
    %c0_i32_0 = arith.constant 0 : i32
    %c0_i32_1 = arith.constant 0 : i32
    return %c0_i32, %c0_i32_0 : i32, i32
  }
  func.func @transform_12(%arg0: i32) -> (i32, i32) {
    %c0_i32 = arith.constant 0 : i32
    %c0_i32_0 = arith.constant 0 : i32
    %c0_i32_1 = arith.constant 0 : i32
    return %c0_i32, %c0_i32_0 : i32, i32
  }
  func.func @transform_13(%arg0: i32) -> (i32, i32) {
    %c0_i32 = arith.constant 0 : i32
    %c0_i32_0 = arith.constant 0 : i32
    %c0_i32_1 = arith.constant 0 : i32
    return %c0_i32, %c0_i32_0 : i32, i32
  }
  func.func @transform_14(%arg0: i32) -> (i32, i32) {
    %c0_i32 = arith.constant 0 : i32
    %c0_i32_0 = arith.constant 0 : i32
    %c0_i32_1 = arith.constant 0 : i32
    return %c0_i32, %c0_i32_0 : i32, i32
  }
  func.func @transform_15(%arg0: i32) -> (i32, i32) {
    %c0_i32 = arith.constant 0 : i32
    %c0_i32_0 = arith.constant 0 : i32
    return %arg0, %c0_i32 : i32, i32
  }
}

</mosaic_0001>

<llo_original>
// kernel: tpu_custom_call.1
$region0: #{tpu_custom_call.1}
  #allocation0 [shape = 'u32[]', space=smem, size = 0x4, offset = 0x4, fixed_abs, tag = 'smem constant byte address 0x4 - core index']
  #allocation1 [shape = 'u32[144,128]{1,0:T(1,128)}', space=vmem, size = 0x12000, scoped, tag = 'internal scratch']
  %s0 = inlined_call_operand.vmem [shape: f32[8,2], index: 0, kind: input, shape index: {}]
  %s1 = inlined_call_operand.hbm [shape: f32[8,256], index: 1, kind: input, shape index: {}]
  %s2 = inlined_call_operand.vmem [shape: f32[1,256], index: 2, kind: input, shape index: {}]
  %s3 = inlined_call_operand.hbm [shape: bf16[256,384], index: 3, kind: input, shape index: {}]
  %s4 = inlined_call_operand.vmem [shape: f32[1,384], index: 4, kind: input, shape index: {}]
  %s5 = inlined_call_operand.hbm [shape: bf16[384,512], index: 5, kind: input, shape index: {}]
  %s6 = inlined_call_operand.vmem [shape: f32[1,512], index: 6, kind: input, shape index: {}]
  %s7 = inlined_call_operand.hbm [shape: bf16[512,512], index: 7, kind: input, shape index: {}]
  %s8 = inlined_call_operand.vmem [shape: f32[1,512], index: 8, kind: input, shape index: {}]
  %s9 = inlined_call_operand.hbm [shape: bf16[512,384], index: 9, kind: input, shape index: {}]
  %s10 = inlined_call_operand.vmem [shape: f32[1,384], index: 10, kind: input, shape index: {}]
  %s11 = inlined_call_operand.hbm [shape: bf16[384,256], index: 11, kind: input, shape index: {}]
  %s12 = inlined_call_operand.vmem [shape: f32[1,256], index: 12, kind: input, shape index: {}]
  %s13 = inlined_call_operand.hbm [shape: bf16[256,128], index: 13, kind: input, shape index: {}]
  %s14 = inlined_call_operand.vmem [shape: f32[1,128], index: 14, kind: input, shape index: {}]
  %s15 = inlined_call_operand.vmem [shape: f32[8,2], index: 15, kind: output, shape index: {}]
  %s16 = sld [smem:[#allocation0]]
  $region98: #{tpu_custom_call.1} parent=0
    _
  %s18 = ssub.s32 1, %s16
  %s19 = scalar_select 0, %s18, %s16
  $region1: #{tpu_custom_call.1} parent=0
    #allocation2 [shape = 'u8[8192]{0}', space=vmem, size = 0x2000, scoped, tag = 'input window, operand 1, single buffered']
    #allocation3 [shape = 's32[1]{0}', space=sflag, size = 0x4, scoped, tag = 'scoped memory for tpu_custom_call.1']
    #allocation4 [shape = 'u8[196608]{0}', space=vmem, size = 0x30000, scoped, tag = 'input window, operand 3, single buffered']
    #allocation5 [shape = 's32[1]{0}', space=sflag, size = 0x4, scoped, tag = 'scoped memory for tpu_custom_call.1']
    #allocation6 [shape = 'u8[393216]{0}', space=vmem, size = 0x60000, scoped, tag = 'input window, operand 5, single buffered']
    #allocation7 [shape = 'u8[524288]{0}', space=vmem, size = 0x80000, scoped, tag = 'input window, operand 7, single buffered']
    #allocation8 [shape = 's32[1]{0}', space=sflag, size = 0x4, scoped, tag = 'scoped memory for tpu_custom_call.1']
    #allocation9 [shape = 'u8[393216]{0}', space=vmem, size = 0x60000, scoped, tag = 'input window, operand 9, single buffered']
    #allocation10 [shape = 'u8[196608]{0}', space=vmem, size = 0x30000, scoped, tag = 'input window, operand 11, single buffered']
    #allocation11 [shape = 's32[1]{0}', space=sflag, size = 0x4, scoped, tag = 'scoped memory for tpu_custom_call.1']
    #allocation12 [shape = 'u8[65536]{0}', space=vmem, size = 0x10000, scoped, tag = 'input window, operand 13, single buffered']
    %20 = vsyncpa [#allocation3], 0
    %21 = vsyncpa [#allocation5], 0
    %22 = vsyncpa [#allocation8], 0
    %23 = vsyncpa [#allocation11], 0
    // Predicated region
    $region2: #{tpu_custom_call.1} parent=1 // pred_check
      _
    $region3: #{tpu_custom_call.1} parent=1 // pred_check_branch
      %25 = sbr.rel (0) target = $region5
    $region4: #{tpu_custom_call.1} parent=1 // pred_region
      _
    $region5: #{tpu_custom_call.1} parent=1 // pred_fallthru
      _
    // Predicated region
    $region6: #{tpu_custom_call.1} parent=1 // pred_check
      _
    $region7: #{tpu_custom_call.1} parent=1 // pred_check_branch
      %27 = sbr.rel (0) target = $region9
    $region8: #{tpu_custom_call.1} parent=1 // pred_region
      %s29 = ssub.s32 256, 256
      %30 = vsyncadd [#allocation3], %s29
      %s32 = sshll.u32 [#allocation2], 4
      %s33 = int_to_ptr.vmem [resolvable:$true] %s32
      %35 = dma.hbm_to_vmem [thread:$0]  %s1, 256, %s33, [#allocation3]
    $region9: #{tpu_custom_call.1} parent=1 // pred_fallthru
      _
    // Predicated region
    $region10: #{tpu_custom_call.1} parent=1 // pred_check
      _
    $region11: #{tpu_custom_call.1} parent=1 // pred_check_branch
      %37 = sbr.rel (0) target = $region13
    $region12: #{tpu_custom_call.1} parent=1 // pred_region
      _
    $region13: #{tpu_custom_call.1} parent=1 // pred_fallthru
      _
    // Predicated region
    $region14: #{tpu_custom_call.1} parent=1 // pred_check
      _
    $region15: #{tpu_custom_call.1} parent=1 // pred_check_branch
      %39 = sbr.rel (0) target = $region17
    $region16: #{tpu_custom_call.1} parent=1 // pred_region
      %s41 = ssub.s32 6144, 6144
      %42 = vsyncadd [#allocation5], %s41
      %s43 = sshll.u32 [#allocation4], 4
      %s44 = int_to_ptr.vmem [resolvable:$true] %s43
      %49 = dma.hbm_to_vmem [thread:$0]  %s3, 6144, %s44, [#allocation5], 192, 192, 12
    $region17: #{tpu_custom_call.1} parent=1 // pred_fallthru
      _
    // Predicated region
    $region18: #{tpu_custom_call.1} parent=1 // pred_check
      _
    $region19: #{tpu_custom_call.1} parent=1 // pred_check_branch
      %51 = sbr.rel (0) target = $region21
    $region20: #{tpu_custom_call.1} parent=1 // pred_region
      _
    $region21: #{tpu_custom_call.1} parent=1 // pred_fallthru
      _
    // Predicated region
    $region22: #{tpu_custom_call.1} parent=1 // pred_check
      _
    $region23: #{tpu_custom_call.1} parent=1 // pred_check_branch
      %53 = sbr.rel (0) target = $region25
    $region24: #{tpu_custom_call.1} parent=1 // pred_region
      %s55 = ssub.s32 12288, 12288
      %56 = vsyncadd [#allocation5], %s55
      %s57 = sshll.u32 [#allocation6], 4
      %s58 = int_to_ptr.vmem [resolvable:$true] %s57
      %63 = dma.hbm_to_vmem [thread:$0]  %s5, 12288, %s58, [#allocation5], 256, 256, 16
    $region25: #{tpu_custom_call.1} parent=1 // pred_fallthru
      _
    // Predicated region
    $region26: #{tpu_custom_call.1} parent=1 // pred_check
      _
    $region27: #{tpu_custom_call.1} parent=1 // pred_check_branch
      %65 = sbr.rel (0) target = $region29
    $region28: #{tpu_custom_call.1} parent=1 // pred_region
      _
    $region29: #{tpu_custom_call.1} parent=1 // pred_fallthru
      _
    // Predicated region
    $region30: #{tpu_custom_call.1} parent=1 // pred_check
      _
    $region31: #{tpu_custom_call.1} parent=1 // pred_check_branch
      %67 = sbr.rel (0) target = $region33
    $region32: #{tpu_custom_call.1} parent=1 // pred_region
      %s69 = ssub.s32 16384, 16384
      %70 = vsyncadd [#allocation8], %s69
      %s71 = sshll.u32 [#allocation7], 4
      %s72 = int_to_ptr.vmem [resolvable:$true] %s71
      %77 = dma.hbm_to_vmem [thread:$0]  %s7, 16384, %s72, [#allocation8], 256, 256, 16
    $region33: #{tpu_custom_call.1} parent=1 // pred_fallthru
      _
    // Predicated region
    $region34: #{tpu_custom_call.1} parent=1 // pred_check
      _
    $region35: #{tpu_custom_call.1} parent=1 // pred_check_branch
      %79 = sbr.rel (0) target = $region37
    $region36: #{tpu_custom_call.1} parent=1 // pred_region
      _
    $region37: #{tpu_custom_call.1} parent=1 // pred_fallthru
      _
    // Predicated region
    $region38: #{tpu_custom_call.1} parent=1 // pred_check
      _
    $region39: #{tpu_custom_call.1} parent=1 // pred_check_branch
      %81 = sbr.rel (0) target = $region41
    $region40: #{tpu_custom_call.1} parent=1 // pred_region
      %s83 = ssub.s32 12288, 12288
      %84 = vsyncadd [#allocation8], %s83
      %s85 = sshll.u32 [#allocation9], 4
      %s86 = int_to_ptr.vmem [resolvable:$true] %s85
      %91 = dma.hbm_to_vmem [thread:$0]  %s9, 12288, %s86, [#allocation8], 192, 192, 12
    $region41: #{tpu_custom_call.1} parent=1 // pred_fallthru
      _
    // Predicated region
    $region42: #{tpu_custom_call.1} parent=1 // pred_check
      _
    $region43: #{tpu_custom_call.1} parent=1 // pred_check_branch
      %93 = sbr.rel (0) target = $region45
    $region44: #{tpu_custom_call.1} parent=1 // pred_region
      _
    $region45: #{tpu_custom_call.1} parent=1 // pred_fallthru
      _
    // Predicated region
    $region46: #{tpu_custom_call.1} parent=1 // pred_check
      _
    $region47: #{tpu_custom_call.1} parent=1 // pred_check_branch
      %95 = sbr.rel (0) target = $region49
    $region48: #{tpu_custom_call.1} parent=1 // pred_region
      %s97 = ssub.s32 6144, 6144
      %98 = vsyncadd [#allocation11], %s97
      %s99 = sshll.u32 [#allocation10], 4
      %s100 = int_to_ptr.vmem [resolvable:$true] %s99
      %105 = dma.hbm_to_vmem [thread:$0]  %s11, 6144, %s100, [#allocation11], 128, 128, 8
    $region49: #{tpu_custom_call.1} parent=1 // pred_fallthru
      _
    // Predicated region
    $region50: #{tpu_custom_call.1} parent=1 // pred_check
      _
    $region51: #{tpu_custom_call.1} parent=1 // pred_check_branch
      %107 = sbr.rel (0) target = $region53
    $region52: #{tpu_custom_call.1} parent=1 // pred_region
      _
    $region53: #{tpu_custom_call.1} parent=1 // pred_fallthru
      _
    // Predicated region
    $region54: #{tpu_custom_call.1} parent=1 // pred_check
      _
    $region55: #{tpu_custom_call.1} parent=1 // pred_check_branch
      %109 = sbr.rel (0) target = $region57
    $region56: #{tpu_custom_call.1} parent=1 // pred_region
      %s111 = ssub.s32 2048, 2048
      %112 = vsyncadd [#allocation11], %s111
      %s113 = sshll.u32 [#allocation12], 4
      %s114 = int_to_ptr.vmem [resolvable:$true] %s113
      %119 = dma.hbm_to_vmem [thread:$0]  %s13, 2048, %s114, [#allocation11], 64, 64, 4
    $region57: #{tpu_custom_call.1} parent=1 // pred_fallthru
      _
    // Predicated region
    $region58: #{tpu_custom_call.1} parent=1 // pred_check
      _
    $region59: #{tpu_custom_call.1} parent=1 // pred_check_branch
      %121 = sbr.rel (0) target = $region61
    $region60: #{tpu_custom_call.1} parent=1 // pred_region
      _
    $region61: #{tpu_custom_call.1} parent=1 // pred_fallthru
      _
    // Predicated region
    $region62: #{tpu_custom_call.1} parent=1 // pred_check
      _
    $region63: #{tpu_custom_call.1} parent=1 // pred_check_branch
      %123 = sbr.rel (0) target = $region65
    $region64: #{tpu_custom_call.1} parent=1 // pred_region
      %124 = dma.done [#allocation3], 256
    $region65: #{tpu_custom_call.1} parent=1 // pred_fallthru
      _
    // Predicated region
    $region66: #{tpu_custom_call.1} parent=1 // pred_check
      _
    $region67: #{tpu_custom_call.1} parent=1 // pred_check_branch
      %126 = sbr.rel (0) target = $region69
    $region68: #{tpu_custom_call.1} parent=1 // pred_region
      %127 = dma.done [#allocation5], 6144
    $region69: #{tpu_custom_call.1} parent=1 // pred_fallthru
      _
    // Predicated region
    $region70: #{tpu_custom_call.1} parent=1 // pred_check
      _
    $region71: #{tpu_custom_call.1} parent=1 // pred_check_branch
      %129 = sbr.rel (0) target = $region73
    $region72: #{tpu_custom_call.1} parent=1 // pred_region
      %130 = dma.done [#allocation5], 12288
    $region73: #{tpu_custom_call.1} parent=1 // pred_fallthru
      _
    // Predicated region
    $region74: #{tpu_custom_call.1} parent=1 // pred_check
      _
    $region75: #{tpu_custom_call.1} parent=1 // pred_check_branch
      %132 = sbr.rel (0) target = $region77
    $region76: #{tpu_custom_call.1} parent=1 // pred_region
      %133 = dma.done [#allocation8], 16384
    $region77: #{tpu_custom_call.1} parent=1 // pred_fallthru
      _
    // Predicated region
    $region78: #{tpu_custom_call.1} parent=1 // pred_check
      _
    $region79: #{tpu_custom_call.1} parent=1 // pred_check_branch
      %135 = sbr.rel (0) target = $region81
    $region80: #{tpu_custom_call.1} parent=1 // pred_region
      %136 = dma.done [#allocation8], 12288
    $region81: #{tpu_custom_call.1} parent=1 // pred_fallthru
      _
    // Predicated region
    $region82: #{tpu_custom_call.1} parent=1 // pred_check
      _
    $region83: #{tpu_custom_call.1} parent=1 // pred_check_branch
      %138 = sbr.rel (0) target = $region85
    $region84: #{tpu_custom_call.1} parent=1 // pred_region
      %139 = dma.done [#allocation11], 6144
    $region85: #{tpu_custom_call.1} parent=1 // pred_fallthru
      _
    // Predicated region
    $region86: #{tpu_custom_call.1} parent=1 // pred_check
      _
    $region87: #{tpu_custom_call.1} parent=1 // pred_check_branch
      %141 = sbr.rel (0) target = $region89
    $region88: #{tpu_custom_call.1} parent=1 // pred_region
      %142 = dma.done [#allocation11], 2048
    $region89: #{tpu_custom_call.1} parent=1 // pred_fallthru
      _
    %v144 = vld [vmem:[%s0] sm:$0xff]
    %v145 = vld [vmem:[#allocation2] sm:$0xff]
    %v146 = vld [vmem:[#allocation2 + $0x8] sm:$0xff]
    %148 = vset.pattern.permute.xlu0 0
    %149 = vperm.xlu0 %148, %v144
    %v150 = vpop.permute.xlu0 %149
    %v152 = vlaneseq
    %v153 = vshrl.u32 %v152, 7
    %v154 = vsub.s32 0, %v153
    %v155 = vrot.slane %v145, %v154
    %v156 = vlaneseq
    %v157 = vshrl.u32 %v156, 7
    %v158 = vsub.s32 0, %v157
    %v159 = vrot.slane %v146, %v158
    %v160 = vmul.f32 %v150, %v155
    %v161 = vmul.f32 %v150, %v159
    %162 = vset.pattern.permute.xlu0 1
    %163 = vperm.xlu0 %162, %v144
    %v164 = vpop.permute.xlu0 %163
    %v166 = vlaneseq
    %v167 = vshrl.u32 %v166, 7
    %v168 = vsub.s32 1, %v167
    %v169 = vrot.slane %v145, %v168
    %v170 = vlaneseq
    %v171 = vshrl.u32 %v170, 7
    %v172 = vsub.s32 1, %v171
    %v173 = vrot.slane %v146, %v172
    %v174 = vmul.f32 %v164, %v169
    %v175 = vmul.f32 %v164, %v173
    %v176 = vadd.f32 %v160, %v174
    %v177 = vadd.f32 %v161, %v175
    %v178 = vld [vmem:[%s2] sm:$0x3]
    %v180 = vlaneseq
    %v181 = vshrl.u32 %v180, 7
    %v182 = vsub.s32 0, %v181
    %v183 = vrot.slane %v178, %v182
    %v184 = vlaneseq
    %v185 = vshrl.u32 %v184, 7
    %v186 = vsub.s32 1, %v185
    %v187 = vrot.slane %v178, %v186
    %v190 = vadd.f32 %v176, %v183
    %v191 = vadd.f32 %v177, %v187
    %v192 = vmax.f32 %v190, 0.0
    %v193 = vmax.f32 %v191, 0.0
    %v194 = vpack.c.bf16 %v192, %v192
    %v195 = vpack.c.bf16 %v193, %v193
    %v196 = vld [vmem:[#allocation4] sm:$0xff]
    %v197 = vld [vmem:[#allocation4 + $0x8] sm:$0xf]
    %v198 = vld [vmem:[#allocation4 + $0xc] sm:$0xff]
    %v199 = vld [vmem:[#allocation4 + $0x14] sm:$0xf]
    %v200 = vld [vmem:[#allocation4 + $0x18] sm:$0xff]
    %v201 = vld [vmem:[#allocation4 + $0x20] sm:$0xf]
    %v202 = vld [vmem:[#allocation4 + $0x24] sm:$0xff]
    %v203 = vld [vmem:[#allocation4 + $0x2c] sm:$0xf]
    %v204 = vld [vmem:[#allocation4 + $0x30] sm:$0xff]
    %v205 = vld [vmem:[#allocation4 + $0x38] sm:$0xf]
    %v206 = vld [vmem:[#allocation4 + $0x3c] sm:$0xff]
    %v207 = vld [vmem:[#allocation4 + $0x44] sm:$0xf]
    %v208 = vld [vmem:[#allocation4 + $0x48] sm:$0xff]
    %v209 = vld [vmem:[#allocation4 + $0x50] sm:$0xf]
    %v210 = vld [vmem:[#allocation4 + $0x54] sm:$0xff]
    %v211 = vld [vmem:[#allocation4 + $0x5c] sm:$0xf]
    %v212 = vld [vmem:[#allocation4 + $0x60] sm:$0xff]
    %v213 = vld [vmem:[#allocation4 + $0x68] sm:$0xf]
    %v214 = vld [vmem:[#allocation4 + $0x6c] sm:$0xff]
    %v215 = vld [vmem:[#allocation4 + $0x74] sm:$0xf]
    %v216 = vld [vmem:[#allocation4 + $0x78] sm:$0xff]
    %v217 = vld [vmem:[#allocation4 + $0x80] sm:$0xf]
    %v218 = vld [vmem:[#allocation4 + $0x84] sm:$0xff]
    %v219 = vld [vmem:[#allocation4 + $0x8c] sm:$0xf]
    %v220 = vld [vmem:[#allocation4 + $0x90] sm:$0xff]
    %v221 = vld [vmem:[#allocation4 + $0x98] sm:$0xf]
    %v222 = vld [vmem:[#allocation4 + $0x9c] sm:$0xff]
    %v223 = vld [vmem:[#allocation4 + $0xa4] sm:$0xf]
    %v224 = vld [vmem:[#allocation4 + $0xa8] sm:$0xff]
    %v225 = vld [vmem:[#allocation4 + $0xb0] sm:$0xf]
    %v226 = vld [vmem:[#allocation4 + $0xb4] sm:$0xff]
    %v227 = vld [vmem:[#allocation4 + $0xbc] sm:$0xf]
    %v228 = vld [vmem:[#allocation4 + $0xc0] sm:$0xff]
    %v229 = vld [vmem:[#allocation4 + $0xc8] sm:$0xf]
    %v230 = vld [vmem:[#allocation4 + $0xcc] sm:$0xff]
    %v231 = vld [vmem:[#allocation4 + $0xd4] sm:$0xf]
    %v232 = vld [vmem:[#allocation4 + $0xd8] sm:$0xff]
    %v233 = vld [vmem:[#allocation4 + $0xe0] sm:$0xf]
    %v234 = vld [vmem:[#allocation4 + $0xe4] sm:$0xff]
    %v235 = vld [vmem:[#allocation4 + $0xec] sm:$0xf]
    %v236 = vld [vmem:[#allocation4 + $0xf0] sm:$0xff]
    %v237 = vld [vmem:[#allocation4 + $0xf8] sm:$0xf]
    %v238 = vld [vmem:[#allocation4 + $0xfc] sm:$0xff]
    %v239 = vld [vmem:[#allocation4 + $0x104] sm:$0xf]
    %v240 = vld [vmem:[#allocation4 + $0x108] sm:$0xff]
    %v241 = vld [vmem:[#allocation4 + $0x110] sm:$0xf]
    %v242 = vld [vmem:[#allocation4 + $0x114] sm:$0xff]
    %v243 = vld [vmem:[#allocation4 + $0x11c] sm:$0xf]
    %v244 = vld [vmem:[#allocation4 + $0x120] sm:$0xff]
    %v245 = vld [vmem:[#allocation4 + $0x128] sm:$0xf]
    %v246 = vld [vmem:[#allocation4 + $0x12c] sm:$0xff]
    %v247 = vld [vmem:[#allocation4 + $0x134] sm:$0xf]
    %v248 = vld [vmem:[#allocation4 + $0x138] sm:$0xff]
    %v249 = vld [vmem:[#allocation4 + $0x140] sm:$0xf]
    %v250 = vld [vmem:[#allocation4 + $0x144] sm:$0xff]
    %v251 = vld [vmem:[#allocation4 + $0x14c] sm:$0xf]
    %v252 = vld [vmem:[#allocation4 + $0x150] sm:$0xff]
    %v253 = vld [vmem:[#allocation4 + $0x158] sm:$0xf]
    %v254 = vld [vmem:[#allocation4 + $0x15c] sm:$0xff]
    %v255 = vld [vmem:[#allocation4 + $0x164] sm:$0xf]
    %v256 = vld [vmem:[#allocation4 + $0x168] sm:$0xff]
    %v257 = vld [vmem:[#allocation4 + $0x170] sm:$0xf]
    %v258 = vld [vmem:[#allocation4 + $0x174] sm:$0xff]
    %v259 = vld [vmem:[#allocation4 + $0x17c] sm:$0xf]
    %v260 = vld [vmem:[%s4] sm:$0x7]
    %v262 = vlaneseq
    %v263 = vshrl.u32 %v262, 7
    %v264 = vsub.s32 0, %v263
    %v265 = vrot.slane %v260, %v264
    %v266 = vlaneseq
    %v267 = vshrl.u32 %v266, 7
    %v268 = vsub.s32 1, %v267
    %v269 = vrot.slane %v260, %v268
    %v270 = vlaneseq
    %v271 = vshrl.u32 %v270, 7
    %v272 = vsub.s32 2, %v271
    %v273 = vrot.slane %v260, %v272
    %v341 = vunpack.c.l.b16 %v196
    %v342 = vunpack.c.h.b16 %v196
    %v343 = vunpack.c.l.b16 %v197
    %v344 = vunpack.c.l.b16 %v198
    %v345 = vunpack.c.h.b16 %v198
    %v346 = vunpack.c.l.b16 %v199
    %v347 = vunpack.c.l.b16 %v200
    %v348 = vunpack.c.h.b16 %v200
    %v349 = vunpack.c.l.b16 %v201
    %v350 = vunpack.c.l.b16 %v202
    %v351 = vunpack.c.h.b16 %v202
    %v352 = vunpack.c.l.b16 %v203
    %v353 = vunpack.c.l.b16 %v204
    %v354 = vunpack.c.h.b16 %v204
    %v355 = vunpack.c.l.b16 %v205
    %v356 = vunpack.c.l.b16 %v206
    %v357 = vunpack.c.h.b16 %v206
    %v358 = vunpack.c.l.b16 %v207
    %v359 = vunpack.c.l.b16 %v208
    %v360 = vunpack.c.h.b16 %v208
    %v361 = vunpack.c.l.b16 %v209
    %v362 = vunpack.c.l.b16 %v210
    %v363 = vunpack.c.h.b16 %v210
    %v364 = vunpack.c.l.b16 %v211
    %v365 = vunpack.c.l.b16 %v212
    %v366 = vunpack.c.h.b16 %v212
    %v367 = vunpack.c.l.b16 %v213
    %v368 = vunpack.c.l.b16 %v214
    %v369 = vunpack.c.h.b16 %v214
    %v370 = vunpack.c.l.b16 %v215
    %v371 = vunpack.c.l.b16 %v216
    %v372 = vunpack.c.h.b16 %v216
    %v373 = vunpack.c.l.b16 %v217
    %v374 = vunpack.c.l.b16 %v218
    %v375 = vunpack.c.h.b16 %v218
    %v376 = vunpack.c.l.b16 %v219
    %v377 = vunpack.c.l.b16 %v220
    %v378 = vunpack.c.h.b16 %v220
    %v379 = vunpack.c.l.b16 %v221
    %v380 = vunpack.c.l.b16 %v222
    %v381 = vunpack.c.h.b16 %v222
    %v382 = vunpack.c.l.b16 %v223
    %v383 = vunpack.c.l.b16 %v224
    %v384 = vunpack.c.h.b16 %v224
    %v385 = vunpack.c.l.b16 %v225
    %v386 = vunpack.c.l.b16 %v226
    %v387 = vunpack.c.h.b16 %v226
    %v388 = vunpack.c.l.b16 %v227
    %v389 = vunpack.c.l.b16 %v228
    %v390 = vunpack.c.h.b16 %v228
    %v391 = vunpack.c.l.b16 %v229
    %v392 = vunpack.c.l.b16 %v230
    %v393 = vunpack.c.h.b16 %v230
    %v394 = vunpack.c.l.b16 %v231
    %v395 = vunpack.c.l.b16 %v232
    %v396 = vunpack.c.h.b16 %v232
    %v397 = vunpack.c.l.b16 %v233
    %v398 = vunpack.c.l.b16 %v234
    %v399 = vunpack.c.h.b16 %v234
    %v400 = vunpack.c.l.b16 %v235
    %v401 = vunpack.c.l.b16 %v236
    %v402 = vunpack.c.h.b16 %v236
    %v403 = vunpack.c.l.b16 %v237
    %v404 = vunpack.c.l.b16 %v238
    %v405 = vunpack.c.h.b16 %v238
    %v406 = vunpack.c.l.b16 %v239
    %v407 = vunpack.c.l.b16 %v240
    %v408 = vunpack.c.h.b16 %v240
    %v409 = vunpack.c.l.b16 %v241
    %v410 = vunpack.c.l.b16 %v242
    %v411 = vunpack.c.h.b16 %v242
    %v412 = vunpack.c.l.b16 %v243
    %v413 = vunpack.c.l.b16 %v244
    %v414 = vunpack.c.h.b16 %v244
    %v415 = vunpack.c.l.b16 %v245
    %v416 = vunpack.c.l.b16 %v246
    %v417 = vunpack.c.h.b16 %v246
    %v418 = vunpack.c.l.b16 %v247
    %v419 = vunpack.c.l.b16 %v248
    %v420 = vunpack.c.h.b16 %v248
    %v421 = vunpack.c.l.b16 %v249
    %v422 = vunpack.c.l.b16 %v250
    %v423 = vunpack.c.h.b16 %v250
    %v424 = vunpack.c.l.b16 %v251
    %v425 = vunpack.c.l.b16 %v252
    %v426 = vunpack.c.h.b16 %v252
    %v427 = vunpack.c.l.b16 %v253
    %v428 = vunpack.c.l.b16 %v254
    %v429 = vunpack.c.h.b16 %v254
    %v430 = vunpack.c.l.b16 %v255
    %v431 = vunpack.c.l.b16 %v256
    %v432 = vunpack.c.h.b16 %v256
    %v433 = vunpack.c.l.b16 %v257
    %v434 = vunpack.c.l.b16 %v258
    %v435 = vunpack.c.h.b16 %v258
    %v436 = vunpack.c.l.b16 %v259
    %v437 = vpack.c.b16 %v344, %v341
    %v438 = vpack.c.b16 %v345, %v342
    %v439 = vpack.c.b16 %v346, %v343
    %v440 = vpack.c.b16 %v350, %v347
    %v441 = vpack.c.b16 %v351, %v348
    %v442 = vpack.c.b16 %v352, %v349
    %v443 = vpack.c.b16 %v356, %v353
    %v444 = vpack.c.b16 %v357, %v354
    %v445 = vpack.c.b16 %v358, %v355
    %v446 = vpack.c.b16 %v362, %v359
    %v447 = vpack.c.b16 %v363, %v360
    %v448 = vpack.c.b16 %v364, %v361
    %v449 = vpack.c.b16 %v368, %v365
    %v450 = vpack.c.b16 %v369, %v366
    %v451 = vpack.c.b16 %v370, %v367
    %v452 = vpack.c.b16 %v374, %v371
    %v453 = vpack.c.b16 %v375, %v372
    %v454 = vpack.c.b16 %v376, %v373
    %v455 = vpack.c.b16 %v380, %v377
    %v456 = vpack.c.b16 %v381, %v378
    %v457 = vpack.c.b16 %v382, %v379
    %v458 = vpack.c.b16 %v386, %v383
    %v459 = vpack.c.b16 %v387, %v384
    %v460 = vpack.c.b16 %v388, %v385
    %v461 = vpack.c.b16 %v392, %v389
    %v462 = vpack.c.b16 %v393, %v390
    %v463 = vpack.c.b16 %v394, %v391
    %v464 = vpack.c.b16 %v398, %v395
    %v465 = vpack.c.b16 %v399, %v396
    %v466 = vpack.c.b16 %v400, %v397
    %v467 = vpack.c.b16 %v404, %v401
    %v468 = vpack.c.b16 %v405, %v402
    %v469 = vpack.c.b16 %v406, %v403
    %v470 = vpack.c.b16 %v410, %v407
    %v471 = vpack.c.b16 %v411, %v408
    %v472 = vpack.c.b16 %v412, %v409
    %v473 = vpack.c.b16 %v416, %v413
    %v474 = vpack.c.b16 %v417, %v414
    %v475 = vpack.c.b16 %v418, %v415
    %v476 = vpack.c.b16 %v422, %v419
    %v477 = vpack.c.b16 %v423, %v420
    %v478 = vpack.c.b16 %v424, %v421
    %v479 = vpack.c.b16 %v428, %v425
    %v480 = vpack.c.b16 %v429, %v426
    %v481 = vpack.c.b16 %v430, %v427
    %v482 = vpack.c.b16 %v434, %v431
    %v483 = vpack.c.b16 %v435, %v432
    %v484 = vpack.c.b16 %v436, %v433
    %533 = vmatprep.subr.bf16.mxu0 %v438
    %534 = vmatpush1.bf16.msra.mxu0 %v437
    %535 = vmatprep.subr.bf16.mxu0 %v441
    %536 = vmatpush1.bf16.msra.mxu0 %v440
    %537 = vmatprep.subr.bf16.mxu0 %v444
    %538 = vmatpush1.bf16.msra.mxu0 %v443
    %539 = vmatprep.subr.bf16.mxu0 %v447
    %540 = vmatpush1.bf16.msra.mxu0 %v446
    %541 = vmatprep.subr.bf16.mxu0 %v450
    %542 = vmatpush1.bf16.msra.mxu0 %v449
    %543 = vmatprep.subr.bf16.mxu0 %v453
    %544 = vmatpush1.bf16.msra.mxu0 %v452
    %545 = vmatprep.subr.bf16.mxu0 %v456
    %546 = vmatpush1.bf16.msra.mxu0 %v455
    %547 = vmatprep.subr.bf16.mxu0 %v459
    %548 = vmatpush1.bf16.msra.mxu0 %v458
    %549 = vmatprep.subr.bf16.mxu0 %v462
    %550 = vmatpush1.bf16.msra.mxu0 %v461
    %551 = vmatprep.subr.bf16.mxu0 %v465
    %552 = vmatpush1.bf16.msra.mxu0 %v464
    %553 = vmatprep.subr.bf16.mxu0 %v468
    %554 = vmatpush1.bf16.msra.mxu0 %v467
    %555 = vmatprep.subr.bf16.mxu0 %v471
    %556 = vmatpush1.bf16.msra.mxu0 %v470
    %557 = vmatprep.subr.bf16.mxu0 %v474
    %558 = vmatpush1.bf16.msra.mxu0 %v473
    %559 = vmatprep.subr.bf16.mxu0 %v477
    %560 = vmatpush1.bf16.msra.mxu0 %v476
    %561 = vmatprep.subr.bf16.mxu0 %v480
    %562 = vmatpush1.bf16.msra.mxu0 %v479
    %563 = vmatprep.subr.bf16.mxu0 %v483
    %564 = vmatpush1.bf16.msra.mxu0 %v482
    %565 = vmatprep.mubr.bf16.mxu0 %v195
    %566 = vmatmul.mubr.bf16.gmra.mrb[0].mxu0 %v194
    %v567 = vpop.f32.mrb[0].mxu0
    %v568 = vadd.f32 %v265, %v567
    %v569 = vpop.f32.mrb[0].mxu0
    %v570 = vadd.f32 %v269, %v569
    %v571 = vpop.f32.mrb[0].mxu0
    %v572 = vpop.f32.mrb[0].mxu0
    %573 = vdwg.mxu0
    %574 = vmatprep.subr.bf16.mxu0 0
    %575 = vmatpush1.bf16.msra.mxu0 %v439
    %576 = vmatprep.subr.bf16.mxu0 0
    %577 = vmatpush1.bf16.msra.mxu0 %v442
    %578 = vmatprep.subr.bf16.mxu0 0
    %579 = vmatpush1.bf16.msra.mxu0 %v445
    %580 = vmatprep.subr.bf16.mxu0 0
    %581 = vmatpush1.bf16.msra.mxu0 %v448
    %582 = vmatprep.subr.bf16.mxu0 0
    %583 = vmatpush1.bf16.msra.mxu0 %v451
    %584 = vmatprep.subr.bf16.mxu0 0
    %585 = vmatpush1.bf16.msra.mxu0 %v454
    %586 = vmatprep.subr.bf16.mxu0 0
    %587 = vmatpush1.bf16.msra.mxu0 %v457
    %588 = vmatprep.subr.bf16.mxu0 0
    %589 = vmatpush1.bf16.msra.mxu0 %v460
    %590 = vmatprep.subr.bf16.mxu0 0
    %591 = vmatpush1.bf16.msra.mxu0 %v463
    %592 = vmatprep.subr.bf16.mxu0 0
    %593 = vmatpush1.bf16.msra.mxu0 %v466
    %594 = vmatprep.subr.bf16.mxu0 0
    %595 = vmatpush1.bf16.msra.mxu0 %v469
    %596 = vmatprep.subr.bf16.mxu0 0
    %597 = vmatpush1.bf16.msra.mxu0 %v472
    %598 = vmatprep.subr.bf16.mxu0 0
    %599 = vmatpush1.bf16.msra.mxu0 %v475
    %600 = vmatprep.subr.bf16.mxu0 0
    %601 = vmatpush1.bf16.msra.mxu0 %v478
    %602 = vmatprep.subr.bf16.mxu0 0
    %603 = vmatpush1.bf16.msra.mxu0 %v481
    %604 = vmatprep.subr.bf16.mxu0 0
    %605 = vmatpush1.bf16.msra.mxu0 %v484
    %606 = vmatprep.mubr.bf16.mxu0 %v195
    %607 = vmatmul.mubr.bf16.gmra.mrb[0].mxu0 %v194
    %v608 = vpop.f32.mrb[0].mxu0
    %v609 = vadd.f32 %v273, %v608
    %v610 = vpop.f32.mrb[0].mxu0
    %v611 = vpop.f32.mrb[0].mxu0
    %v612 = vpop.f32.mrb[0].mxu0
    %613 = vdwg.mxu0
    %v614 = vmax.f32 %v568, 0.0
    %v615 = vmax.f32 %v570, 0.0
    %v616 = vmax.f32 %v609, 0.0
    %v617 = vpack.c.bf16 %v614, %v614
    %v618 = vpack.c.bf16 %v615, %v615
    %v619 = vpack.c.bf16 %v616, %v616
    %v620 = vld [vmem:[#allocation6] sm:$0xff]
    %v621 = vld [vmem:[#allocation6 + $0x8] sm:$0xff]
    %v622 = vld [vmem:[#allocation6 + $0x10] sm:$0xff]
    %v623 = vld [vmem:[#allocation6 + $0x18] sm:$0xff]
    %v624 = vld [vmem:[#allocation6 + $0x20] sm:$0xff]
    %v625 = vld [vmem:[#allocation6 + $0x28] sm:$0xff]
    %v626 = vld [vmem:[#allocation6 + $0x30] sm:$0xff]
    %v627 = vld [vmem:[#allocation6 + $0x38] sm:$0xff]
    %v628 = vld [vmem:[#allocation6 + $0x40] sm:$0xff]
    %v629 = vld [vmem:[#allocation6 + $0x48] sm:$0xff]
    %v630 = vld [vmem:[#allocation6 + $0x50] sm:$0xff]
    %v631 = vld [vmem:[#allocation6 + $0x58] sm:$0xff]
    %v632 = vld [vmem:[#allocation6 + $0x60] sm:$0xff]
    %v633 = vld [vmem:[#allocation6 + $0x68] sm:$0xff]
    %v634 = vld [vmem:[#allocation6 + $0x70] sm:$0xff]
    %v635 = vld [vmem:[#allocation6 + $0x78] sm:$0xff]
    %v636 = vld [vmem:[#allocation6 + $0x80] sm:$0xff]
    %v637 = vld [vmem:[#allocation6 + $0x88] sm:$0xff]
    %v638 = vld [vmem:[#allocation6 + $0x90] sm:$0xff]
    %v639 = vld [vmem:[#allocation6 + $0x98] sm:$0xff]
    %v640 = vld [vmem:[#allocation6 + $0xa0] sm:$0xff]
    %v641 = vld [vmem:[#allocation6 + $0xa8] sm:$0xff]
    %v642 = vld [vmem:[#allocation6 + $0xb0] sm:$0xff]
    %v643 = vld [vmem:[#allocation6 + $0xb8] sm:$0xff]
    %v644 = vld [vmem:[#allocation6 + $0xc0] sm:$0xff]
    %v645 = vld [vmem:[#allocation6 + $0xc8] sm:$0xff]
    %v646 = vld [vmem:[#allocation6 + $0xd0] sm:$0xff]
    %v647 = vld [vmem:[#allocation6 + $0xd8] sm:$0xff]
    %v648 = vld [vmem:[#allocation6 + $0xe0] sm:$0xff]
    %v649 = vld [vmem:[#allocation6 + $0xe8] sm:$0xff]
    %v650 = vld [vmem:[#allocation6 + $0xf0] sm:$0xff]
    %v651 = vld [vmem:[#allocation6 + $0xf8] sm:$0xff]
    %v652 = vld [vmem:[#allocation6 + $0x100] sm:$0xff]
    %v653 = vld [vmem:[#allocation6 + $0x108] sm:$0xff]
    %v654 = vld [vmem:[#allocation6 + $0x110] sm:$0xff]
    %v655 = vld [vmem:[#allocation6 + $0x118] sm:$0xff]
    %v656 = vld [vmem:[#allocation6 + $0x120] sm:$0xff]
    %v657 = vld [vmem:[#allocation6 + $0x128] sm:$0xff]
    %v658 = vld [vmem:[#allocation6 + $0x130] sm:$0xff]
    %v659 = vld [vmem:[#allocation6 + $0x138] sm:$0xff]
    %v660 = vld [vmem:[#allocation6 + $0x140] sm:$0xff]
    %v661 = vld [vmem:[#allocation6 + $0x148] sm:$0xff]
    %v662 = vld [vmem:[#allocation6 + $0x150] sm:$0xff]
    %v663 = vld [vmem:[#allocation6 + $0x158] sm:$0xff]
    %v664 = vld [vmem:[#allocation6 + $0x160] sm:$0xff]
    %v665 = vld [vmem:[#allocation6 + $0x168] sm:$0xff]
    %v666 = vld [vmem:[#allocation6 + $0x170] sm:$0xff]
    %v667 = vld [vmem:[#allocation6 + $0x178] sm:$0xff]
    %v668 = vld [vmem:[#allocation6 + $0x180] sm:$0xff]
    %v669 = vld [vmem:[#allocation6 + $0x188] sm:$0xff]
    %v670 = vld [vmem:[#allocation6 + $0x190] sm:$0xff]
    %v671 = vld [vmem:[#allocation6 + $0x198] sm:$0xff]
    %v672 = vld [vmem:[#allocation6 + $0x1a0] sm:$0xff]
    %v673 = vld [vmem:[#allocation6 + $0x1a8] sm:$0xff]
    %v674 = vld [vmem:[#allocation6 + $0x1b0] sm:$0xff]
    %v675 = vld [vmem:[#allocation6 + $0x1b8] sm:$0xff]
    %v676 = vld [vmem:[#allocation6 + $0x1c0] sm:$0xff]
    %v677 = vld [vmem:[#allocation6 + $0x1c8] sm:$0xff]
    %v678 = vld [vmem:[#allocation6 + $0x1d0] sm:$0xff]
    %v679 = vld [vmem:[#allocation6 + $0x1d8] sm:$0xff]
    %v680 = vld [vmem:[#allocation6 + $0x1e0] sm:$0xff]
    %v681 = vld [vmem:[#allocation6 + $0x1e8] sm:$0xff]
    %v682 = vld [vmem:[#allocation6 + $0x1f0] sm:$0xff]
    %v683 = vld [vmem:[#allocation6 + $0x1f8] sm:$0xff]
    %v684 = vld [vmem:[#allocation6 + $0x200] sm:$0xff]
    %v685 = vld [vmem:[#allocation6 + $0x208] sm:$0xff]
    %v686 = vld [vmem:[#allocation6 + $0x210] sm:$0xff]
    %v687 = vld [vmem:[#allocation6 + $0x218] sm:$0xff]
    %v688 = vld [vmem:[#allocation6 + $0x220] sm:$0xff]
    %v689 = vld [vmem:[#allocation6 + $0x228] sm:$0xff]
    %v690 = vld [vmem:[#allocation6 + $0x230] sm:$0xff]
    %v691 = vld [vmem:[#allocation6 + $0x238] sm:$0xff]
    %v692 = vld [vmem:[#allocation6 + $0x240] sm:$0xff]
    %v693 = vld [vmem:[#allocation6 + $0x248] sm:$0xff]
    %v694 = vld [vmem:[#allocation6 + $0x250] sm:$0xff]
    %v695 = vld [vmem:[#allocation6 + $0x258] sm:$0xff]
    %v696 = vld [vmem:[#allocation6 + $0x260] sm:$0xff]
    %v697 = vld [vmem:[#allocation6 + $0x268] sm:$0xff]
    %v698 = vld [vmem:[#allocation6 + $0x270] sm:$0xff]
    %v699 = vld [vmem:[#allocation6 + $0x278] sm:$0xff]
    %v700 = vld [vmem:[#allocation6 + $0x280] sm:$0xff]
    %v701 = vld [vmem:[#allocation6 + $0x288] sm:$0xff]
    %v702 = vld [vmem:[#allocation6 + $0x290] sm:$0xff]
    %v703 = vld [vmem:[#allocation6 + $0x298] sm:$0xff]
    %v704 = vld [vmem:[#allocation6 + $0x2a0] sm:$0xff]
    %v705 = vld [vmem:[#allocation6 + $0x2a8] sm:$0xff]
    %v706 = vld [vmem:[#allocation6 + $0x2b0] sm:$0xff]
    %v707 = vld [vmem:[#allocation6 + $0x2b8] sm:$0xff]
    %v708 = vld [vmem:[#allocation6 + $0x2c0] sm:$0xff]
    %v709 = vld [vmem:[#allocation6 + $0x2c8] sm:$0xff]
    %v710 = vld [vmem:[#allocation6 + $0x2d0] sm:$0xff]
    %v711 = vld [vmem:[#allocation6 + $0x2d8] sm:$0xff]
    %v712 = vld [vmem:[#allocation6 + $0x2e0] sm:$0xff]
    %v713 = vld [vmem:[#allocation6 + $0x2e8] sm:$0xff]
    %v714 = vld [vmem:[#allocation6 + $0x2f0] sm:$0xff]
    %v715 = vld [vmem:[#allocation6 + $0x2f8] sm:$0xff]
    %v716 = vld [vmem:[%s6] sm:$0xf]
    %v718 = vlaneseq
    %v719 = vshrl.u32 %v718, 7
    %v720 = vsub.s32 0, %v719
    %v721 = vrot.slane %v716, %v720
    %v722 = vlaneseq
    %v723 = vshrl.u32 %v722, 7
    %v724 = vsub.s32 1, %v723
    %v725 = vrot.slane %v716, %v724
    %v726 = vlaneseq
    %v727 = vshrl.u32 %v726, 7
    %v728 = vsub.s32 2, %v727
    %v729 = vrot.slane %v716, %v728
    %v730 = vlaneseq
    %v731 = vshrl.u32 %v730, 7
    %v732 = vsub.s32 3, %v731
    %v733 = vrot.slane %v716, %v732
    %v834 = vunpack.c.l.b16 %v620
    %v835 = vunpack.c.h.b16 %v620
    %v836 = vunpack.c.l.b16 %v621
    %v837 = vunpack.c.h.b16 %v621
    %v838 = vunpack.c.l.b16 %v622
    %v839 = vunpack.c.h.b16 %v622
    %v840 = vunpack.c.l.b16 %v623
    %v841 = vunpack.c.h.b16 %v623
    %v842 = vunpack.c.l.b16 %v624
    %v843 = vunpack.c.h.b16 %v624
    %v844 = vunpack.c.l.b16 %v625
    %v845 = vunpack.c.h.b16 %v625
    %v846 = vunpack.c.l.b16 %v626
    %v847 = vunpack.c.h.b16 %v626
    %v848 = vunpack.c.l.b16 %v627
    %v849 = vunpack.c.h.b16 %v627
    %v850 = vunpack.c.l.b16 %v628
    %v851 = vunpack.c.h.b16 %v628
    %v852 = vunpack.c.l.b16 %v629
    %v853 = vunpack.c.h.b16 %v629
    %v854 = vunpack.c.l.b16 %v630
    %v855 = vunpack.c.h.b16 %v630
    %v856 = vunpack.c.l.b16 %v631
    %v857 = vunpack.c.h.b16 %v631
    %v858 = vunpack.c.l.b16 %v632
    %v859 = vunpack.c.h.b16 %v632
    %v860 = vunpack.c.l.b16 %v633
    %v861 = vunpack.c.h.b16 %v633
    %v862 = vunpack.c.l.b16 %v634
    %v863 = vunpack.c.h.b16 %v634
    %v864 = vunpack.c.l.b16 %v635
    %v865 = vunpack.c.h.b16 %v635
    %v866 = vunpack.c.l.b16 %v636
    %v867 = vunpack.c.h.b16 %v636
    %v868 = vunpack.c.l.b16 %v637
    %v869 = vunpack.c.h.b16 %v637
    %v870 = vunpack.c.l.b16 %v638
    %v871 = vunpack.c.h.b16 %v638
    %v872 = vunpack.c.l.b16 %v639
    %v873 = vunpack.c.h.b16 %v639
    %v874 = vunpack.c.l.b16 %v640
    %v875 = vunpack.c.h.b16 %v640
    %v876 = vunpack.c.l.b16 %v641
    %v877 = vunpack.c.h.b16 %v641
    %v878 = vunpack.c.l.b16 %v642
    %v879 = vunpack.c.h.b16 %v642
    %v880 = vunpack.c.l.b16 %v643
    %v881 = vunpack.c.h.b16 %v643
    %v882 = vunpack.c.l.b16 %v644
    %v883 = vunpack.c.h.b16 %v644
    %v884 = vunpack.c.l.b16 %v645
    %v885 = vunpack.c.h.b16 %v645
    %v886 = vunpack.c.l.b16 %v646
    %v887 = vunpack.c.h.b16 %v646
    %v888 = vunpack.c.l.b16 %v647
    %v889 = vunpack.c.h.b16 %v647
    %v890 = vunpack.c.l.b16 %v648
    %v891 = vunpack.c.h.b16 %v648
    %v892 = vunpack.c.l.b16 %v649
    %v893 = vunpack.c.h.b16 %v649
    %v894 = vunpack.c.l.b16 %v650
    %v895 = vunpack.c.h.b16 %v650
    %v896 = vunpack.c.l.b16 %v651
    %v897 = vunpack.c.h.b16 %v651
    %v898 = vunpack.c.l.b16 %v652
    %v899 = vunpack.c.h.b16 %v652
    %v900 = vunpack.c.l.b16 %v653
    %v901 = vunpack.c.h.b16 %v653
    %v902 = vunpack.c.l.b16 %v654
    %v903 = vunpack.c.h.b16 %v654
    %v904 = vunpack.c.l.b16 %v655
    %v905 = vunpack.c.h.b16 %v655
    %v906 = vunpack.c.l.b16 %v656
    %v907 = vunpack.c.h.b16 %v656
    %v908 = vunpack.c.l.b16 %v657
    %v909 = vunpack.c.h.b16 %v657
    %v910 = vunpack.c.l.b16 %v658
    %v911 = vunpack.c.h.b16 %v658
    %v912 = vunpack.c.l.b16 %v659
    %v913 = vunpack.c.h.b16 %v659
    %v914 = vunpack.c.l.b16 %v660
    %v915 = vunpack.c.h.b16 %v660
    %v916 = vunpack.c.l.b16 %v661
    %v917 = vunpack.c.h.b16 %v661
    %v918 = vunpack.c.l.b16 %v662
    %v919 = vunpack.c.h.b16 %v662
    %v920 = vunpack.c.l.b16 %v663
    %v921 = vunpack.c.h.b16 %v663
    %v922 = vunpack.c.l.b16 %v664
    %v923 = vunpack.c.h.b16 %v664
    %v924 = vunpack.c.l.b16 %v665
    %v925 = vunpack.c.h.b16 %v665
    %v926 = vunpack.c.l.b16 %v666
    %v927 = vunpack.c.h.b16 %v666
    %v928 = vunpack.c.l.b16 %v667
    %v929 = vunpack.c.h.b16 %v667
    %v930 = vunpack.c.l.b16 %v668
    %v931 = vunpack.c.h.b16 %v668
    %v932 = vunpack.c.l.b16 %v669
    %v933 = vunpack.c.h.b16 %v669
    %v934 = vunpack.c.l.b16 %v670
    %v935 = vunpack.c.h.b16 %v670
    %v936 = vunpack.c.l.b16 %v671
    %v937 = vunpack.c.h.b16 %v671
    %v938 = vunpack.c.l.b16 %v672
    %v939 = vunpack.c.h.b16 %v672
    %v940 = vunpack.c.l.b16 %v673
    %v941 = vunpack.c.h.b16 %v673
    %v942 = vunpack.c.l.b16 %v674
    %v943 = vunpack.c.h.b16 %v674
    %v944 = vunpack.c.l.b16 %v675
    %v945 = vunpack.c.h.b16 %v675
    %v946 = vunpack.c.l.b16 %v676
    %v947 = vunpack.c.h.b16 %v676
    %v948 = vunpack.c.l.b16 %v677
    %v949 = vunpack.c.h.b16 %v677
    %v950 = vunpack.c.l.b16 %v678
    %v951 = vunpack.c.h.b16 %v678
    %v952 = vunpack.c.l.b16 %v679
    %v953 = vunpack.c.h.b16 %v679
    %v954 = vunpack.c.l.b16 %v680
    %v955 = vunpack.c.h.b16 %v680
    %v956 = vunpack.c.l.b16 %v681
    %v957 = vunpack.c.h.b16 %v681
    %v958 = vunpack.c.l.b16 %v682
    %v959 = vunpack.c.h.b16 %v682
    %v960 = vunpack.c.l.b16 %v683
    %v961 = vunpack.c.h.b16 %v683
    %v962 = vunpack.c.l.b16 %v684
    %v963 = vunpack.c.h.b16 %v684
    %v964 = vunpack.c.l.b16 %v685
    %v965 = vunpack.c.h.b16 %v685
    %v966 = vunpack.c.l.b16 %v686
    %v967 = vunpack.c.h.b16 %v686
    %v968 = vunpack.c.l.b16 %v687
    %v969 = vunpack.c.h.b16 %v687
    %v970 = vunpack.c.l.b16 %v688
    %v971 = vunpack.c.h.b16 %v688
    %v972 = vunpack.c.l.b16 %v689
    %v973 = vunpack.c.h.b16 %v689
    %v974 = vunpack.c.l.b16 %v690
    %v975 = vunpack.c.h.b16 %v690
    %v976 = vunpack.c.l.b16 %v691
    %v977 = vunpack.c.h.b16 %v691
    %v978 = vunpack.c.l.b16 %v692
    %v979 = vunpack.c.h.b16 %v692
    %v980 = vunpack.c.l.b16 %v693
    %v981 = vunpack.c.h.b16 %v693
    %v982 = vunpack.c.l.b16 %v694
    %v983 = vunpack.c.h.b16 %v694
    %v984 = vunpack.c.l.b16 %v695
    %v985 = vunpack.c.h.b16 %v695
    %v986 = vunpack.c.l.b16 %v696
    %v987 = vunpack.c.h.b16 %v696
    %v988 = vunpack.c.l.b16 %v697
    %v989 = vunpack.c.h.b16 %v697
    %v990 = vunpack.c.l.b16 %v698
    %v991 = vunpack.c.h.b16 %v698
    %v992 = vunpack.c.l.b16 %v699
    %v993 = vunpack.c.h.b16 %v699
    %v994 = vunpack.c.l.b16 %v700
    %v995 = vunpack.c.h.b16 %v700
    %v996 = vunpack.c.l.b16 %v701
    %v997 = vunpack.c.h.b16 %v701
    %v998 = vunpack.c.l.b16 %v702
    %v999 = vunpack.c.h.b16 %v702
    %v1000 = vunpack.c.l.b16 %v703
    %v1001 = vunpack.c.h.b16 %v703
    %v1002 = vunpack.c.l.b16 %v704
    %v1003 = vunpack.c.h.b16 %v704
    %v1004 = vunpack.c.l.b16 %v705
    %v1005 = vunpack.c.h.b16 %v705
    %v1006 = vunpack.c.l.b16 %v706
    %v1007 = vunpack.c.h.b16 %v706
    %v1008 = vunpack.c.l.b16 %v707
    %v1009 = vunpack.c.h.b16 %v707
    %v1010 = vunpack.c.l.b16 %v708
    %v1011 = vunpack.c.h.b16 %v708
    %v1012 = vunpack.c.l.b16 %v709
    %v1013 = vunpack.c.h.b16 %v709
    %v1014 = vunpack.c.l.b16 %v710
    %v1015 = vunpack.c.h.b16 %v710
    %v1016 = vunpack.c.l.b16 %v711
    %v1017 = vunpack.c.h.b16 %v711
    %v1018 = vunpack.c.l.b16 %v712
    %v1019 = vunpack.c.h.b16 %v712
    %v1020 = vunpack.c.l.b16 %v713
    %v1021 = vunpack.c.h.b16 %v713
    %v1022 = vunpack.c.l.b16 %v714
    %v1023 = vunpack.c.h.b16 %v714
    %v1024 = vunpack.c.l.b16 %v715
    %v1025 = vunpack.c.h.b16 %v715
    %v1026 = vpack.c.b16 %v838, %v834
    %v1027 = vpack.c.b16 %v839, %v835
    %v1028 = vpack.c.b16 %v840, %v836
    %v1029 = vpack.c.b16 %v841, %v837
    %v1030 = vpack.c.b16 %v846, %v842
    %v1031 = vpack.c.b16 %v847, %v843
    %v1032 = vpack.c.b16 %v848, %v844
    %v1033 = vpack.c.b16 %v849, %v845
    %v1034 = vpack.c.b16 %v854, %v850
    %v1035 = vpack.c.b16 %v855, %v851
    %v1036 = vpack.c.b16 %v856, %v852
    %v1037 = vpack.c.b16 %v857, %v853
    %v1038 = vpack.c.b16 %v862, %v858
    %v1039 = vpack.c.b16 %v863, %v859
    %v1040 = vpack.c.b16 %v864, %v860
    %v1041 = vpack.c.b16 %v865, %v861
    %v1042 = vpack.c.b16 %v870, %v866
    %v1043 = vpack.c.b16 %v871, %v867
    %v1044 = vpack.c.b16 %v872, %v868
    %v1045 = vpack.c.b16 %v873, %v869
    %v1046 = vpack.c.b16 %v878, %v874
    %v1047 = vpack.c.b16 %v879, %v875
    %v1048 = vpack.c.b16 %v880, %v876
    %v1049 = vpack.c.b16 %v881, %v877
    %v1050 = vpack.c.b16 %v886, %v882
    %v1051 = vpack.c.b16 %v887, %v883
    %v1052 = vpack.c.b16 %v888, %v884
    %v1053 = vpack.c.b16 %v889, %v885
    %v1054 = vpack.c.b16 %v894, %v890
    %v1055 = vpack.c.b16 %v895, %v891
    %v1056 = vpack.c.b16 %v896, %v892
    %v1057 = vpack.c.b16 %v897, %v893
    %v1058 = vpack.c.b16 %v902, %v898
    %v1059 = vpack.c.b16 %v903, %v899
    %v1060 = vpack.c.b16 %v904, %v900
    %v1061 = vpack.c.b16 %v905, %v901
    %v1062 = vpack.c.b16 %v910, %v906
    %v1063 = vpack.c.b16 %v911, %v907
    %v1064 = vpack.c.b16 %v912, %v908
    %v1065 = vpack.c.b16 %v913, %v909
    %v1066 = vpack.c.b16 %v918, %v914
    %v1067 = vpack.c.b16 %v919, %v915
    %v1068 = vpack.c.b16 %v920, %v916
    %v1069 = vpack.c.b16 %v921, %v917
    %v1070 = vpack.c.b16 %v926, %v922
    %v1071 = vpack.c.b16 %v927, %v923
    %v1072 = vpack.c.b16 %v928, %v924
    %v1073 = vpack.c.b16 %v929, %v925
    %v1074 = vpack.c.b16 %v934, %v930
    %v1075 = vpack.c.b16 %v935, %v931
    %v1076 = vpack.c.b16 %v936, %v932
    %v1077 = vpack.c.b16 %v937, %v933
    %v1078 = vpack.c.b16 %v942, %v938
    %v1079 = vpack.c.b16 %v943, %v939
    %v1080 = vpack.c.b16 %v944, %v940
    %v1081 = vpack.c.b16 %v945, %v941
    %v1082 = vpack.c.b16 %v950, %v946
    %v1083 = vpack.c.b16 %v951, %v947
    %v1084 = vpack.c.b16 %v952, %v948
    %v1085 = vpack.c.b16 %v953, %v949
    %v1086 = vpack.c.b16 %v958, %v954
    %v1087 = vpack.c.b16 %v959, %v955
    %v1088 = vpack.c.b16 %v960, %v956
    %v1089 = vpack.c.b16 %v961, %v957
    %v1090 = vpack.c.b16 %v966, %v962
    %v1091 = vpack.c.b16 %v967, %v963
    %v1092 = vpack.c.b16 %v968, %v964
    %v1093 = vpack.c.b16 %v969, %v965
    %v1094 = vpack.c.b16 %v974, %v970
    %v1095 = vpack.c.b16 %v975, %v971
    %v1096 = vpack.c.b16 %v976, %v972
    %v1097 = vpack.c.b16 %v977, %v973
    %v1098 = vpack.c.b16 %v982, %v978
    %v1099 = vpack.c.b16 %v983, %v979
    %v1100 = vpack.c.b16 %v984, %v980
    %v1101 = vpack.c.b16 %v985, %v981
    %v1102 = vpack.c.b16 %v990, %v986
    %v1103 = vpack.c.b16 %v991, %v987
    %v1104 = vpack.c.b16 %v992, %v988
    %v1105 = vpack.c.b16 %v993, %v989
    %v1106 = vpack.c.b16 %v998, %v994
    %v1107 = vpack.c.b16 %v999, %v995
    %v1108 = vpack.c.b16 %v1000, %v996
    %v1109 = vpack.c.b16 %v1001, %v997
    %v1110 = vpack.c.b16 %v1006, %v1002
    %v1111 = vpack.c.b16 %v1007, %v1003
    %v1112 = vpack.c.b16 %v1008, %v1004
    %v1113 = vpack.c.b16 %v1009, %v1005
    %v1114 = vpack.c.b16 %v1014, %v1010
    %v1115 = vpack.c.b16 %v1015, %v1011
    %v1116 = vpack.c.b16 %v1016, %v1012
    %v1117 = vpack.c.b16 %v1017, %v1013
    %v1118 = vpack.c.b16 %v1022, %v1018
    %v1119 = vpack.c.b16 %v1023, %v1019
    %v1120 = vpack.c.b16 %v1024, %v1020
    %v1121 = vpack.c.b16 %v1025, %v1021
    %1218 = vmatprep.subr.bf16.mxu0 %v1027
    %1219 = vmatpush1.bf16.msra.mxu0 %v1026
    %1220 = vmatprep.subr.bf16.mxu0 %v1031
    %1221 = vmatpush1.bf16.msra.mxu0 %v1030
    %1222 = vmatprep.subr.bf16.mxu0 %v1035
    %1223 = vmatpush1.bf16.msra.mxu0 %v1034
    %1224 = vmatprep.subr.bf16.mxu0 %v1039
    %1225 = vmatpush1.bf16.msra.mxu0 %v1038
    %1226 = vmatprep.subr.bf16.mxu0 %v1043
    %1227 = vmatpush1.bf16.msra.mxu0 %v1042
    %1228 = vmatprep.subr.bf16.mxu0 %v1047
    %1229 = vmatpush1.bf16.msra.mxu0 %v1046
    %1230 = vmatprep.subr.bf16.mxu0 %v1051
    %1231 = vmatpush1.bf16.msra.mxu0 %v1050
    %1232 = vmatprep.subr.bf16.mxu0 %v1055
    %1233 = vmatpush1.bf16.msra.mxu0 %v1054
    %1234 = vmatprep.subr.bf16.mxu0 %v1059
    %1235 = vmatpush1.bf16.msra.mxu0 %v1058
    %1236 = vmatprep.subr.bf16.mxu0 %v1063
    %1237 = vmatpush1.bf16.msra.mxu0 %v1062
    %1238 = vmatprep.subr.bf16.mxu0 %v1067
    %1239 = vmatpush1.bf16.msra.mxu0 %v1066
    %1240 = vmatprep.subr.bf16.mxu0 %v1071
    %1241 = vmatpush1.bf16.msra.mxu0 %v1070
    %1242 = vmatprep.subr.bf16.mxu0 %v1075
    %1243 = vmatpush1.bf16.msra.mxu0 %v1074
    %1244 = vmatprep.subr.bf16.mxu0 %v1079
    %1245 = vmatpush1.bf16.msra.mxu0 %v1078
    %1246 = vmatprep.subr.bf16.mxu0 %v1083
    %1247 = vmatpush1.bf16.msra.mxu0 %v1082
    %1248 = vmatprep.subr.bf16.mxu0 %v1087
    %1249 = vmatpush1.bf16.msra.mxu0 %v1086
    %1250 = vmatprep.mubr.bf16.mxu0 %v618
    %1251 = vmatmul.mubr.bf16.gmra.mrb[0].mxu0 %v617
    %v1252 = vpop.f32.mrb[0].mxu0
    %v1253 = vadd.f32 %v721, %v1252
    %v1254 = vpop.f32.mrb[0].mxu0
    %v1255 = vadd.f32 %v725, %v1254
    %v1256 = vpop.f32.mrb[0].mxu0
    %v1257 = vpop.f32.mrb[0].mxu0
    %1258 = vdwg.mxu0
    %1259 = vmatprep.subr.bf16.mxu0 %v1091
    %1260 = vmatpush1.bf16.msra.mxu0 %v1090
    %1261 = vmatprep.subr.bf16.mxu0 %v1095
    %1262 = vmatpush1.bf16.msra.mxu0 %v1094
    %1263 = vmatprep.subr.bf16.mxu0 %v1099
    %1264 = vmatpush1.bf16.msra.mxu0 %v1098
    %1265 = vmatprep.subr.bf16.mxu0 %v1103
    %1266 = vmatpush1.bf16.msra.mxu0 %v1102
    %1267 = vmatprep.subr.bf16.mxu0 %v1107
    %1268 = vmatpush1.bf16.msra.mxu0 %v1106
    %1269 = vmatprep.subr.bf16.mxu0 %v1111
    %1270 = vmatpush1.bf16.msra.mxu0 %v1110
    %1271 = vmatprep.subr.bf16.mxu0 %v1115
    %1272 = vmatpush1.bf16.msra.mxu0 %v1114
    %1273 = vmatprep.subr.bf16.mxu0 %v1119
    %1274 = vmatpush1.bf16.msra.mxu0 %v1118
    %1275 = vmatprep.subr.bf16.mxu0 0
    %1276 = vmatpush1.bf16.msra.mxu0 0
    %1277 = vmatprep.subr.bf16.mxu0 0
    %1278 = vmatpush1.bf16.msra.mxu0 0
    %1279 = vmatprep.subr.bf16.mxu0 0
    %1280 = vmatpush1.bf16.msra.mxu0 0
    %1281 = vmatprep.subr.bf16.mxu0 0
    %1282 = vmatpush1.bf16.msra.mxu0 0
    %1283 = vmatprep.subr.bf16.mxu0 0
    %1284 = vmatpush1.bf16.msra.mxu0 0
    %1285 = vmatprep.subr.bf16.mxu0 0
    %1286 = vmatpush1.bf16.msra.mxu0 0
    %1287 = vmatprep.subr.bf16.mxu0 0
    %1288 = vmatpush1.bf16.msra.mxu0 0
    %1289 = vmatprep.subr.bf16.mxu0 0
    %1290 = vmatpush1.bf16.msra.mxu0 0
    %1291 = vmatprep.mubr.bf16.mxu0 0
    %1292 = vmatmul.mubr.bf16.gmra.mrb[0].mxu0 %v619
    %v1293 = vpop.f32.mrb[0].mxu0
    %v1294 = vadd.f32 %v1253, %v1293
    %v1295 = vpop.f32.mrb[0].mxu0
    %v1296 = vadd.f32 %v1255, %v1295
    %v1297 = vpop.f32.mrb[0].mxu0
    %v1298 = vpop.f32.mrb[0].mxu0
    %1299 = vdwg.mxu0
    %1300 = vmatprep.subr.bf16.mxu0 %v1029
    %1301 = vmatpush1.bf16.msra.mxu0 %v1028
    %1302 = vmatprep.subr.bf16.mxu0 %v1033
    %1303 = vmatpush1.bf16.msra.mxu0 %v1032
    %1304 = vmatprep.subr.bf16.mxu0 %v1037
    %1305 = vmatpush1.bf16.msra.mxu0 %v1036
    %1306 = vmatprep.subr.bf16.mxu0 %v1041
    %1307 = vmatpush1.bf16.msra.mxu0 %v1040
    %1308 = vmatprep.subr.bf16.mxu0 %v1045
    %1309 = vmatpush1.bf16.msra.mxu0 %v1044
    %1310 = vmatprep.subr.bf16.mxu0 %v1049
    %1311 = vmatpush1.bf16.msra.mxu0 %v1048
    %1312 = vmatprep.subr.bf16.mxu0 %v1053
    %1313 = vmatpush1.bf16.msra.mxu0 %v1052
    %1314 = vmatprep.subr.bf16.mxu0 %v1057
    %1315 = vmatpush1.bf16.msra.mxu0 %v1056
    %1316 = vmatprep.subr.bf16.mxu0 %v1061
    %1317 = vmatpush1.bf16.msra.mxu0 %v1060
    %1318 = vmatprep.subr.bf16.mxu0 %v1065
    %1319 = vmatpush1.bf16.msra.mxu0 %v1064
    %1320 = vmatprep.subr.bf16.mxu0 %v1069
    %1321 = vmatpush1.bf16.msra.mxu0 %v1068
    %1322 = vmatprep.subr.bf16.mxu0 %v1073
    %1323 = vmatpush1.bf16.msra.mxu0 %v1072
    %1324 = vmatprep.subr.bf16.mxu0 %v1077
    %1325 = vmatpush1.bf16.msra.mxu0 %v1076
    %1326 = vmatprep.subr.bf16.mxu0 %v1081
    %1327 = vmatpush1.bf16.msra.mxu0 %v1080
    %1328 = vmatprep.subr.bf16.mxu0 %v1085
    %1329 = vmatpush1.bf16.msra.mxu0 %v1084
    %1330 = vmatprep.subr.bf16.mxu0 %v1089
    %1331 = vmatpush1.bf16.msra.mxu0 %v1088
    %1332 = vmatprep.mubr.bf16.mxu0 %v618
    %1333 = vmatmul.mubr.bf16.gmra.mrb[0].mxu0 %v617
    %v1334 = vpop.f32.mrb[0].mxu0
    %v1335 = vadd.f32 %v729, %v1334
    %v1336 = vpop.f32.mrb[0].mxu0
    %v1337 = vadd.f32 %v733, %v1336
    %v1338 = vpop.f32.mrb[0].mxu0
    %v1339 = vpop.f32.mrb[0].mxu0
    %1340 = vdwg.mxu0
    %1341 = vmatprep.subr.bf16.mxu0 %v1093
    %1342 = vmatpush1.bf16.msra.mxu0 %v1092
    %1343 = vmatprep.subr.bf16.mxu0 %v1097
    %1344 = vmatpush1.bf16.msra.mxu0 %v1096
    %1345 = vmatprep.subr.bf16.mxu0 %v1101
    %1346 = vmatpush1.bf16.msra.mxu0 %v1100
    %1347 = vmatprep.subr.bf16.mxu0 %v1105
    %1348 = vmatpush1.bf16.msra.mxu0 %v1104
    %1349 = vmatprep.subr.bf16.mxu0 %v1109
    %1350 = vmatpush1.bf16.msra.mxu0 %v1108
    %1351 = vmatprep.subr.bf16.mxu0 %v1113
    %1352 = vmatpush1.bf16.msra.mxu0 %v1112
    %1353 = vmatprep.subr.bf16.mxu0 %v1117
    %1354 = vmatpush1.bf16.msra.mxu0 %v1116
    %1355 = vmatprep.subr.bf16.mxu0 %v1121
    %1356 = vmatpush1.bf16.msra.mxu0 %v1120
    %1357 = vmatprep.subr.bf16.mxu0 0
    %1358 = vmatpush1.bf16.msra.mxu0 0
    %1359 = vmatprep.subr.bf16.mxu0 0
    %1360 = vmatpush1.bf16.msra.mxu0 0
    %1361 = vmatprep.subr.bf16.mxu0 0
    %1362 = vmatpush1.bf16.msra.mxu0 0
    %1363 = vmatprep.subr.bf16.mxu0 0
    %1364 = vmatpush1.bf16.msra.mxu0 0
    %1365 = vmatprep.subr.bf16.mxu0 0
    %1366 = vmatpush1.bf16.msra.mxu0 0
    %1367 = vmatprep.subr.bf16.mxu0 0
    %1368 = vmatpush1.bf16.msra.mxu0 0
    %1369 = vmatprep.subr.bf16.mxu0 0
    %1370 = vmatpush1.bf16.msra.mxu0 0
    %1371 = vmatprep.subr.bf16.mxu0 0
    %1372 = vmatpush1.bf16.msra.mxu0 0
    %1373 = vmatprep.mubr.bf16.mxu0 0
    %1374 = vmatmul.mubr.bf16.gmra.mrb[0].mxu0 %v619
    %v1375 = vpop.f32.mrb[0].mxu0
    %v1376 = vadd.f32 %v1335, %v1375
    %v1377 = vpop.f32.mrb[0].mxu0
    %v1378 = vadd.f32 %v1337, %v1377
    %v1379 = vpop.f32.mrb[0].mxu0
    %v1380 = vpop.f32.mrb[0].mxu0
    %1381 = vdwg.mxu0
    %v1382 = vmax.f32 %v1294, 0.0
    %v1383 = vmax.f32 %v1296, 0.0
    %v1384 = vmax.f32 %v1376, 0.0
    %v1385 = vmax.f32 %v1378, 0.0
    %v1386 = vpack.c.bf16 %v1382, %v1382
    %v1387 = vpack.c.bf16 %v1383, %v1383
    %v1388 = vpack.c.bf16 %v1384, %v1384
    %v1389 = vpack.c.bf16 %v1385, %v1385
    %v1390 = vld [vmem:[#allocation7] sm:$0xff]
    %v1391 = vld [vmem:[#allocation7 + $0x8] sm:$0xff]
    %v1392 = vld [vmem:[#allocation7 + $0x10] sm:$0xff]
    %v1393 = vld [vmem:[#allocation7 + $0x18] sm:$0xff]
    %v1394 = vld [vmem:[#allocation7 + $0x20] sm:$0xff]
    %v1395 = vld [vmem:[#allocation7 + $0x28] sm:$0xff]
    %v1396 = vld [vmem:[#allocation7 + $0x30] sm:$0xff]
    %v1397 = vld [vmem:[#allocation7 + $0x38] sm:$0xff]
    %v1398 = vld [vmem:[#allocation7 + $0x40] sm:$0xff]
    %v1399 = vld [vmem:[#allocation7 + $0x48] sm:$0xff]
    %v1400 = vld [vmem:[#allocation7 + $0x50] sm:$0xff]
    %v1401 = vld [vmem:[#allocation7 + $0x58] sm:$0xff]
    %v1402 = vld [vmem:[#allocation7 + $0x60] sm:$0xff]
    %v1403 = vld [vmem:[#allocation7 + $0x68] sm:$0xff]
    %v1404 = vld [vmem:[#allocation7 + $0x70] sm:$0xff]
    %v1405 = vld [vmem:[#allocation7 + $0x78] sm:$0xff]
    %v1406 = vld [vmem:[#allocation7 + $0x80] sm:$0xff]
    %v1407 = vld [vmem:[#allocation7 + $0x88] sm:$0xff]
    %v1408 = vld [vmem:[#allocation7 + $0x90] sm:$0xff]
    %v1409 = vld [vmem:[#allocation7 + $0x98] sm:$0xff]
    %v1410 = vld [vmem:[#allocation7 + $0xa0] sm:$0xff]
    %v1411 = vld [vmem:[#allocation7 + $0xa8] sm:$0xff]
    %v1412 = vld [vmem:[#allocation7 + $0xb0] sm:$0xff]
    %v1413 = vld [vmem:[#allocation7 + $0xb8] sm:$0xff]
    %v1414 = vld [vmem:[#allocation7 + $0xc0] sm:$0xff]
    %v1415 = vld [vmem:[#allocation7 + $0xc8] sm:$0xff]
    %v1416 = vld [vmem:[#allocation7 + $0xd0] sm:$0xff]
    %v1417 = vld [vmem:[#allocation7 + $0xd8] sm:$0xff]
    %v1418 = vld [vmem:[#allocation7 + $0xe0] sm:$0xff]
    %v1419 = vld [vmem:[#allocation7 + $0xe8] sm:$0xff]
    %v1420 = vld [vmem:[#allocation7 + $0xf0] sm:$0xff]
    %v1421 = vld [vmem:[#allocation7 + $0xf8] sm:$0xff]
    %v1422 = vld [vmem:[#allocation7 + $0x100] sm:$0xff]
    %v1423 = vld [vmem:[#allocation7 + $0x108] sm:$0xff]
    %v1424 = vld [vmem:[#allocation7 + $0x110] sm:$0xff]
    %v1425 = vld [vmem:[#allocation7 + $0x118] sm:$0xff]
    %v1426 = vld [vmem:[#allocation7 + $0x120] sm:$0xff]
    %v1427 = vld [vmem:[#allocation7 + $0x128] sm:$0xff]
    %v1428 = vld [vmem:[#allocation7 + $0x130] sm:$0xff]
    %v1429 = vld [vmem:[#allocation7 + $0x138] sm:$0xff]
    %v1430 = vld [vmem:[#allocation7 + $0x140] sm:$0xff]
    %v1431 = vld [vmem:[#allocation7 + $0x148] sm:$0xff]
    %v1432 = vld [vmem:[#allocation7 + $0x150] sm:$0xff]
    %v1433 = vld [vmem:[#allocation7 + $0x158] sm:$0xff]
    %v1434 = vld [vmem:[#allocation7 + $0x160] sm:$0xff]
    %v1435 = vld [vmem:[#allocation7 + $0x168] sm:$0xff]
    %v1436 = vld [vmem:[#allocation7 + $0x170] sm:$0xff]
    %v1437 = vld [vmem:[#allocation7 + $0x178] sm:$0xff]
    %v1438 = vld [vmem:[#allocation7 + $0x180] sm:$0xff]
    %v1439 = vld [vmem:[#allocation7 + $0x188] sm:$0xff]
    %v1440 = vld [vmem:[#allocation7 + $0x190] sm:$0xff]
    %v1441 = vld [vmem:[#allocation7 + $0x198] sm:$0xff]
    %v1442 = vld [vmem:[#allocation7 + $0x1a0] sm:$0xff]
    %v1443 = vld [vmem:[#allocation7 + $0x1a8] sm:$0xff]
    %v1444 = vld [vmem:[#allocation7 + $0x1b0] sm:$0xff]
    %v1445 = vld [vmem:[#allocation7 + $0x1b8] sm:$0xff]
    %v1446 = vld [vmem:[#allocation7 + $0x1c0] sm:$0xff]
    %v1447 = vld [vmem:[#allocation7 + $0x1c8] sm:$0xff]
    %v1448 = vld [vmem:[#allocation7 + $0x1d0] sm:$0xff]
    %v1449 = vld [vmem:[#allocation7 + $0x1d8] sm:$0xff]
    %v1450 = vld [vmem:[#allocation7 + $0x1e0] sm:$0xff]
    %v1451 = vld [vmem:[#allocation7 + $0x1e8] sm:$0xff]
    %v1452 = vld [vmem:[#allocation7 + $0x1f0] sm:$0xff]
    %v1453 = vld [vmem:[#allocation7 + $0x1f8] sm:$0xff]
    %v1454 = vld [vmem:[#allocation7 + $0x200] sm:$0xff]
    %v1455 = vld [vmem:[#allocation7 + $0x208] sm:$0xff]
    %v1456 = vld [vmem:[#allocation7 + $0x210] sm:$0xff]
    %v1457 = vld [vmem:[#allocation7 + $0x218] sm:$0xff]
    %v1458 = vld [vmem:[#allocation7 + $0x220] sm:$0xff]
    %v1459 = vld [vmem:[#allocation7 + $0x228] sm:$0xff]
    %v1460 = vld [vmem:[#allocation7 + $0x230] sm:$0xff]
    %v1461 = vld [vmem:[#allocation7 + $0x238] sm:$0xff]
    %v1462 = vld [vmem:[#allocation7 + $0x240] sm:$0xff]
    %v1463 = vld [vmem:[#allocation7 + $0x248] sm:$0xff]
    %v1464 = vld [vmem:[#allocation7 + $0x250] sm:$0xff]
    %v1465 = vld [vmem:[#allocation7 + $0x258] sm:$0xff]
    %v1466 = vld [vmem:[#allocation7 + $0x260] sm:$0xff]
    %v1467 = vld [vmem:[#allocation7 + $0x268] sm:$0xff]
    %v1468 = vld [vmem:[#allocation7 + $0x270] sm:$0xff]
    %v1469 = vld [vmem:[#allocation7 + $0x278] sm:$0xff]
    %v1470 = vld [vmem:[#allocation7 + $0x280] sm:$0xff]
    %v1471 = vld [vmem:[#allocation7 + $0x288] sm:$0xff]
    %v1472 = vld [vmem:[#allocation7 + $0x290] sm:$0xff]
    %v1473 = vld [vmem:[#allocation7 + $0x298] sm:$0xff]
    %v1474 = vld [vmem:[#allocation7 + $0x2a0] sm:$0xff]
    %v1475 = vld [vmem:[#allocation7 + $0x2a8] sm:$0xff]
    %v1476 = vld [vmem:[#allocation7 + $0x2b0] sm:$0xff]
    %v1477 = vld [vmem:[#allocation7 + $0x2b8] sm:$0xff]
    %v1478 = vld [vmem:[#allocation7 + $0x2c0] sm:$0xff]
    %v1479 = vld [vmem:[#allocation7 + $0x2c8] sm:$0xff]
    %v1480 = vld [vmem:[#allocation7 + $0x2d0] sm:$0xff]
    %v1481 = vld [vmem:[#allocation7 + $0x2d8] sm:$0xff]
    %v1482 = vld [vmem:[#allocation7 + $0x2e0] sm:$0xff]
    %v1483 = vld [vmem:[#allocation7 + $0x2e8] sm:$0xff]
    %v1484 = vld [vmem:[#allocation7 + $0x2f0] sm:$0xff]
    %v1485 = vld [vmem:[#allocation7 + $0x2f8] sm:$0xff]
    %v1486 = vld [vmem:[#allocation7 + $0x300] sm:$0xff]
    %v1487 = vld [vmem:[#allocation7 + $0x308] sm:$0xff]
    %v1488 = vld [vmem:[#allocation7 + $0x310] sm:$0xff]
    %v1489 = vld [vmem:[#allocation7 + $0x318] sm:$0xff]
    %v1490 = vld [vmem:[#allocation7 + $0x320] sm:$0xff]
    %v1491 = vld [vmem:[#allocation7 + $0x328] sm:$0xff]
    %v1492 = vld [vmem:[#allocation7 + $0x330] sm:$0xff]
    %v1493 = vld [vmem:[#allocation7 + $0x338] sm:$0xff]
    %v1494 = vld [vmem:[#allocation7 + $0x340] sm:$0xff]
    %v1495 = vld [vmem:[#allocation7 + $0x348] sm:$0xff]
    %v1496 = vld [vmem:[#allocation7 + $0x350] sm:$0xff]
    %v1497 = vld [vmem:[#allocation7 + $0x358] sm:$0xff]
    %v1498 = vld [vmem:[#allocation7 + $0x360] sm:$0xff]
    %v1499 = vld [vmem:[#allocation7 + $0x368] sm:$0xff]
    %v1500 = vld [vmem:[#allocation7 + $0x370] sm:$0xff]
    %v1501 = vld [vmem:[#allocation7 + $0x378] sm:$0xff]
    %v1502 = vld [vmem:[#allocation7 + $0x380] sm:$0xff]
    %v1503 = vld [vmem:[#allocation7 + $0x388] sm:$0xff]
    %v1504 = vld [vmem:[#allocation7 + $0x390] sm:$0xff]
    %v1505 = vld [vmem:[#allocation7 + $0x398] sm:$0xff]
    %v1506 = vld [vmem:[#allocation7 + $0x3a0] sm:$0xff]
    %v1507 = vld [vmem:[#allocation7 + $0x3a8] sm:$0xff]
    %v1508 = vld [vmem:[#allocation7 + $0x3b0] sm:$0xff]
    %v1509 = vld [vmem:[#allocation7 + $0x3b8] sm:$0xff]
    %v1510 = vld [vmem:[#allocation7 + $0x3c0] sm:$0xff]
    %v1511 = vld [vmem:[#allocation7 + $0x3c8] sm:$0xff]
    %v1512 = vld [vmem:[#allocation7 + $0x3d0] sm:$0xff]
    %v1513 = vld [vmem:[#allocation7 + $0x3d8] sm:$0xff]
    %v1514 = vld [vmem:[#allocation7 + $0x3e0] sm:$0xff]
    %v1515 = vld [vmem:[#allocation7 + $0x3e8] sm:$0xff]
    %v1516 = vld [vmem:[#allocation7 + $0x3f0] sm:$0xff]
    %v1517 = vld [vmem:[#allocation7 + $0x3f8] sm:$0xff]
    %v1518 = vld [vmem:[%s8] sm:$0xf]
    %v1520 = vlaneseq
    %v1521 = vshrl.u32 %v1520, 7
    %v1522 = vsub.s32 0, %v1521
    %v1523 = vrot.slane %v1518, %v1522
    %v1524 = vlaneseq
    %v1525 = vshrl.u32 %v1524, 7
    %v1526 = vsub.s32 1, %v1525
    %v1527 = vrot.slane %v1518, %v1526
    %v1528 = vlaneseq
    %v1529 = vshrl.u32 %v1528, 7
    %v1530 = vsub.s32 2, %v1529
    %v1531 = vrot.slane %v1518, %v1530
    %v1532 = vlaneseq
    %v1533 = vshrl.u32 %v1532, 7
    %v1534 = vsub.s32 3, %v1533
    %v1535 = vrot.slane %v1518, %v1534
    %v1668 = vunpack.c.l.b16 %v1390
    %v1669 = vunpack.c.h.b16 %v1390
    %v1670 = vunpack.c.l.b16 %v1391
    %v1671 = vunpack.c.h.b16 %v1391
    %v1672 = vunpack.c.l.b16 %v1392
    %v1673 = vunpack.c.h.b16 %v1392
    %v1674 = vunpack.c.l.b16 %v1393
    %v1675 = vunpack.c.h.b16 %v1393
    %v1676 = vunpack.c.l.b16 %v1394
    %v1677 = vunpack.c.h.b16 %v1394
    %v1678 = vunpack.c.l.b16 %v1395
    %v1679 = vunpack.c.h.b16 %v1395
    %v1680 = vunpack.c.l.b16 %v1396
    %v1681 = vunpack.c.h.b16 %v1396
    %v1682 = vunpack.c.l.b16 %v1397
    %v1683 = vunpack.c.h.b16 %v1397
    %v1684 = vunpack.c.l.b16 %v1398
    %v1685 = vunpack.c.h.b16 %v1398
    %v1686 = vunpack.c.l.b16 %v1399
    %v1687 = vunpack.c.h.b16 %v1399
    %v1688 = vunpack.c.l.b16 %v1400
    %v1689 = vunpack.c.h.b16 %v1400
    %v1690 = vunpack.c.l.b16 %v1401
    %v1691 = vunpack.c.h.b16 %v1401
    %v1692 = vunpack.c.l.b16 %v1402
    %v1693 = vunpack.c.h.b16 %v1402
    %v1694 = vunpack.c.l.b16 %v1403
    %v1695 = vunpack.c.h.b16 %v1403
    %v1696 = vunpack.c.l.b16 %v1404
    %v1697 = vunpack.c.h.b16 %v1404
    %v1698 = vunpack.c.l.b16 %v1405
    %v1699 = vunpack.c.h.b16 %v1405
    %v1700 = vunpack.c.l.b16 %v1406
    %v1701 = vunpack.c.h.b16 %v1406
    %v1702 = vunpack.c.l.b16 %v1407
    %v1703 = vunpack.c.h.b16 %v1407
    %v1704 = vunpack.c.l.b16 %v1408
    %v1705 = vunpack.c.h.b16 %v1408
    %v1706 = vunpack.c.l.b16 %v1409
    %v1707 = vunpack.c.h.b16 %v1409
    %v1708 = vunpack.c.l.b16 %v1410
    %v1709 = vunpack.c.h.b16 %v1410
    %v1710 = vunpack.c.l.b16 %v1411
    %v1711 = vunpack.c.h.b16 %v1411
    %v1712 = vunpack.c.l.b16 %v1412
    %v1713 = vunpack.c.h.b16 %v1412
    %v1714 = vunpack.c.l.b16 %v1413
    %v1715 = vunpack.c.h.b16 %v1413
    %v1716 = vunpack.c.l.b16 %v1414
    %v1717 = vunpack.c.h.b16 %v1414
    %v1718 = vunpack.c.l.b16 %v1415
    %v1719 = vunpack.c.h.b16 %v1415
    %v1720 = vunpack.c.l.b16 %v1416
    %v1721 = vunpack.c.h.b16 %v1416
    %v1722 = vunpack.c.l.b16 %v1417
    %v1723 = vunpack.c.h.b16 %v1417
    %v1724 = vunpack.c.l.b16 %v1418
    %v1725 = vunpack.c.h.b16 %v1418
    %v1726 = vunpack.c.l.b16 %v1419
    %v1727 = vunpack.c.h.b16 %v1419
    %v1728 = vunpack.c.l.b16 %v1420
    %v1729 = vunpack.c.h.b16 %v1420
    %v1730 = vunpack.c.l.b16 %v1421
    %v1731 = vunpack.c.h.b16 %v1421
    %v1732 = vunpack.c.l.b16 %v1422
    %v1733 = vunpack.c.h.b16 %v1422
    %v1734 = vunpack.c.l.b16 %v1423
    %v1735 = vunpack.c.h.b16 %v1423
    %v1736 = vunpack.c.l.b16 %v1424
    %v1737 = vunpack.c.h.b16 %v1424
    %v1738 = vunpack.c.l.b16 %v1425
    %v1739 = vunpack.c.h.b16 %v1425
    %v1740 = vunpack.c.l.b16 %v1426
    %v1741 = vunpack.c.h.b16 %v1426
    %v1742 = vunpack.c.l.b16 %v1427
    %v1743 = vunpack.c.h.b16 %v1427
    %v1744 = vunpack.c.l.b16 %v1428
    %v1745 = vunpack.c.h.b16 %v1428
    %v1746 = vunpack.c.l.b16 %v1429
    %v1747 = vunpack.c.h.b16 %v1429
    %v1748 = vunpack.c.l.b16 %v1430
    %v1749 = vunpack.c.h.b16 %v1430
    %v1750 = vunpack.c.l.b16 %v1431
    %v1751 = vunpack.c.h.b16 %v1431
    %v1752 = vunpack.c.l.b16 %v1432
    %v1753 = vunpack.c.h.b16 %v1432
    %v1754 = vunpack.c.l.b16 %v1433
    %v1755 = vunpack.c.h.b16 %v1433
    %v1756 = vunpack.c.l.b16 %v1434
    %v1757 = vunpack.c.h.b16 %v1434
    %v1758 = vunpack.c.l.b16 %v1435
    %v1759 = vunpack.c.h.b16 %v1435
    %v1760 = vunpack.c.l.b16 %v1436
    %v1761 = vunpack.c.h.b16 %v1436
    %v1762 = vunpack.c.l.b16 %v1437
    %v1763 = vunpack.c.h.b16 %v1437
    %v1764 = vunpack.c.l.b16 %v1438
    %v1765 = vunpack.c.h.b16 %v1438
    %v1766 = vunpack.c.l.b16 %v1439
    %v1767 = vunpack.c.h.b16 %v1439
    %v1768 = vunpack.c.l.b16 %v1440
    %v1769 = vunpack.c.h.b16 %v1440
    %v1770 = vunpack.c.l.b16 %v1441
    %v1771 = vunpack.c.h.b16 %v1441
    %v1772 = vunpack.c.l.b16 %v1442
    %v1773 = vunpack.c.h.b16 %v1442
    %v1774 = vunpack.c.l.b16 %v1443
    %v1775 = vunpack.c.h.b16 %v1443
    %v1776 = vunpack.c.l.b16 %v1444
    %v1777 = vunpack.c.h.b16 %v1444
    %v1778 = vunpack.c.l.b16 %v1445
    %v1779 = vunpack.c.h.b16 %v1445
    %v1780 = vunpack.c.l.b16 %v1446
    %v1781 = vunpack.c.h.b16 %v1446
    %v1782 = vunpack.c.l.b16 %v1447
    %v1783 = vunpack.c.h.b16 %v1447
    %v1784 = vunpack.c.l.b16 %v1448
    %v1785 = vunpack.c.h.b16 %v1448
    %v1786 = vunpack.c.l.b16 %v1449
    %v1787 = vunpack.c.h.b16 %v1449
    %v1788 = vunpack.c.l.b16 %v1450
    %v1789 = vunpack.c.h.b16 %v1450
    %v1790 = vunpack.c.l.b16 %v1451
    %v1791 = vunpack.c.h.b16 %v1451
    %v1792 = vunpack.c.l.b16 %v1452
    %v1793 = vunpack.c.h.b16 %v1452
    %v1794 = vunpack.c.l.b16 %v1453
    %v1795 = vunpack.c.h.b16 %v1453
    %v1796 = vunpack.c.l.b16 %v1454
    %v1797 = vunpack.c.h.b16 %v1454
    %v1798 = vunpack.c.l.b16 %v1455
    %v1799 = vunpack.c.h.b16 %v1455
    %v1800 = vunpack.c.l.b16 %v1456
    %v1801 = vunpack.c.h.b16 %v1456
    %v1802 = vunpack.c.l.b16 %v1457
    %v1803 = vunpack.c.h.b16 %v1457
    %v1804 = vunpack.c.l.b16 %v1458
    %v1805 = vunpack.c.h.b16 %v1458
    %v1806 = vunpack.c.l.b16 %v1459
    %v1807 = vunpack.c.h.b16 %v1459
    %v1808 = vunpack.c.l.b16 %v1460
    %v1809 = vunpack.c.h.b16 %v1460
    %v1810 = vunpack.c.l.b16 %v1461
    %v1811 = vunpack.c.h.b16 %v1461
    %v1812 = vunpack.c.l.b16 %v1462
    %v1813 = vunpack.c.h.b16 %v1462
    %v1814 = vunpack.c.l.b16 %v1463
    %v1815 = vunpack.c.h.b16 %v1463
    %v1816 = vunpack.c.l.b16 %v1464
    %v1817 = vunpack.c.h.b16 %v1464
    %v1818 = vunpack.c.l.b16 %v1465
    %v1819 = vunpack.c.h.b16 %v1465
    %v1820 = vunpack.c.l.b16 %v1466
    %v1821 = vunpack.c.h.b16 %v1466
    %v1822 = vunpack.c.l.b16 %v1467
    %v1823 = vunpack.c.h.b16 %v1467
    %v1824 = vunpack.c.l.b16 %v1468
    %v1825 = vunpack.c.h.b16 %v1468
    %v1826 = vunpack.c.l.b16 %v1469
    %v1827 = vunpack.c.h.b16 %v1469
    %v1828 = vunpack.c.l.b16 %v1470
    %v1829 = vunpack.c.h.b16 %v1470
    %v1830 = vunpack.c.l.b16 %v1471
    %v1831 = vunpack.c.h.b16 %v1471
    %v1832 = vunpack.c.l.b16 %v1472
    %v1833 = vunpack.c.h.b16 %v1472
    %v1834 = vunpack.c.l.b16 %v1473
    %v1835 = vunpack.c.h.b16 %v1473
    %v1836 = vunpack.c.l.b16 %v1474
    %v1837 = vunpack.c.h.b16 %v1474
    %v1838 = vunpack.c.l.b16 %v1475
    %v1839 = vunpack.c.h.b16 %v1475
    %v1840 = vunpack.c.l.b16 %v1476
    %v1841 = vunpack.c.h.b16 %v1476
    %v1842 = vunpack.c.l.b16 %v1477
    %v1843 = vunpack.c.h.b16 %v1477
    %v1844 = vunpack.c.l.b16 %v1478
    %v1845 = vunpack.c.h.b16 %v1478
    %v1846 = vunpack.c.l.b16 %v1479
    %v1847 = vunpack.c.h.b16 %v1479
    %v1848 = vunpack.c.l.b16 %v1480
    %v1849 = vunpack.c.h.b16 %v1480
    %v1850 = vunpack.c.l.b16 %v1481
    %v1851 = vunpack.c.h.b16 %v1481
    %v1852 = vunpack.c.l.b16 %v1482
    %v1853 = vunpack.c.h.b16 %v1482
    %v1854 = vunpack.c.l.b16 %v1483
    %v1855 = vunpack.c.h.b16 %v1483
    %v1856 = vunpack.c.l.b16 %v1484
    %v1857 = vunpack.c.h.b16 %v1484
    %v1858 = vunpack.c.l.b16 %v1485
    %v1859 = vunpack.c.h.b16 %v1485
    %v1860 = vunpack.c.l.b16 %v1486
    %v1861 = vunpack.c.h.b16 %v1486
    %v1862 = vunpack.c.l.b16 %v1487
    %v1863 = vunpack.c.h.b16 %v1487
    %v1864 = vunpack.c.l.b16 %v1488
    %v1865 = vunpack.c.h.b16 %v1488
    %v1866 = vunpack.c.l.b16 %v1489
    %v1867 = vunpack.c.h.b16 %v1489
    %v1868 = vunpack.c.l.b16 %v1490
    %v1869 = vunpack.c.h.b16 %v1490
    %v1870 = vunpack.c.l.b16 %v1491
    %v1871 = vunpack.c.h.b16 %v1491
    %v1872 = vunpack.c.l.b16 %v1492
    %v1873 = vunpack.c.h.b16 %v1492
    %v1874 = vunpack.c.l.b16 %v1493
    %v1875 = vunpack.c.h.b16 %v1493
    %v1876 = vunpack.c.l.b16 %v1494
    %v1877 = vunpack.c.h.b16 %v1494
    %v1878 = vunpack.c.l.b16 %v1495
    %v1879 = vunpack.c.h.b16 %v1495
    %v1880 = vunpack.c.l.b16 %v1496
    %v1881 = vunpack.c.h.b16 %v1496
    %v1882 = vunpack.c.l.b16 %v1497
    %v1883 = vunpack.c.h.b16 %v1497
    %v1884 = vunpack.c.l.b16 %v1498
    %v1885 = vunpack.c.h.b16 %v1498
    %v1886 = vunpack.c.l.b16 %v1499
    %v1887 = vunpack.c.h.b16 %v1499
    %v1888 = vunpack.c.l.b16 %v1500
    %v1889 = vunpack.c.h.b16 %v1500
    %v1890 = vunpack.c.l.b16 %v1501
    %v1891 = vunpack.c.h.b16 %v1501
    %v1892 = vunpack.c.l.b16 %v1502
    %v1893 = vunpack.c.h.b16 %v1502
    %v1894 = vunpack.c.l.b16 %v1503
    %v1895 = vunpack.c.h.b16 %v1503
    %v1896 = vunpack.c.l.b16 %v1504
    %v1897 = vunpack.c.h.b16 %v1504
    %v1898 = vunpack.c.l.b16 %v1505
    %v1899 = vunpack.c.h.b16 %v1505
    %v1900 = vunpack.c.l.b16 %v1506
    %v1901 = vunpack.c.h.b16 %v1506
    %v1902 = vunpack.c.l.b16 %v1507
    %v1903 = vunpack.c.h.b16 %v1507
    %v1904 = vunpack.c.l.b16 %v1508
    %v1905 = vunpack.c.h.b16 %v1508
    %v1906 = vunpack.c.l.b16 %v1509
    %v1907 = vunpack.c.h.b16 %v1509
    %v1908 = vunpack.c.l.b16 %v1510
    %v1909 = vunpack.c.h.b16 %v1510
    %v1910 = vunpack.c.l.b16 %v1511
    %v1911 = vunpack.c.h.b16 %v1511
    %v1912 = vunpack.c.l.b16 %v1512
    %v1913 = vunpack.c.h.b16 %v1512
    %v1914 = vunpack.c.l.b16 %v1513
    %v1915 = vunpack.c.h.b16 %v1513
    %v1916 = vunpack.c.l.b16 %v1514
    %v1917 = vunpack.c.h.b16 %v1514
    %v1918 = vunpack.c.l.b16 %v1515
    %v1919 = vunpack.c.h.b16 %v1515
    %v1920 = vunpack.c.l.b16 %v1516
    %v1921 = vunpack.c.h.b16 %v1516
    %v1922 = vunpack.c.l.b16 %v1517
    %v1923 = vunpack.c.h.b16 %v1517
    %v1924 = vpack.c.b16 %v1672, %v1668
    %v1925 = vpack.c.b16 %v1673, %v1669
    %v1926 = vpack.c.b16 %v1674, %v1670
    %v1927 = vpack.c.b16 %v1675, %v1671
    %v1928 = vpack.c.b16 %v1680, %v1676
    %v1929 = vpack.c.b16 %v1681, %v1677
    %v1930 = vpack.c.b16 %v1682, %v1678
    %v1931 = vpack.c.b16 %v1683, %v1679
    %v1932 = vpack.c.b16 %v1688, %v1684
    %v1933 = vpack.c.b16 %v1689, %v1685
    %v1934 = vpack.c.b16 %v1690, %v1686
    %v1935 = vpack.c.b16 %v1691, %v1687
    %v1936 = vpack.c.b16 %v1696, %v1692
    %v1937 = vpack.c.b16 %v1697, %v1693
    %v1938 = vpack.c.b16 %v1698, %v1694
    %v1939 = vpack.c.b16 %v1699, %v1695
    %v1940 = vpack.c.b16 %v1704, %v1700
    %v1941 = vpack.c.b16 %v1705, %v1701
    %v1942 = vpack.c.b16 %v1706, %v1702
    %v1943 = vpack.c.b16 %v1707, %v1703
    %v1944 = vpack.c.b16 %v1712, %v1708
    %v1945 = vpack.c.b16 %v1713, %v1709
    %v1946 = vpack.c.b16 %v1714, %v1710
    %v1947 = vpack.c.b16 %v1715, %v1711
    %v1948 = vpack.c.b16 %v1720, %v1716
    %v1949 = vpack.c.b16 %v1721, %v1717
    %v1950 = vpack.c.b16 %v1722, %v1718
    %v1951 = vpack.c.b16 %v1723, %v1719
    %v1952 = vpack.c.b16 %v1728, %v1724
    %v1953 = vpack.c.b16 %v1729, %v1725
    %v1954 = vpack.c.b16 %v1730, %v1726
    %v1955 = vpack.c.b16 %v1731, %v1727
    %v1956 = vpack.c.b16 %v1736, %v1732
    %v1957 = vpack.c.b16 %v1737, %v1733
    %v1958 = vpack.c.b16 %v1738, %v1734
    %v1959 = vpack.c.b16 %v1739, %v1735
    %v1960 = vpack.c.b16 %v1744, %v1740
    %v1961 = vpack.c.b16 %v1745, %v1741
    %v1962 = vpack.c.b16 %v1746, %v1742
    %v1963 = vpack.c.b16 %v1747, %v1743
    %v1964 = vpack.c.b16 %v1752, %v1748
    %v1965 = vpack.c.b16 %v1753, %v1749
    %v1966 = vpack.c.b16 %v1754, %v1750
    %v1967 = vpack.c.b16 %v1755, %v1751
    %v1968 = vpack.c.b16 %v1760, %v1756
    %v1969 = vpack.c.b16 %v1761, %v1757
    %v1970 = vpack.c.b16 %v1762, %v1758
    %v1971 = vpack.c.b16 %v1763, %v1759
    %v1972 = vpack.c.b16 %v1768, %v1764
    %v1973 = vpack.c.b16 %v1769, %v1765
    %v1974 = vpack.c.b16 %v1770, %v1766
    %v1975 = vpack.c.b16 %v1771, %v1767
    %v1976 = vpack.c.b16 %v1776, %v1772
    %v1977 = vpack.c.b16 %v1777, %v1773
    %v1978 = vpack.c.b16 %v1778, %v1774
    %v1979 = vpack.c.b16 %v1779, %v1775
    %v1980 = vpack.c.b16 %v1784, %v1780
    %v1981 = vpack.c.b16 %v1785, %v1781
    %v1982 = vpack.c.b16 %v1786, %v1782
    %v1983 = vpack.c.b16 %v1787, %v1783
    %v1984 = vpack.c.b16 %v1792, %v1788
    %v1985 = vpack.c.b16 %v1793, %v1789
    %v1986 = vpack.c.b16 %v1794, %v1790
    %v1987 = vpack.c.b16 %v1795, %v1791
    %v1988 = vpack.c.b16 %v1800, %v1796
    %v1989 = vpack.c.b16 %v1801, %v1797
    %v1990 = vpack.c.b16 %v1802, %v1798
    %v1991 = vpack.c.b16 %v1803, %v1799
    %v1992 = vpack.c.b16 %v1808, %v1804
    %v1993 = vpack.c.b16 %v1809, %v1805
    %v1994 = vpack.c.b16 %v1810, %v1806
    %v1995 = vpack.c.b16 %v1811, %v1807
    %v1996 = vpack.c.b16 %v1816, %v1812
    %v1997 = vpack.c.b16 %v1817, %v1813
    %v1998 = vpack.c.b16 %v1818, %v1814
    %v1999 = vpack.c.b16 %v1819, %v1815
    %v2000 = vpack.c.b16 %v1824, %v1820
    %v2001 = vpack.c.b16 %v1825, %v1821
    %v2002 = vpack.c.b16 %v1826, %v1822
    %v2003 = vpack.c.b16 %v1827, %v1823
    %v2004 = vpack.c.b16 %v1832, %v1828
    %v2005 = vpack.c.b16 %v1833, %v1829
    %v2006 = vpack.c.b16 %v1834, %v1830
    %v2007 = vpack.c.b16 %v1835, %v1831
    %v2008 = vpack.c.b16 %v1840, %v1836
    %v2009 = vpack.c.b16 %v1841, %v1837
    %v2010 = vpack.c.b16 %v1842, %v1838
    %v2011 = vpack.c.b16 %v1843, %v1839
    %v2012 = vpack.c.b16 %v1848, %v1844
    %v2013 = vpack.c.b16 %v1849, %v1845
    %v2014 = vpack.c.b16 %v1850, %v1846
    %v2015 = vpack.c.b16 %v1851, %v1847
    %v2016 = vpack.c.b16 %v1856, %v1852
    %v2017 = vpack.c.b16 %v1857, %v1853
    %v2018 = vpack.c.b16 %v1858, %v1854
    %v2019 = vpack.c.b16 %v1859, %v1855
    %v2020 = vpack.c.b16 %v1864, %v1860
    %v2021 = vpack.c.b16 %v1865, %v1861
    %v2022 = vpack.c.b16 %v1866, %v1862
    %v2023 = vpack.c.b16 %v1867, %v1863
    %v2024 = vpack.c.b16 %v1872, %v1868
    %v2025 = vpack.c.b16 %v1873, %v1869
    %v2026 = vpack.c.b16 %v1874, %v1870
    %v2027 = vpack.c.b16 %v1875, %v1871
    %v2028 = vpack.c.b16 %v1880, %v1876
    %v2029 = vpack.c.b16 %v1881, %v1877
    %v2030 = vpack.c.b16 %v1882, %v1878
    %v2031 = vpack.c.b16 %v1883, %v1879
    %v2032 = vpack.c.b16 %v1888, %v1884
    %v2033 = vpack.c.b16 %v1889, %v1885
    %v2034 = vpack.c.b16 %v1890, %v1886
    %v2035 = vpack.c.b16 %v1891, %v1887
    %v2036 = vpack.c.b16 %v1896, %v1892
    %v2037 = vpack.c.b16 %v1897, %v1893
    %v2038 = vpack.c.b16 %v1898, %v1894
    %v2039 = vpack.c.b16 %v1899, %v1895
    %v2040 = vpack.c.b16 %v1904, %v1900
    %v2041 = vpack.c.b16 %v1905, %v1901
    %v2042 = vpack.c.b16 %v1906, %v1902
    %v2043 = vpack.c.b16 %v1907, %v1903
    %v2044 = vpack.c.b16 %v1912, %v1908
    %v2045 = vpack.c.b16 %v1913, %v1909
    %v2046 = vpack.c.b16 %v1914, %v1910
    %v2047 = vpack.c.b16 %v1915, %v1911
    %v2048 = vpack.c.b16 %v1920, %v1916
    %v2049 = vpack.c.b16 %v1921, %v1917
    %v2050 = vpack.c.b16 %v1922, %v1918
    %v2051 = vpack.c.b16 %v1923, %v1919
    %2180 = vmatprep.subr.bf16.mxu0 %v1925
    %2181 = vmatpush1.bf16.msra.mxu0 %v1924
    %2182 = vmatprep.subr.bf16.mxu0 %v1929
    %2183 = vmatpush1.bf16.msra.mxu0 %v1928
    %2184 = vmatprep.subr.bf16.mxu0 %v1933
    %2185 = vmatpush1.bf16.msra.mxu0 %v1932
    %2186 = vmatprep.subr.bf16.mxu0 %v1937
    %2187 = vmatpush1.bf16.msra.mxu0 %v1936
    %2188 = vmatprep.subr.bf16.mxu0 %v1941
    %2189 = vmatpush1.bf16.msra.mxu0 %v1940
    %2190 = vmatprep.subr.bf16.mxu0 %v1945
    %2191 = vmatpush1.bf16.msra.mxu0 %v1944
    %2192 = vmatprep.subr.bf16.mxu0 %v1949
    %2193 = vmatpush1.bf16.msra.mxu0 %v1948
    %2194 = vmatprep.subr.bf16.mxu0 %v1953
    %2195 = vmatpush1.bf16.msra.mxu0 %v1952
    %2196 = vmatprep.subr.bf16.mxu0 %v1957
    %2197 = vmatpush1.bf16.msra.mxu0 %v1956
    %2198 = vmatprep.subr.bf16.mxu0 %v1961
    %2199 = vmatpush1.bf16.msra.mxu0 %v1960
    %2200 = vmatprep.subr.bf16.mxu0 %v1965
    %2201 = vmatpush1.bf16.msra.mxu0 %v1964
    %2202 = vmatprep.subr.bf16.mxu0 %v1969
    %2203 = vmatpush1.bf16.msra.mxu0 %v1968
    %2204 = vmatprep.subr.bf16.mxu0 %v1973
    %2205 = vmatpush1.bf16.msra.mxu0 %v1972
    %2206 = vmatprep.subr.bf16.mxu0 %v1977
    %2207 = vmatpush1.bf16.msra.mxu0 %v1976
    %2208 = vmatprep.subr.bf16.mxu0 %v1981
    %2209 = vmatpush1.bf16.msra.mxu0 %v1980
    %2210 = vmatprep.subr.bf16.mxu0 %v1985
    %2211 = vmatpush1.bf16.msra.mxu0 %v1984
    %2212 = vmatprep.mubr.bf16.mxu0 %v1387
    %2213 = vmatmul.mubr.bf16.gmra.mrb[0].mxu0 %v1386
    %v2214 = vpop.f32.mrb[0].mxu0
    %v2215 = vadd.f32 %v1523, %v2214
    %v2216 = vpop.f32.mrb[0].mxu0
    %v2217 = vadd.f32 %v1527, %v2216
    %v2218 = vpop.f32.mrb[0].mxu0
    %v2219 = vpop.f32.mrb[0].mxu0
    %2220 = vdwg.mxu0
    %2221 = vmatprep.subr.bf16.mxu0 %v1989
    %2222 = vmatpush1.bf16.msra.mxu0 %v1988
    %2223 = vmatprep.subr.bf16.mxu0 %v1993
    %2224 = vmatpush1.bf16.msra.mxu0 %v1992
    %2225 = vmatprep.subr.bf16.mxu0 %v1997
    %2226 = vmatpush1.bf16.msra.mxu0 %v1996
    %2227 = vmatprep.subr.bf16.mxu0 %v2001
    %2228 = vmatpush1.bf16.msra.mxu0 %v2000
    %2229 = vmatprep.subr.bf16.mxu0 %v2005
    %2230 = vmatpush1.bf16.msra.mxu0 %v2004
    %2231 = vmatprep.subr.bf16.mxu0 %v2009
    %2232 = vmatpush1.bf16.msra.mxu0 %v2008
    %2233 = vmatprep.subr.bf16.mxu0 %v2013
    %2234 = vmatpush1.bf16.msra.mxu0 %v2012
    %2235 = vmatprep.subr.bf16.mxu0 %v2017
    %2236 = vmatpush1.bf16.msra.mxu0 %v2016
    %2237 = vmatprep.subr.bf16.mxu0 %v2021
    %2238 = vmatpush1.bf16.msra.mxu0 %v2020
    %2239 = vmatprep.subr.bf16.mxu0 %v2025
    %2240 = vmatpush1.bf16.msra.mxu0 %v2024
    %2241 = vmatprep.subr.bf16.mxu0 %v2029
    %2242 = vmatpush1.bf16.msra.mxu0 %v2028
    %2243 = vmatprep.subr.bf16.mxu0 %v2033
    %2244 = vmatpush1.bf16.msra.mxu0 %v2032
    %2245 = vmatprep.subr.bf16.mxu0 %v2037
    %2246 = vmatpush1.bf16.msra.mxu0 %v2036
    %2247 = vmatprep.subr.bf16.mxu0 %v2041
    %2248 = vmatpush1.bf16.msra.mxu0 %v2040
    %2249 = vmatprep.subr.bf16.mxu0 %v2045
    %2250 = vmatpush1.bf16.msra.mxu0 %v2044
    %2251 = vmatprep.subr.bf16.mxu0 %v2049
    %2252 = vmatpush1.bf16.msra.mxu0 %v2048
    %2253 = vmatprep.mubr.bf16.mxu0 %v1389
    %2254 = vmatmul.mubr.bf16.gmra.mrb[0].mxu0 %v1388
    %v2255 = vpop.f32.mrb[0].mxu0
    %v2256 = vadd.f32 %v2215, %v2255
    %v2257 = vpop.f32.mrb[0].mxu0
    %v2258 = vadd.f32 %v2217, %v2257
    %v2259 = vpop.f32.mrb[0].mxu0
    %v2260 = vpop.f32.mrb[0].mxu0
    %2261 = vdwg.mxu0
    %2262 = vmatprep.subr.bf16.mxu0 %v1927
    %2263 = vmatpush1.bf16.msra.mxu0 %v1926
    %2264 = vmatprep.subr.bf16.mxu0 %v1931
    %2265 = vmatpush1.bf16.msra.mxu0 %v1930
    %2266 = vmatprep.subr.bf16.mxu0 %v1935
    %2267 = vmatpush1.bf16.msra.mxu0 %v1934
    %2268 = vmatprep.subr.bf16.mxu0 %v1939
    %2269 = vmatpush1.bf16.msra.mxu0 %v1938
    %2270 = vmatprep.subr.bf16.mxu0 %v1943
    %2271 = vmatpush1.bf16.msra.mxu0 %v1942
    %2272 = vmatprep.subr.bf16.mxu0 %v1947
    %2273 = vmatpush1.bf16.msra.mxu0 %v1946
    %2274 = vmatprep.subr.bf16.mxu0 %v1951
    %2275 = vmatpush1.bf16.msra.mxu0 %v1950
    %2276 = vmatprep.subr.bf16.mxu0 %v1955
    %2277 = vmatpush1.bf16.msra.mxu0 %v1954
    %2278 = vmatprep.subr.bf16.mxu0 %v1959
    %2279 = vmatpush1.bf16.msra.mxu0 %v1958
    %2280 = vmatprep.subr.bf16.mxu0 %v1963
    %2281 = vmatpush1.bf16.msra.mxu0 %v1962
    %2282 = vmatprep.subr.bf16.mxu0 %v1967
    %2283 = vmatpush1.bf16.msra.mxu0 %v1966
    %2284 = vmatprep.subr.bf16.mxu0 %v1971
    %2285 = vmatpush1.bf16.msra.mxu0 %v1970
    %2286 = vmatprep.subr.bf16.mxu0 %v1975
    %2287 = vmatpush1.bf16.msra.mxu0 %v1974
    %2288 = vmatprep.subr.bf16.mxu0 %v1979
    %2289 = vmatpush1.bf16.msra.mxu0 %v1978
    %2290 = vmatprep.subr.bf16.mxu0 %v1983
    %2291 = vmatpush1.bf16.msra.mxu0 %v1982
    %2292 = vmatprep.subr.bf16.mxu0 %v1987
    %2293 = vmatpush1.bf16.msra.mxu0 %v1986
    %2294 = vmatprep.mubr.bf16.mxu0 %v1387
    %2295 = vmatmul.mubr.bf16.gmra.mrb[0].mxu0 %v1386
    %v2296 = vpop.f32.mrb[0].mxu0
    %v2297 = vadd.f32 %v1531, %v2296
    %v2298 = vpop.f32.mrb[0].mxu0
    %v2299 = vadd.f32 %v1535, %v2298
    %v2300 = vpop.f32.mrb[0].mxu0
    %v2301 = vpop.f32.mrb[0].mxu0
    %2302 = vdwg.mxu0
    %2303 = vmatprep.subr.bf16.mxu0 %v1991
    %2304 = vmatpush1.bf16.msra.mxu0 %v1990
    %2305 = vmatprep.subr.bf16.mxu0 %v1995
    %2306 = vmatpush1.bf16.msra.mxu0 %v1994
    %2307 = vmatprep.subr.bf16.mxu0 %v1999
    %2308 = vmatpush1.bf16.msra.mxu0 %v1998
    %2309 = vmatprep.subr.bf16.mxu0 %v2003
    %2310 = vmatpush1.bf16.msra.mxu0 %v2002
    %2311 = vmatprep.subr.bf16.mxu0 %v2007
    %2312 = vmatpush1.bf16.msra.mxu0 %v2006
    %2313 = vmatprep.subr.bf16.mxu0 %v2011
    %2314 = vmatpush1.bf16.msra.mxu0 %v2010
    %2315 = vmatprep.subr.bf16.mxu0 %v2015
    %2316 = vmatpush1.bf16.msra.mxu0 %v2014
    %2317 = vmatprep.subr.bf16.mxu0 %v2019
    %2318 = vmatpush1.bf16.msra.mxu0 %v2018
    %2319 = vmatprep.subr.bf16.mxu0 %v2023
    %2320 = vmatpush1.bf16.msra.mxu0 %v2022
    %2321 = vmatprep.subr.bf16.mxu0 %v2027
    %2322 = vmatpush1.bf16.msra.mxu0 %v2026
    %2323 = vmatprep.subr.bf16.mxu0 %v2031
    %2324 = vmatpush1.bf16.msra.mxu0 %v2030
    %2325 = vmatprep.subr.bf16.mxu0 %v2035
    %2326 = vmatpush1.bf16.msra.mxu0 %v2034
    %2327 = vmatprep.subr.bf16.mxu0 %v2039
    %2328 = vmatpush1.bf16.msra.mxu0 %v2038
    %2329 = vmatprep.subr.bf16.mxu0 %v2043
    %2330 = vmatpush1.bf16.msra.mxu0 %v2042
    %2331 = vmatprep.subr.bf16.mxu0 %v2047
    %2332 = vmatpush1.bf16.msra.mxu0 %v2046
    %2333 = vmatprep.subr.bf16.mxu0 %v2051
    %2334 = vmatpush1.bf16.msra.mxu0 %v2050
    %2335 = vmatprep.mubr.bf16.mxu0 %v1389
    %2336 = vmatmul.mubr.bf16.gmra.mrb[0].mxu0 %v1388
    %v2337 = vpop.f32.mrb[0].mxu0
    %v2338 = vadd.f32 %v2297, %v2337
    %v2339 = vpop.f32.mrb[0].mxu0
    %v2340 = vadd.f32 %v2299, %v2339
    %v2341 = vpop.f32.mrb[0].mxu0
    %v2342 = vpop.f32.mrb[0].mxu0
    %2343 = vdwg.mxu0
    %v2344 = vmax.f32 %v2256, 0.0
    %v2345 = vmax.f32 %v2258, 0.0
    %v2346 = vmax.f32 %v2338, 0.0
    %v2347 = vmax.f32 %v2340, 0.0
    %v2348 = vpack.c.bf16 %v2344, %v2344
    %v2349 = vpack.c.bf16 %v2345, %v2345
    %v2350 = vpack.c.bf16 %v2346, %v2346
    %v2351 = vpack.c.bf16 %v2347, %v2347
    %v2352 = vld [vmem:[#allocation9] sm:$0xff]
    %v2353 = vld [vmem:[#allocation9 + $0x8] sm:$0xf]
    %v2354 = vld [vmem:[#allocation9 + $0xc] sm:$0xff]
    %v2355 = vld [vmem:[#allocation9 + $0x14] sm:$0xf]
    %v2356 = vld [vmem:[#allocation9 + $0x18] sm:$0xff]
    %v2357 = vld [vmem:[#allocation9 + $0x20] sm:$0xf]
    %v2358 = vld [vmem:[#allocation9 + $0x24] sm:$0xff]
    %v2359 = vld [vmem:[#allocation9 + $0x2c] sm:$0xf]
    %v2360 = vld [vmem:[#allocation9 + $0x30] sm:$0xff]
    %v2361 = vld [vmem:[#allocation9 + $0x38] sm:$0xf]
    %v2362 = vld [vmem:[#allocation9 + $0x3c] sm:$0xff]
    %v2363 = vld [vmem:[#allocation9 + $0x44] sm:$0xf]
    %v2364 = vld [vmem:[#allocation9 + $0x48] sm:$0xff]
    %v2365 = vld [vmem:[#allocation9 + $0x50] sm:$0xf]
    %v2366 = vld [vmem:[#allocation9 + $0x54] sm:$0xff]
    %v2367 = vld [vmem:[#allocation9 + $0x5c] sm:$0xf]
    %v2368 = vld [vmem:[#allocation9 + $0x60] sm:$0xff]
    %v2369 = vld [vmem:[#allocation9 + $0x68] sm:$0xf]
    %v2370 = vld [vmem:[#allocation9 + $0x6c] sm:$0xff]
    %v2371 = vld [vmem:[#allocation9 + $0x74] sm:$0xf]
    %v2372 = vld [vmem:[#allocation9 + $0x78] sm:$0xff]
    %v2373 = vld [vmem:[#allocation9 + $0x80] sm:$0xf]
    %v2374 = vld [vmem:[#allocation9 + $0x84] sm:$0xff]
    %v2375 = vld [vmem:[#allocation9 + $0x8c] sm:$0xf]
    %v2376 = vld [vmem:[#allocation9 + $0x90] sm:$0xff]
    %v2377 = vld [vmem:[#allocation9 + $0x98] sm:$0xf]
    %v2378 = vld [vmem:[#allocation9 + $0x9c] sm:$0xff]
    %v2379 = vld [vmem:[#allocation9 + $0xa4] sm:$0xf]
    %v2380 = vld [vmem:[#allocation9 + $0xa8] sm:$0xff]
    %v2381 = vld [vmem:[#allocation9 + $0xb0] sm:$0xf]
    %v2382 = vld [vmem:[#allocation9 + $0xb4] sm:$0xff]
    %v2383 = vld [vmem:[#allocation9 + $0xbc] sm:$0xf]
    %v2384 = vld [vmem:[#allocation9 + $0xc0] sm:$0xff]
    %v2385 = vld [vmem:[#allocation9 + $0xc8] sm:$0xf]
    %v2386 = vld [vmem:[#allocation9 + $0xcc] sm:$0xff]
    %v2387 = vld [vmem:[#allocation9 + $0xd4] sm:$0xf]
    %v2388 = vld [vmem:[#allocation9 + $0xd8] sm:$0xff]
    %v2389 = vld [vmem:[#allocation9 + $0xe0] sm:$0xf]
    %v2390 = vld [vmem:[#allocation9 + $0xe4] sm:$0xff]
    %v2391 = vld [vmem:[#allocation9 + $0xec] sm:$0xf]
    %v2392 = vld [vmem:[#allocation9 + $0xf0] sm:$0xff]
    %v2393 = vld [vmem:[#allocation9 + $0xf8] sm:$0xf]
    %v2394 = vld [vmem:[#allocation9 + $0xfc] sm:$0xff]
    %v2395 = vld [vmem:[#allocation9 + $0x104] sm:$0xf]
    %v2396 = vld [vmem:[#allocation9 + $0x108] sm:$0xff]
    %v2397 = vld [vmem:[#allocation9 + $0x110] sm:$0xf]
    %v2398 = vld [vmem:[#allocation9 + $0x114] sm:$0xff]
    %v2399 = vld [vmem:[#allocation9 + $0x11c] sm:$0xf]
    %v2400 = vld [vmem:[#allocation9 + $0x120] sm:$0xff]
    %v2401 = vld [vmem:[#allocation9 + $0x128] sm:$0xf]
    %v2402 = vld [vmem:[#allocation9 + $0x12c] sm:$0xff]
    %v2403 = vld [vmem:[#allocation9 + $0x134] sm:$0xf]
    %v2404 = vld [vmem:[#allocation9 + $0x138] sm:$0xff]
    %v2405 = vld [vmem:[#allocation9 + $0x140] sm:$0xf]
    %v2406 = vld [vmem:[#allocation9 + $0x144] sm:$0xff]
    %v2407 = vld [vmem:[#allocation9 + $0x14c] sm:$0xf]
    %v2408 = vld [vmem:[#allocation9 + $0x150] sm:$0xff]
    %v2409 = vld [vmem:[#allocation9 + $0x158] sm:$0xf]
    %v2410 = vld [vmem:[#allocation9 + $0x15c] sm:$0xff]
    %v2411 = vld [vmem:[#allocation9 + $0x164] sm:$0xf]
    %v2412 = vld [vmem:[#allocation9 + $0x168] sm:$0xff]
    %v2413 = vld [vmem:[#allocation9 + $0x170] sm:$0xf]
    %v2414 = vld [vmem:[#allocation9 + $0x174] sm:$0xff]
    %v2415 = vld [vmem:[#allocation9 + $0x17c] sm:$0xf]
    %v2416 = vld [vmem:[#allocation9 + $0x180] sm:$0xff]
    %v2417 = vld [vmem:[#allocation9 + $0x188] sm:$0xf]
    %v2418 = vld [vmem:[#allocation9 + $0x18c] sm:$0xff]
    %v2419 = vld [vmem:[#allocation9 + $0x194] sm:$0xf]
    %v2420 = vld [vmem:[#allocation9 + $0x198] sm:$0xff]
    %v2421 = vld [vmem:[#allocation9 + $0x1a0] sm:$0xf]
    %v2422 = vld [vmem:[#allocation9 + $0x1a4] sm:$0xff]
    %v2423 = vld [vmem:[#allocation9 + $0x1ac] sm:$0xf]
    %v2424 = vld [vmem:[#allocation9 + $0x1b0] sm:$0xff]
    %v2425 = vld [vmem:[#allocation9 + $0x1b8] sm:$0xf]
    %v2426 = vld [vmem:[#allocation9 + $0x1bc] sm:$0xff]
    %v2427 = vld [vmem:[#allocation9 + $0x1c4] sm:$0xf]
    %v2428 = vld [vmem:[#allocation9 + $0x1c8] sm:$0xff]
    %v2429 = vld [vmem:[#allocation9 + $0x1d0] sm:$0xf]
    %v2430 = vld [vmem:[#allocation9 + $0x1d4] sm:$0xff]
    %v2431 = vld [vmem:[#allocation9 + $0x1dc] sm:$0xf]
    %v2432 = vld [vmem:[#allocation9 + $0x1e0] sm:$0xff]
    %v2433 = vld [vmem:[#allocation9 + $0x1e8] sm:$0xf]
    %v2434 = vld [vmem:[#allocation9 + $0x1ec] sm:$0xff]
    %v2435 = vld [vmem:[#allocation9 + $0x1f4] sm:$0xf]
    %v2436 = vld [vmem:[#allocation9 + $0x1f8] sm:$0xff]
    %v2437 = vld [vmem:[#allocation9 + $0x200] sm:$0xf]
    %v2438 = vld [vmem:[#allocation9 + $0x204] sm:$0xff]
    %v2439 = vld [vmem:[#allocation9 + $0x20c] sm:$0xf]
    %v2440 = vld [vmem:[#allocation9 + $0x210] sm:$0xff]
    %v2441 = vld [vmem:[#allocation9 + $0x218] sm:$0xf]
    %v2442 = vld [vmem:[#allocation9 + $0x21c] sm:$0xff]
    %v2443 = vld [vmem:[#allocation9 + $0x224] sm:$0xf]
    %v2444 = vld [vmem:[#allocation9 + $0x228] sm:$0xff]
    %v2445 = vld [vmem:[#allocation9 + $0x230] sm:$0xf]
    %v2446 = vld [vmem:[#allocation9 + $0x234] sm:$0xff]
    %v2447 = vld [vmem:[#allocation9 + $0x23c] sm:$0xf]
    %v2448 = vld [vmem:[#allocation9 + $0x240] sm:$0xff]
    %v2449 = vld [vmem:[#allocation9 + $0x248] sm:$0xf]
    %v2450 = vld [vmem:[#allocation9 + $0x24c] sm:$0xff]
    %v2451 = vld [vmem:[#allocation9 + $0x254] sm:$0xf]
    %v2452 = vld [vmem:[#allocation9 + $0x258] sm:$0xff]
    %v2453 = vld [vmem:[#allocation9 + $0x260] sm:$0xf]
    %v2454 = vld [vmem:[#allocation9 + $0x264] sm:$0xff]
    %v2455 = vld [vmem:[#allocation9 + $0x26c] sm:$0xf]
    %v2456 = vld [vmem:[#allocation9 + $0x270] sm:$0xff]
    %v2457 = vld [vmem:[#allocation9 + $0x278] sm:$0xf]
    %v2458 = vld [vmem:[#allocation9 + $0x27c] sm:$0xff]
    %v2459 = vld [vmem:[#allocation9 + $0x284] sm:$0xf]
    %v2460 = vld [vmem:[#allocation9 + $0x288] sm:$0xff]
    %v2461 = vld [vmem:[#allocation9 + $0x290] sm:$0xf]
    %v2462 = vld [vmem:[#allocation9 + $0x294] sm:$0xff]
    %v2463 = vld [vmem:[#allocation9 + $0x29c] sm:$0xf]
    %v2464 = vld [vmem:[#allocation9 + $0x2a0] sm:$0xff]
    %v2465 = vld [vmem:[#allocation9 + $0x2a8] sm:$0xf]
    %v2466 = vld [vmem:[#allocation9 + $0x2ac] sm:$0xff]
    %v2467 = vld [vmem:[#allocation9 + $0x2b4] sm:$0xf]
    %v2468 = vld [vmem:[#allocation9 + $0x2b8] sm:$0xff]
    %v2469 = vld [vmem:[#allocation9 + $0x2c0] sm:$0xf]
    %v2470 = vld [vmem:[#allocation9 + $0x2c4] sm:$0xff]
    %v2471 = vld [vmem:[#allocation9 + $0x2cc] sm:$0xf]
    %v2472 = vld [vmem:[#allocation9 + $0x2d0] sm:$0xff]
    %v2473 = vld [vmem:[#allocation9 + $0x2d8] sm:$0xf]
    %v2474 = vld [vmem:[#allocation9 + $0x2dc] sm:$0xff]
    %v2475 = vld [vmem:[#allocation9 + $0x2e4] sm:$0xf]
    %v2476 = vld [vmem:[#allocation9 + $0x2e8] sm:$0xff]
    %v2477 = vld [vmem:[#allocation9 + $0x2f0] sm:$0xf]
    %v2478 = vld [vmem:[#allocation9 + $0x2f4] sm:$0xff]
    %v2479 = vld [vmem:[#allocation9 + $0x2fc] sm:$0xf]
    %v2480 = vld [vmem:[%s10] sm:$0x7]
    %v2482 = vlaneseq
    %v2483 = vshrl.u32 %v2482, 7
    %v2484 = vsub.s32 0, %v2483
    %v2485 = vrot.slane %v2480, %v2484
    %v2486 = vlaneseq
    %v2487 = vshrl.u32 %v2486, 7
    %v2488 = vsub.s32 1, %v2487
    %v2489 = vrot.slane %v2480, %v2488
    %v2490 = vlaneseq
    %v2491 = vshrl.u32 %v2490, 7
    %v2492 = vsub.s32 2, %v2491
    %v2493 = vrot.slane %v2480, %v2492
    %v2625 = vunpack.c.l.b16 %v2352
    %v2626 = vunpack.c.h.b16 %v2352
    %v2627 = vunpack.c.l.b16 %v2353
    %v2628 = vunpack.c.l.b16 %v2354
    %v2629 = vunpack.c.h.b16 %v2354
    %v2630 = vunpack.c.l.b16 %v2355
    %v2631 = vunpack.c.l.b16 %v2356
    %v2632 = vunpack.c.h.b16 %v2356
    %v2633 = vunpack.c.l.b16 %v2357
    %v2634 = vunpack.c.l.b16 %v2358
    %v2635 = vunpack.c.h.b16 %v2358
    %v2636 = vunpack.c.l.b16 %v2359
    %v2637 = vunpack.c.l.b16 %v2360
    %v2638 = vunpack.c.h.b16 %v2360
    %v2639 = vunpack.c.l.b16 %v2361
    %v2640 = vunpack.c.l.b16 %v2362
    %v2641 = vunpack.c.h.b16 %v2362
    %v2642 = vunpack.c.l.b16 %v2363
    %v2643 = vunpack.c.l.b16 %v2364
    %v2644 = vunpack.c.h.b16 %v2364
    %v2645 = vunpack.c.l.b16 %v2365
    %v2646 = vunpack.c.l.b16 %v2366
    %v2647 = vunpack.c.h.b16 %v2366
    %v2648 = vunpack.c.l.b16 %v2367
    %v2649 = vunpack.c.l.b16 %v2368
    %v2650 = vunpack.c.h.b16 %v2368
    %v2651 = vunpack.c.l.b16 %v2369
    %v2652 = vunpack.c.l.b16 %v2370
    %v2653 = vunpack.c.h.b16 %v2370
    %v2654 = vunpack.c.l.b16 %v2371
    %v2655 = vunpack.c.l.b16 %v2372
    %v2656 = vunpack.c.h.b16 %v2372
    %v2657 = vunpack.c.l.b16 %v2373
    %v2658 = vunpack.c.l.b16 %v2374
    %v2659 = vunpack.c.h.b16 %v2374
    %v2660 = vunpack.c.l.b16 %v2375
    %v2661 = vunpack.c.l.b16 %v2376
    %v2662 = vunpack.c.h.b16 %v2376
    %v2663 = vunpack.c.l.b16 %v2377
    %v2664 = vunpack.c.l.b16 %v2378
    %v2665 = vunpack.c.h.b16 %v2378
    %v2666 = vunpack.c.l.b16 %v2379
    %v2667 = vunpack.c.l.b16 %v2380
    %v2668 = vunpack.c.h.b16 %v2380
    %v2669 = vunpack.c.l.b16 %v2381
    %v2670 = vunpack.c.l.b16 %v2382
    %v2671 = vunpack.c.h.b16 %v2382
    %v2672 = vunpack.c.l.b16 %v2383
    %v2673 = vunpack.c.l.b16 %v2384
    %v2674 = vunpack.c.h.b16 %v2384
    %v2675 = vunpack.c.l.b16 %v2385
    %v2676 = vunpack.c.l.b16 %v2386
    %v2677 = vunpack.c.h.b16 %v2386
    %v2678 = vunpack.c.l.b16 %v2387
    %v2679 = vunpack.c.l.b16 %v2388
    %v2680 = vunpack.c.h.b16 %v2388
    %v2681 = vunpack.c.l.b16 %v2389
    %v2682 = vunpack.c.l.b16 %v2390
    %v2683 = vunpack.c.h.b16 %v2390
    %v2684 = vunpack.c.l.b16 %v2391
    %v2685 = vunpack.c.l.b16 %v2392
    %v2686 = vunpack.c.h.b16 %v2392
    %v2687 = vunpack.c.l.b16 %v2393
    %v2688 = vunpack.c.l.b16 %v2394
    %v2689 = vunpack.c.h.b16 %v2394
    %v2690 = vunpack.c.l.b16 %v2395
    %v2691 = vunpack.c.l.b16 %v2396
    %v2692 = vunpack.c.h.b16 %v2396
    %v2693 = vunpack.c.l.b16 %v2397
    %v2694 = vunpack.c.l.b16 %v2398
    %v2695 = vunpack.c.h.b16 %v2398
    %v2696 = vunpack.c.l.b16 %v2399
    %v2697 = vunpack.c.l.b16 %v2400
    %v2698 = vunpack.c.h.b16 %v2400
    %v2699 = vunpack.c.l.b16 %v2401
    %v2700 = vunpack.c.l.b16 %v2402
    %v2701 = vunpack.c.h.b16 %v2402
    %v2702 = vunpack.c.l.b16 %v2403
    %v2703 = vunpack.c.l.b16 %v2404
    %v2704 = vunpack.c.h.b16 %v2404
    %v2705 = vunpack.c.l.b16 %v2405
    %v2706 = vunpack.c.l.b16 %v2406
    %v2707 = vunpack.c.h.b16 %v2406
    %v2708 = vunpack.c.l.b16 %v2407
    %v2709 = vunpack.c.l.b16 %v2408
    %v2710 = vunpack.c.h.b16 %v2408
    %v2711 = vunpack.c.l.b16 %v2409
    %v2712 = vunpack.c.l.b16 %v2410
    %v2713 = vunpack.c.h.b16 %v2410
    %v2714 = vunpack.c.l.b16 %v2411
    %v2715 = vunpack.c.l.b16 %v2412
    %v2716 = vunpack.c.h.b16 %v2412
    %v2717 = vunpack.c.l.b16 %v2413
    %v2718 = vunpack.c.l.b16 %v2414
    %v2719 = vunpack.c.h.b16 %v2414
    %v2720 = vunpack.c.l.b16 %v2415
    %v2721 = vunpack.c.l.b16 %v2416
    %v2722 = vunpack.c.h.b16 %v2416
    %v2723 = vunpack.c.l.b16 %v2417
    %v2724 = vunpack.c.l.b16 %v2418
    %v2725 = vunpack.c.h.b16 %v2418
    %v2726 = vunpack.c.l.b16 %v2419
    %v2727 = vunpack.c.l.b16 %v2420
    %v2728 = vunpack.c.h.b16 %v2420
    %v2729 = vunpack.c.l.b16 %v2421
    %v2730 = vunpack.c.l.b16 %v2422
    %v2731 = vunpack.c.h.b16 %v2422
    %v2732 = vunpack.c.l.b16 %v2423
    %v2733 = vunpack.c.l.b16 %v2424
    %v2734 = vunpack.c.h.b16 %v2424
    %v2735 = vunpack.c.l.b16 %v2425
    %v2736 = vunpack.c.l.b16 %v2426
    %v2737 = vunpack.c.h.b16 %v2426
    %v2738 = vunpack.c.l.b16 %v2427
    %v2739 = vunpack.c.l.b16 %v2428
    %v2740 = vunpack.c.h.b16 %v2428
    %v2741 = vunpack.c.l.b16 %v2429
    %v2742 = vunpack.c.l.b16 %v2430
    %v2743 = vunpack.c.h.b16 %v2430
    %v2744 = vunpack.c.l.b16 %v2431
    %v2745 = vunpack.c.l.b16 %v2432
    %v2746 = vunpack.c.h.b16 %v2432
    %v2747 = vunpack.c.l.b16 %v2433
    %v2748 = vunpack.c.l.b16 %v2434
    %v2749 = vunpack.c.h.b16 %v2434
    %v2750 = vunpack.c.l.b16 %v2435
    %v2751 = vunpack.c.l.b16 %v2436
    %v2752 = vunpack.c.h.b16 %v2436
    %v2753 = vunpack.c.l.b16 %v2437
    %v2754 = vunpack.c.l.b16 %v2438
    %v2755 = vunpack.c.h.b16 %v2438
    %v2756 = vunpack.c.l.b16 %v2439
    %v2757 = vunpack.c.l.b16 %v2440
    %v2758 = vunpack.c.h.b16 %v2440
    %v2759 = vunpack.c.l.b16 %v2441
    %v2760 = vunpack.c.l.b16 %v2442
    %v2761 = vunpack.c.h.b16 %v2442
    %v2762 = vunpack.c.l.b16 %v2443
    %v2763 = vunpack.c.l.b16 %v2444
    %v2764 = vunpack.c.h.b16 %v2444
    %v2765 = vunpack.c.l.b16 %v2445
    %v2766 = vunpack.c.l.b16 %v2446
    %v2767 = vunpack.c.h.b16 %v2446
    %v2768 = vunpack.c.l.b16 %v2447
    %v2769 = vunpack.c.l.b16 %v2448
    %v2770 = vunpack.c.h.b16 %v2448
    %v2771 = vunpack.c.l.b16 %v2449
    %v2772 = vunpack.c.l.b16 %v2450
    %v2773 = vunpack.c.h.b16 %v2450
    %v2774 = vunpack.c.l.b16 %v2451
    %v2775 = vunpack.c.l.b16 %v2452
    %v2776 = vunpack.c.h.b16 %v2452
    %v2777 = vunpack.c.l.b16 %v2453
    %v2778 = vunpack.c.l.b16 %v2454
    %v2779 = vunpack.c.h.b16 %v2454
    %v2780 = vunpack.c.l.b16 %v2455
    %v2781 = vunpack.c.l.b16 %v2456
    %v2782 = vunpack.c.h.b16 %v2456
    %v2783 = vunpack.c.l.b16 %v2457
    %v2784 = vunpack.c.l.b16 %v2458
    %v2785 = vunpack.c.h.b16 %v2458
    %v2786 = vunpack.c.l.b16 %v2459
    %v2787 = vunpack.c.l.b16 %v2460
    %v2788 = vunpack.c.h.b16 %v2460
    %v2789 = vunpack.c.l.b16 %v2461
    %v2790 = vunpack.c.l.b16 %v2462
    %v2791 = vunpack.c.h.b16 %v2462
    %v2792 = vunpack.c.l.b16 %v2463
    %v2793 = vunpack.c.l.b16 %v2464
    %v2794 = vunpack.c.h.b16 %v2464
    %v2795 = vunpack.c.l.b16 %v2465
    %v2796 = vunpack.c.l.b16 %v2466
    %v2797 = vunpack.c.h.b16 %v2466
    %v2798 = vunpack.c.l.b16 %v2467
    %v2799 = vunpack.c.l.b16 %v2468
    %v2800 = vunpack.c.h.b16 %v2468
    %v2801 = vunpack.c.l.b16 %v2469
    %v2802 = vunpack.c.l.b16 %v2470
    %v2803 = vunpack.c.h.b16 %v2470
    %v2804 = vunpack.c.l.b16 %v2471
    %v2805 = vunpack.c.l.b16 %v2472
    %v2806 = vunpack.c.h.b16 %v2472
    %v2807 = vunpack.c.l.b16 %v2473
    %v2808 = vunpack.c.l.b16 %v2474
    %v2809 = vunpack.c.h.b16 %v2474
    %v2810 = vunpack.c.l.b16 %v2475
    %v2811 = vunpack.c.l.b16 %v2476
    %v2812 = vunpack.c.h.b16 %v2476
    %v2813 = vunpack.c.l.b16 %v2477
    %v2814 = vunpack.c.l.b16 %v2478
    %v2815 = vunpack.c.h.b16 %v2478
    %v2816 = vunpack.c.l.b16 %v2479
    %v2817 = vpack.c.b16 %v2628, %v2625
    %v2818 = vpack.c.b16 %v2629, %v2626
    %v2819 = vpack.c.b16 %v2630, %v2627
    %v2820 = vpack.c.b16 %v2634, %v2631
    %v2821 = vpack.c.b16 %v2635, %v2632
    %v2822 = vpack.c.b16 %v2636, %v2633
    %v2823 = vpack.c.b16 %v2640, %v2637
    %v2824 = vpack.c.b16 %v2641, %v2638
    %v2825 = vpack.c.b16 %v2642, %v2639
    %v2826 = vpack.c.b16 %v2646, %v2643
    %v2827 = vpack.c.b16 %v2647, %v2644
    %v2828 = vpack.c.b16 %v2648, %v2645
    %v2829 = vpack.c.b16 %v2652, %v2649
    %v2830 = vpack.c.b16 %v2653, %v2650
    %v2831 = vpack.c.b16 %v2654, %v2651
    %v2832 = vpack.c.b16 %v2658, %v2655
    %v2833 = vpack.c.b16 %v2659, %v2656
    %v2834 = vpack.c.b16 %v2660, %v2657
    %v2835 = vpack.c.b16 %v2664, %v2661
    %v2836 = vpack.c.b16 %v2665, %v2662
    %v2837 = vpack.c.b16 %v2666, %v2663
    %v2838 = vpack.c.b16 %v2670, %v2667
    %v2839 = vpack.c.b16 %v2671, %v2668
    %v2840 = vpack.c.b16 %v2672, %v2669
    %v2841 = vpack.c.b16 %v2676, %v2673
    %v2842 = vpack.c.b16 %v2677, %v2674
    %v2843 = vpack.c.b16 %v2678, %v2675
    %v2844 = vpack.c.b16 %v2682, %v2679
    %v2845 = vpack.c.b16 %v2683, %v2680
    %v2846 = vpack.c.b16 %v2684, %v2681
    %v2847 = vpack.c.b16 %v2688, %v2685
    %v2848 = vpack.c.b16 %v2689, %v2686
    %v2849 = vpack.c.b16 %v2690, %v2687
    %v2850 = vpack.c.b16 %v2694, %v2691
    %v2851 = vpack.c.b16 %v2695, %v2692
    %v2852 = vpack.c.b16 %v2696, %v2693
    %v2853 = vpack.c.b16 %v2700, %v2697
    %v2854 = vpack.c.b16 %v2701, %v2698
    %v2855 = vpack.c.b16 %v2702, %v2699
    %v2856 = vpack.c.b16 %v2706, %v2703
    %v2857 = vpack.c.b16 %v2707, %v2704
    %v2858 = vpack.c.b16 %v2708, %v2705
    %v2859 = vpack.c.b16 %v2712, %v2709
    %v2860 = vpack.c.b16 %v2713, %v2710
    %v2861 = vpack.c.b16 %v2714, %v2711
    %v2862 = vpack.c.b16 %v2718, %v2715
    %v2863 = vpack.c.b16 %v2719, %v2716
    %v2864 = vpack.c.b16 %v2720, %v2717
    %v2865 = vpack.c.b16 %v2724, %v2721
    %v2866 = vpack.c.b16 %v2725, %v2722
    %v2867 = vpack.c.b16 %v2726, %v2723
    %v2868 = vpack.c.b16 %v2730, %v2727
    %v2869 = vpack.c.b16 %v2731, %v2728
    %v2870 = vpack.c.b16 %v2732, %v2729
    %v2871 = vpack.c.b16 %v2736, %v2733
    %v2872 = vpack.c.b16 %v2737, %v2734
    %v2873 = vpack.c.b16 %v2738, %v2735
    %v2874 = vpack.c.b16 %v2742, %v2739
    %v2875 = vpack.c.b16 %v2743, %v2740
    %v2876 = vpack.c.b16 %v2744, %v2741
    %v2877 = vpack.c.b16 %v2748, %v2745
    %v2878 = vpack.c.b16 %v2749, %v2746
    %v2879 = vpack.c.b16 %v2750, %v2747
    %v2880 = vpack.c.b16 %v2754, %v2751
    %v2881 = vpack.c.b16 %v2755, %v2752
    %v2882 = vpack.c.b16 %v2756, %v2753
    %v2883 = vpack.c.b16 %v2760, %v2757
    %v2884 = vpack.c.b16 %v2761, %v2758
    %v2885 = vpack.c.b16 %v2762, %v2759
    %v2886 = vpack.c.b16 %v2766, %v2763
    %v2887 = vpack.c.b16 %v2767, %v2764
    %v2888 = vpack.c.b16 %v2768, %v2765
    %v2889 = vpack.c.b16 %v2772, %v2769
    %v2890 = vpack.c.b16 %v2773, %v2770
    %v2891 = vpack.c.b16 %v2774, %v2771
    %v2892 = vpack.c.b16 %v2778, %v2775
    %v2893 = vpack.c.b16 %v2779, %v2776
    %v2894 = vpack.c.b16 %v2780, %v2777
    %v2895 = vpack.c.b16 %v2784, %v2781
    %v2896 = vpack.c.b16 %v2785, %v2782
    %v2897 = vpack.c.b16 %v2786, %v2783
    %v2898 = vpack.c.b16 %v2790, %v2787
    %v2899 = vpack.c.b16 %v2791, %v2788
    %v2900 = vpack.c.b16 %v2792, %v2789
    %v2901 = vpack.c.b16 %v2796, %v2793
    %v2902 = vpack.c.b16 %v2797, %v2794
    %v2903 = vpack.c.b16 %v2798, %v2795
    %v2904 = vpack.c.b16 %v2802, %v2799
    %v2905 = vpack.c.b16 %v2803, %v2800
    %v2906 = vpack.c.b16 %v2804, %v2801
    %v2907 = vpack.c.b16 %v2808, %v2805
    %v2908 = vpack.c.b16 %v2809, %v2806
    %v2909 = vpack.c.b16 %v2810, %v2807
    %v2910 = vpack.c.b16 %v2814, %v2811
    %v2911 = vpack.c.b16 %v2815, %v2812
    %v2912 = vpack.c.b16 %v2816, %v2813
    %3009 = vmatprep.subr.bf16.mxu0 %v2818
    %3010 = vmatpush1.bf16.msra.mxu0 %v2817
    %3011 = vmatprep.subr.bf16.mxu0 %v2821
    %3012 = vmatpush1.bf16.msra.mxu0 %v2820
    %3013 = vmatprep.subr.bf16.mxu0 %v2824
    %3014 = vmatpush1.bf16.msra.mxu0 %v2823
    %3015 = vmatprep.subr.bf16.mxu0 %v2827
    %3016 = vmatpush1.bf16.msra.mxu0 %v2826
    %3017 = vmatprep.subr.bf16.mxu0 %v2830
    %3018 = vmatpush1.bf16.msra.mxu0 %v2829
    %3019 = vmatprep.subr.bf16.mxu0 %v2833
    %3020 = vmatpush1.bf16.msra.mxu0 %v2832
    %3021 = vmatprep.subr.bf16.mxu0 %v2836
    %3022 = vmatpush1.bf16.msra.mxu0 %v2835
    %3023 = vmatprep.subr.bf16.mxu0 %v2839
    %3024 = vmatpush1.bf16.msra.mxu0 %v2838
    %3025 = vmatprep.subr.bf16.mxu0 %v2842
    %3026 = vmatpush1.bf16.msra.mxu0 %v2841
    %3027 = vmatprep.subr.bf16.mxu0 %v2845
    %3028 = vmatpush1.bf16.msra.mxu0 %v2844
    %3029 = vmatprep.subr.bf16.mxu0 %v2848
    %3030 = vmatpush1.bf16.msra.mxu0 %v2847
    %3031 = vmatprep.subr.bf16.mxu0 %v2851
    %3032 = vmatpush1.bf16.msra.mxu0 %v2850
    %3033 = vmatprep.subr.bf16.mxu0 %v2854
    %3034 = vmatpush1.bf16.msra.mxu0 %v2853
    %3035 = vmatprep.subr.bf16.mxu0 %v2857
    %3036 = vmatpush1.bf16.msra.mxu0 %v2856
    %3037 = vmatprep.subr.bf16.mxu0 %v2860
    %3038 = vmatpush1.bf16.msra.mxu0 %v2859
    %3039 = vmatprep.subr.bf16.mxu0 %v2863
    %3040 = vmatpush1.bf16.msra.mxu0 %v2862
    %3041 = vmatprep.mubr.bf16.mxu0 %v2349
    %3042 = vmatmul.mubr.bf16.gmra.mrb[0].mxu0 %v2348
    %v3043 = vpop.f32.mrb[0].mxu0
    %v3044 = vadd.f32 %v2485, %v3043
    %v3045 = vpop.f32.mrb[0].mxu0
    %v3046 = vadd.f32 %v2489, %v3045
    %v3047 = vpop.f32.mrb[0].mxu0
    %v3048 = vpop.f32.mrb[0].mxu0
    %3049 = vdwg.mxu0
    %3050 = vmatprep.subr.bf16.mxu0 %v2866
    %3051 = vmatpush1.bf16.msra.mxu0 %v2865
    %3052 = vmatprep.subr.bf16.mxu0 %v2869
    %3053 = vmatpush1.bf16.msra.mxu0 %v2868
    %3054 = vmatprep.subr.bf16.mxu0 %v2872
    %3055 = vmatpush1.bf16.msra.mxu0 %v2871
    %3056 = vmatprep.subr.bf16.mxu0 %v2875
    %3057 = vmatpush1.bf16.msra.mxu0 %v2874
    %3058 = vmatprep.subr.bf16.mxu0 %v2878
    %3059 = vmatpush1.bf16.msra.mxu0 %v2877
    %3060 = vmatprep.subr.bf16.mxu0 %v2881
    %3061 = vmatpush1.bf16.msra.mxu0 %v2880
    %3062 = vmatprep.subr.bf16.mxu0 %v2884
    %3063 = vmatpush1.bf16.msra.mxu0 %v2883
    %3064 = vmatprep.subr.bf16.mxu0 %v2887
    %3065 = vmatpush1.bf16.msra.mxu0 %v2886
    %3066 = vmatprep.subr.bf16.mxu0 %v2890
    %3067 = vmatpush1.bf16.msra.mxu0 %v2889
    %3068 = vmatprep.subr.bf16.mxu0 %v2893
    %3069 = vmatpush1.bf16.msra.mxu0 %v2892
    %3070 = vmatprep.subr.bf16.mxu0 %v2896
    %3071 = vmatpush1.bf16.msra.mxu0 %v2895
    %3072 = vmatprep.subr.bf16.mxu0 %v2899
    %3073 = vmatpush1.bf16.msra.mxu0 %v2898
    %3074 = vmatprep.subr.bf16.mxu0 %v2902
    %3075 = vmatpush1.bf16.msra.mxu0 %v2901
    %3076 = vmatprep.subr.bf16.mxu0 %v2905
    %3077 = vmatpush1.bf16.msra.mxu0 %v2904
    %3078 = vmatprep.subr.bf16.mxu0 %v2908
    %3079 = vmatpush1.bf16.msra.mxu0 %v2907
    %3080 = vmatprep.subr.bf16.mxu0 %v2911
    %3081 = vmatpush1.bf16.msra.mxu0 %v2910
    %3082 = vmatprep.mubr.bf16.mxu0 %v2351
    %3083 = vmatmul.mubr.bf16.gmra.mrb[0].mxu0 %v2350
    %v3084 = vpop.f32.mrb[0].mxu0
    %v3085 = vadd.f32 %v3044, %v3084
    %v3086 = vpop.f32.mrb[0].mxu0
    %v3087 = vadd.f32 %v3046, %v3086
    %v3088 = vpop.f32.mrb[0].mxu0
    %v3089 = vpop.f32.mrb[0].mxu0
    %3090 = vdwg.mxu0
    %3091 = vmatprep.subr.bf16.mxu0 0
    %3092 = vmatpush1.bf16.msra.mxu0 %v2819
    %3093 = vmatprep.subr.bf16.mxu0 0
    %3094 = vmatpush1.bf16.msra.mxu0 %v2822
    %3095 = vmatprep.subr.bf16.mxu0 0
    %3096 = vmatpush1.bf16.msra.mxu0 %v2825
    %3097 = vmatprep.subr.bf16.mxu0 0
    %3098 = vmatpush1.bf16.msra.mxu0 %v2828
    %3099 = vmatprep.subr.bf16.mxu0 0
    %3100 = vmatpush1.bf16.msra.mxu0 %v2831
    %3101 = vmatprep.subr.bf16.mxu0 0
    %3102 = vmatpush1.bf16.msra.mxu0 %v2834
    %3103 = vmatprep.subr.bf16.mxu0 0
    %3104 = vmatpush1.bf16.msra.mxu0 %v2837
    %3105 = vmatprep.subr.bf16.mxu0 0
    %3106 = vmatpush1.bf16.msra.mxu0 %v2840
    %3107 = vmatprep.subr.bf16.mxu0 0
    %3108 = vmatpush1.bf16.msra.mxu0 %v2843
    %3109 = vmatprep.subr.bf16.mxu0 0
    %3110 = vmatpush1.bf16.msra.mxu0 %v2846
    %3111 = vmatprep.subr.bf16.mxu0 0
    %3112 = vmatpush1.bf16.msra.mxu0 %v2849
    %3113 = vmatprep.subr.bf16.mxu0 0
    %3114 = vmatpush1.bf16.msra.mxu0 %v2852
    %3115 = vmatprep.subr.bf16.mxu0 0
    %3116 = vmatpush1.bf16.msra.mxu0 %v2855
    %3117 = vmatprep.subr.bf16.mxu0 0
    %3118 = vmatpush1.bf16.msra.mxu0 %v2858
    %3119 = vmatprep.subr.bf16.mxu0 0
    %3120 = vmatpush1.bf16.msra.mxu0 %v2861
    %3121 = vmatprep.subr.bf16.mxu0 0
    %3122 = vmatpush1.bf16.msra.mxu0 %v2864
    %3123 = vmatprep.mubr.bf16.mxu0 %v2349
    %3124 = vmatmul.mubr.bf16.gmra.mrb[0].mxu0 %v2348
    %v3125 = vpop.f32.mrb[0].mxu0
    %v3126 = vadd.f32 %v2493, %v3125
    %v3127 = vpop.f32.mrb[0].mxu0
    %v3128 = vpop.f32.mrb[0].mxu0
    %v3129 = vpop.f32.mrb[0].mxu0
    %3130 = vdwg.mxu0
    %3131 = vmatprep.subr.bf16.mxu0 0
    %3132 = vmatpush1.bf16.msra.mxu0 %v2867
    %3133 = vmatprep.subr.bf16.mxu0 0
    %3134 = vmatpush1.bf16.msra.mxu0 %v2870
    %3135 = vmatprep.subr.bf16.mxu0 0
    %3136 = vmatpush1.bf16.msra.mxu0 %v2873
    %3137 = vmatprep.subr.bf16.mxu0 0
    %3138 = vmatpush1.bf16.msra.mxu0 %v2876
    %3139 = vmatprep.subr.bf16.mxu0 0
    %3140 = vmatpush1.bf16.msra.mxu0 %v2879
    %3141 = vmatprep.subr.bf16.mxu0 0
    %3142 = vmatpush1.bf16.msra.mxu0 %v2882
    %3143 = vmatprep.subr.bf16.mxu0 0
    %3144 = vmatpush1.bf16.msra.mxu0 %v2885
    %3145 = vmatprep.subr.bf16.mxu0 0
    %3146 = vmatpush1.bf16.msra.mxu0 %v2888
    %3147 = vmatprep.subr.bf16.mxu0 0
    %3148 = vmatpush1.bf16.msra.mxu0 %v2891
    %3149 = vmatprep.subr.bf16.mxu0 0
    %3150 = vmatpush1.bf16.msra.mxu0 %v2894
    %3151 = vmatprep.subr.bf16.mxu0 0
    %3152 = vmatpush1.bf16.msra.mxu0 %v2897
    %3153 = vmatprep.subr.bf16.mxu0 0
    %3154 = vmatpush1.bf16.msra.mxu0 %v2900
    %3155 = vmatprep.subr.bf16.mxu0 0
    %3156 = vmatpush1.bf16.msra.mxu0 %v2903
    %3157 = vmatprep.subr.bf16.mxu0 0
    %3158 = vmatpush1.bf16.msra.mxu0 %v2906
    %3159 = vmatprep.subr.bf16.mxu0 0
    %3160 = vmatpush1.bf16.msra.mxu0 %v2909
    %3161 = vmatprep.subr.bf16.mxu0 0
    %3162 = vmatpush1.bf16.msra.mxu0 %v2912
    %3163 = vmatprep.mubr.bf16.mxu0 %v2351
    %3164 = vmatmul.mubr.bf16.gmra.mrb[0].mxu0 %v2350
    %v3165 = vpop.f32.mrb[0].mxu0
    %v3166 = vadd.f32 %v3126, %v3165
    %v3167 = vpop.f32.mrb[0].mxu0
    %v3168 = vpop.f32.mrb[0].mxu0
    %v3169 = vpop.f32.mrb[0].mxu0
    %3170 = vdwg.mxu0
    %v3171 = vmax.f32 %v3085, 0.0
    %v3172 = vmax.f32 %v3087, 0.0
    %v3173 = vmax.f32 %v3166, 0.0
    %v3174 = vpack.c.bf16 %v3171, %v3171
    %v3175 = vpack.c.bf16 %v3172, %v3172
    %v3176 = vpack.c.bf16 %v3173, %v3173
    %v3177 = vld [vmem:[#allocation10] sm:$0xff]
    %v3178 = vld [vmem:[#allocation10 + $0x8] sm:$0xff]
    %v3179 = vld [vmem:[#allocation10 + $0x10] sm:$0xff]
    %v3180 = vld [vmem:[#allocation10 + $0x18] sm:$0xff]
    %v3181 = vld [vmem:[#allocation10 + $0x20] sm:$0xff]
    %v3182 = vld [vmem:[#allocation10 + $0x28] sm:$0xff]
    %v3183 = vld [vmem:[#allocation10 + $0x30] sm:$0xff]
    %v3184 = vld [vmem:[#allocation10 + $0x38] sm:$0xff]
    %v3185 = vld [vmem:[#allocation10 + $0x40] sm:$0xff]
    %v3186 = vld [vmem:[#allocation10 + $0x48] sm:$0xff]
    %v3187 = vld [vmem:[#allocation10 + $0x50] sm:$0xff]
    %v3188 = vld [vmem:[#allocation10 + $0x58] sm:$0xff]
    %v3189 = vld [vmem:[#allocation10 + $0x60] sm:$0xff]
    %v3190 = vld [vmem:[#allocation10 + $0x68] sm:$0xff]
    %v3191 = vld [vmem:[#allocation10 + $0x70] sm:$0xff]
    %v3192 = vld [vmem:[#allocation10 + $0x78] sm:$0xff]
    %v3193 = vld [vmem:[#allocation10 + $0x80] sm:$0xff]
    %v3194 = vld [vmem:[#allocation10 + $0x88] sm:$0xff]
    %v3195 = vld [vmem:[#allocation10 + $0x90] sm:$0xff]
    %v3196 = vld [vmem:[#allocation10 + $0x98] sm:$0xff]
    %v3197 = vld [vmem:[#allocation10 + $0xa0] sm:$0xff]
    %v3198 = vld [vmem:[#allocation10 + $0xa8] sm:$0xff]
    %v3199 = vld [vmem:[#allocation10 + $0xb0] sm:$0xff]
    %v3200 = vld [vmem:[#allocation10 + $0xb8] sm:$0xff]
    %v3201 = vld [vmem:[#allocation10 + $0xc0] sm:$0xff]
    %v3202 = vld [vmem:[#allocation10 + $0xc8] sm:$0xff]
    %v3203 = vld [vmem:[#allocation10 + $0xd0] sm:$0xff]
    %v3204 = vld [vmem:[#allocation10 + $0xd8] sm:$0xff]
    %v3205 = vld [vmem:[#allocation10 + $0xe0] sm:$0xff]
    %v3206 = vld [vmem:[#allocation10 + $0xe8] sm:$0xff]
    %v3207 = vld [vmem:[#allocation10 + $0xf0] sm:$0xff]
    %v3208 = vld [vmem:[#allocation10 + $0xf8] sm:$0xff]
    %v3209 = vld [vmem:[#allocation10 + $0x100] sm:$0xff]
    %v3210 = vld [vmem:[#allocation10 + $0x108] sm:$0xff]
    %v3211 = vld [vmem:[#allocation10 + $0x110] sm:$0xff]
    %v3212 = vld [vmem:[#allocation10 + $0x118] sm:$0xff]
    %v3213 = vld [vmem:[#allocation10 + $0x120] sm:$0xff]
    %v3214 = vld [vmem:[#allocation10 + $0x128] sm:$0xff]
    %v3215 = vld [vmem:[#allocation10 + $0x130] sm:$0xff]
    %v3216 = vld [vmem:[#allocation10 + $0x138] sm:$0xff]
    %v3217 = vld [vmem:[#allocation10 + $0x140] sm:$0xff]
    %v3218 = vld [vmem:[#allocation10 + $0x148] sm:$0xff]
    %v3219 = vld [vmem:[#allocation10 + $0x150] sm:$0xff]
    %v3220 = vld [vmem:[#allocation10 + $0x158] sm:$0xff]
    %v3221 = vld [vmem:[#allocation10 + $0x160] sm:$0xff]
    %v3222 = vld [vmem:[#allocation10 + $0x168] sm:$0xff]
    %v3223 = vld [vmem:[#allocation10 + $0x170] sm:$0xff]
    %v3224 = vld [vmem:[#allocation10 + $0x178] sm:$0xff]
    %v3225 = vld [vmem:[%s12] sm:$0x3]
    %v3227 = vlaneseq
    %v3228 = vshrl.u32 %v3227, 7
    %v3229 = vsub.s32 0, %v3228
    %v3230 = vrot.slane %v3225, %v3229
    %v3231 = vlaneseq
    %v3232 = vshrl.u32 %v3231, 7
    %v3233 = vsub.s32 1, %v3232
    %v3234 = vrot.slane %v3225, %v3233
    %v3285 = vunpack.c.l.b16 %v3177
    %v3286 = vunpack.c.h.b16 %v3177
    %v3287 = vunpack.c.l.b16 %v3178
    %v3288 = vunpack.c.h.b16 %v3178
    %v3289 = vunpack.c.l.b16 %v3179
    %v3290 = vunpack.c.h.b16 %v3179
    %v3291 = vunpack.c.l.b16 %v3180
    %v3292 = vunpack.c.h.b16 %v3180
    %v3293 = vunpack.c.l.b16 %v3181
    %v3294 = vunpack.c.h.b16 %v3181
    %v3295 = vunpack.c.l.b16 %v3182
    %v3296 = vunpack.c.h.b16 %v3182
    %v3297 = vunpack.c.l.b16 %v3183
    %v3298 = vunpack.c.h.b16 %v3183
    %v3299 = vunpack.c.l.b16 %v3184
    %v3300 = vunpack.c.h.b16 %v3184
    %v3301 = vunpack.c.l.b16 %v3185
    %v3302 = vunpack.c.h.b16 %v3185
    %v3303 = vunpack.c.l.b16 %v3186
    %v3304 = vunpack.c.h.b16 %v3186
    %v3305 = vunpack.c.l.b16 %v3187
    %v3306 = vunpack.c.h.b16 %v3187
    %v3307 = vunpack.c.l.b16 %v3188
    %v3308 = vunpack.c.h.b16 %v3188
    %v3309 = vunpack.c.l.b16 %v3189
    %v3310 = vunpack.c.h.b16 %v3189
    %v3311 = vunpack.c.l.b16 %v3190
    %v3312 = vunpack.c.h.b16 %v3190
    %v3313 = vunpack.c.l.b16 %v3191
    %v3314 = vunpack.c.h.b16 %v3191
    %v3315 = vunpack.c.l.b16 %v3192
    %v3316 = vunpack.c.h.b16 %v3192
    %v3317 = vunpack.c.l.b16 %v3193
    %v3318 = vunpack.c.h.b16 %v3193
    %v3319 = vunpack.c.l.b16 %v3194
    %v3320 = vunpack.c.h.b16 %v3194
    %v3321 = vunpack.c.l.b16 %v3195
    %v3322 = vunpack.c.h.b16 %v3195
    %v3323 = vunpack.c.l.b16 %v3196
    %v3324 = vunpack.c.h.b16 %v3196
    %v3325 = vunpack.c.l.b16 %v3197
    %v3326 = vunpack.c.h.b16 %v3197
    %v3327 = vunpack.c.l.b16 %v3198
    %v3328 = vunpack.c.h.b16 %v3198
    %v3329 = vunpack.c.l.b16 %v3199
    %v3330 = vunpack.c.h.b16 %v3199
    %v3331 = vunpack.c.l.b16 %v3200
    %v3332 = vunpack.c.h.b16 %v3200
    %v3333 = vunpack.c.l.b16 %v3201
    %v3334 = vunpack.c.h.b16 %v3201
    %v3335 = vunpack.c.l.b16 %v3202
    %v3336 = vunpack.c.h.b16 %v3202
    %v3337 = vunpack.c.l.b16 %v3203
    %v3338 = vunpack.c.h.b16 %v3203
    %v3339 = vunpack.c.l.b16 %v3204
    %v3340 = vunpack.c.h.b16 %v3204
    %v3341 = vunpack.c.l.b16 %v3205
    %v3342 = vunpack.c.h.b16 %v3205
    %v3343 = vunpack.c.l.b16 %v3206
    %v3344 = vunpack.c.h.b16 %v3206
    %v3345 = vunpack.c.l.b16 %v3207
    %v3346 = vunpack.c.h.b16 %v3207
    %v3347 = vunpack.c.l.b16 %v3208
    %v3348 = vunpack.c.h.b16 %v3208
    %v3349 = vunpack.c.l.b16 %v3209
    %v3350 = vunpack.c.h.b16 %v3209
    %v3351 = vunpack.c.l.b16 %v3210
    %v3352 = vunpack.c.h.b16 %v3210
    %v3353 = vunpack.c.l.b16 %v3211
    %v3354 = vunpack.c.h.b16 %v3211
    %v3355 = vunpack.c.l.b16 %v3212
    %v3356 = vunpack.c.h.b16 %v3212
    %v3357 = vunpack.c.l.b16 %v3213
    %v3358 = vunpack.c.h.b16 %v3213
    %v3359 = vunpack.c.l.b16 %v3214
    %v3360 = vunpack.c.h.b16 %v3214
    %v3361 = vunpack.c.l.b16 %v3215
    %v3362 = vunpack.c.h.b16 %v3215
    %v3363 = vunpack.c.l.b16 %v3216
    %v3364 = vunpack.c.h.b16 %v3216
    %v3365 = vunpack.c.l.b16 %v3217
    %v3366 = vunpack.c.h.b16 %v3217
    %v3367 = vunpack.c.l.b16 %v3218
    %v3368 = vunpack.c.h.b16 %v3218
    %v3369 = vunpack.c.l.b16 %v3219
    %v3370 = vunpack.c.h.b16 %v3219
    %v3371 = vunpack.c.l.b16 %v3220
    %v3372 = vunpack.c.h.b16 %v3220
    %v3373 = vunpack.c.l.b16 %v3221
    %v3374 = vunpack.c.h.b16 %v3221
    %v3375 = vunpack.c.l.b16 %v3222
    %v3376 = vunpack.c.h.b16 %v3222
    %v3377 = vunpack.c.l.b16 %v3223
    %v3378 = vunpack.c.h.b16 %v3223
    %v3379 = vunpack.c.l.b16 %v3224
    %v3380 = vunpack.c.h.b16 %v3224
    %v3381 = vpack.c.b16 %v3287, %v3285
    %v3382 = vpack.c.b16 %v3288, %v3286
    %v3383 = vpack.c.b16 %v3291, %v3289
    %v3384 = vpack.c.b16 %v3292, %v3290
    %v3385 = vpack.c.b16 %v3295, %v3293
    %v3386 = vpack.c.b16 %v3296, %v3294
    %v3387 = vpack.c.b16 %v3299, %v3297
    %v3388 = vpack.c.b16 %v3300, %v3298
    %v3389 = vpack.c.b16 %v3303, %v3301
    %v3390 = vpack.c.b16 %v3304, %v3302
    %v3391 = vpack.c.b16 %v3307, %v3305
    %v3392 = vpack.c.b16 %v3308, %v3306
    %v3393 = vpack.c.b16 %v3311, %v3309
    %v3394 = vpack.c.b16 %v3312, %v3310
    %v3395 = vpack.c.b16 %v3315, %v3313
    %v3396 = vpack.c.b16 %v3316, %v3314
    %v3397 = vpack.c.b16 %v3319, %v3317
    %v3398 = vpack.c.b16 %v3320, %v3318
    %v3399 = vpack.c.b16 %v3323, %v3321
    %v3400 = vpack.c.b16 %v3324, %v3322
    %v3401 = vpack.c.b16 %v3327, %v3325
    %v3402 = vpack.c.b16 %v3328, %v3326
    %v3403 = vpack.c.b16 %v3331, %v3329
    %v3404 = vpack.c.b16 %v3332, %v3330
    %v3405 = vpack.c.b16 %v3335, %v3333
    %v3406 = vpack.c.b16 %v3336, %v3334
    %v3407 = vpack.c.b16 %v3339, %v3337
    %v3408 = vpack.c.b16 %v3340, %v3338
    %v3409 = vpack.c.b16 %v3343, %v3341
    %v3410 = vpack.c.b16 %v3344, %v3342
    %v3411 = vpack.c.b16 %v3347, %v3345
    %v3412 = vpack.c.b16 %v3348, %v3346
    %v3413 = vpack.c.b16 %v3351, %v3349
    %v3414 = vpack.c.b16 %v3352, %v3350
    %v3415 = vpack.c.b16 %v3355, %v3353
    %v3416 = vpack.c.b16 %v3356, %v3354
    %v3417 = vpack.c.b16 %v3359, %v3357
    %v3418 = vpack.c.b16 %v3360, %v3358
    %v3419 = vpack.c.b16 %v3363, %v3361
    %v3420 = vpack.c.b16 %v3364, %v3362
    %v3421 = vpack.c.b16 %v3367, %v3365
    %v3422 = vpack.c.b16 %v3368, %v3366
    %v3423 = vpack.c.b16 %v3371, %v3369
    %v3424 = vpack.c.b16 %v3372, %v3370
    %v3425 = vpack.c.b16 %v3375, %v3373
    %v3426 = vpack.c.b16 %v3376, %v3374
    %v3427 = vpack.c.b16 %v3379, %v3377
    %v3428 = vpack.c.b16 %v3380, %v3378
    %3477 = vmatprep.subr.bf16.mxu0 %v3382
    %3478 = vmatpush1.bf16.msra.mxu0 %v3381
    %3479 = vmatprep.subr.bf16.mxu0 %v3384
    %3480 = vmatpush1.bf16.msra.mxu0 %v3383
    %3481 = vmatprep.subr.bf16.mxu0 %v3386
    %3482 = vmatpush1.bf16.msra.mxu0 %v3385
    %3483 = vmatprep.subr.bf16.mxu0 %v3388
    %3484 = vmatpush1.bf16.msra.mxu0 %v3387
    %3485 = vmatprep.subr.bf16.mxu0 %v3390
    %3486 = vmatpush1.bf16.msra.mxu0 %v3389
    %3487 = vmatprep.subr.bf16.mxu0 %v3392
    %3488 = vmatpush1.bf16.msra.mxu0 %v3391
    %3489 = vmatprep.subr.bf16.mxu0 %v3394
    %3490 = vmatpush1.bf16.msra.mxu0 %v3393
    %3491 = vmatprep.subr.bf16.mxu0 %v3396
    %3492 = vmatpush1.bf16.msra.mxu0 %v3395
    %3493 = vmatprep.subr.bf16.mxu0 %v3398
    %3494 = vmatpush1.bf16.msra.mxu0 %v3397
    %3495 = vmatprep.subr.bf16.mxu0 %v3400
    %3496 = vmatpush1.bf16.msra.mxu0 %v3399
    %3497 = vmatprep.subr.bf16.mxu0 %v3402
    %3498 = vmatpush1.bf16.msra.mxu0 %v3401
    %3499 = vmatprep.subr.bf16.mxu0 %v3404
    %3500 = vmatpush1.bf16.msra.mxu0 %v3403
    %3501 = vmatprep.subr.bf16.mxu0 %v3406
    %3502 = vmatpush1.bf16.msra.mxu0 %v3405
    %3503 = vmatprep.subr.bf16.mxu0 %v3408
    %3504 = vmatpush1.bf16.msra.mxu0 %v3407
    %3505 = vmatprep.subr.bf16.mxu0 %v3410
    %3506 = vmatpush1.bf16.msra.mxu0 %v3409
    %3507 = vmatprep.subr.bf16.mxu0 %v3412
    %3508 = vmatpush1.bf16.msra.mxu0 %v3411
    %3509 = vmatprep.mubr.bf16.mxu0 %v3175
    %3510 = vmatmul.mubr.bf16.gmra.mrb[0].mxu0 %v3174
    %v3511 = vpop.f32.mrb[0].mxu0
    %v3512 = vadd.f32 %v3230, %v3511
    %v3513 = vpop.f32.mrb[0].mxu0
    %v3514 = vadd.f32 %v3234, %v3513
    %v3515 = vpop.f32.mrb[0].mxu0
    %v3516 = vpop.f32.mrb[0].mxu0
    %3517 = vdwg.mxu0
    %3518 = vmatprep.subr.bf16.mxu0 %v3414
    %3519 = vmatpush1.bf16.msra.mxu0 %v3413
    %3520 = vmatprep.subr.bf16.mxu0 %v3416
    %3521 = vmatpush1.bf16.msra.mxu0 %v3415
    %3522 = vmatprep.subr.bf16.mxu0 %v3418
    %3523 = vmatpush1.bf16.msra.mxu0 %v3417
    %3524 = vmatprep.subr.bf16.mxu0 %v3420
    %3525 = vmatpush1.bf16.msra.mxu0 %v3419
    %3526 = vmatprep.subr.bf16.mxu0 %v3422
    %3527 = vmatpush1.bf16.msra.mxu0 %v3421
    %3528 = vmatprep.subr.bf16.mxu0 %v3424
    %3529 = vmatpush1.bf16.msra.mxu0 %v3423
    %3530 = vmatprep.subr.bf16.mxu0 %v3426
    %3531 = vmatpush1.bf16.msra.mxu0 %v3425
    %3532 = vmatprep.subr.bf16.mxu0 %v3428
    %3533 = vmatpush1.bf16.msra.mxu0 %v3427
    %3534 = vmatprep.subr.bf16.mxu0 0
    %3535 = vmatpush1.bf16.msra.mxu0 0
    %3536 = vmatprep.subr.bf16.mxu0 0
    %3537 = vmatpush1.bf16.msra.mxu0 0
    %3538 = vmatprep.subr.bf16.mxu0 0
    %3539 = vmatpush1.bf16.msra.mxu0 0
    %3540 = vmatprep.subr.bf16.mxu0 0
    %3541 = vmatpush1.bf16.msra.mxu0 0
    %3542 = vmatprep.subr.bf16.mxu0 0
    %3543 = vmatpush1.bf16.msra.mxu0 0
    %3544 = vmatprep.subr.bf16.mxu0 0
    %3545 = vmatpush1.bf16.msra.mxu0 0
    %3546 = vmatprep.subr.bf16.mxu0 0
    %3547 = vmatpush1.bf16.msra.mxu0 0
    %3548 = vmatprep.subr.bf16.mxu0 0
    %3549 = vmatpush1.bf16.msra.mxu0 0
    %3550 = vmatprep.mubr.bf16.mxu0 0
    %3551 = vmatmul.mubr.bf16.gmra.mrb[0].mxu0 %v3176
    %v3552 = vpop.f32.mrb[0].mxu0
    %v3553 = vadd.f32 %v3512, %v3552
    %v3554 = vpop.f32.mrb[0].mxu0
    %v3555 = vadd.f32 %v3514, %v3554
    %v3556 = vpop.f32.mrb[0].mxu0
    %v3557 = vpop.f32.mrb[0].mxu0
    %3558 = vdwg.mxu0
    %v3559 = vmax.f32 %v3553, 0.0
    %v3560 = vmax.f32 %v3555, 0.0
    %v3561 = vpack.c.bf16 %v3559, %v3559
    %v3562 = vpack.c.bf16 %v3560, %v3560
    %v3563 = vld [vmem:[#allocation12] sm:$0xf]
    %v3564 = vld [vmem:[#allocation12 + $0x4] sm:$0xf]
    %v3565 = vld [vmem:[#allocation12 + $0x8] sm:$0xf]
    %v3566 = vld [vmem:[#allocation12 + $0xc] sm:$0xf]
    %v3567 = vld [vmem:[#allocation12 + $0x10] sm:$0xf]
    %v3568 = vld [vmem:[#allocation12 + $0x14] sm:$0xf]
    %v3569 = vld [vmem:[#allocation12 + $0x18] sm:$0xf]
    %v3570 = vld [vmem:[#allocation12 + $0x1c] sm:$0xf]
    %v3571 = vld [vmem:[#allocation12 + $0x20] sm:$0xf]
    %v3572 = vld [vmem:[#allocation12 + $0x24] sm:$0xf]
    %v3573 = vld [vmem:[#allocation12 + $0x28] sm:$0xf]
    %v3574 = vld [vmem:[#allocation12 + $0x2c] sm:$0xf]
    %v3575 = vld [vmem:[#allocation12 + $0x30] sm:$0xf]
    %v3576 = vld [vmem:[#allocation12 + $0x34] sm:$0xf]
    %v3577 = vld [vmem:[#allocation12 + $0x38] sm:$0xf]
    %v3578 = vld [vmem:[#allocation12 + $0x3c] sm:$0xf]
    %v3579 = vld [vmem:[#allocation12 + $0x40] sm:$0xf]
    %v3580 = vld [vmem:[#allocation12 + $0x44] sm:$0xf]
    %v3581 = vld [vmem:[#allocation12 + $0x48] sm:$0xf]
    %v3582 = vld [vmem:[#allocation12 + $0x4c] sm:$0xf]
    %v3583 = vld [vmem:[#allocation12 + $0x50] sm:$0xf]
    %v3584 = vld [vmem:[#allocation12 + $0x54] sm:$0xf]
    %v3585 = vld [vmem:[#allocation12 + $0x58] sm:$0xf]
    %v3586 = vld [vmem:[#allocation12 + $0x5c] sm:$0xf]
    %v3587 = vld [vmem:[#allocation12 + $0x60] sm:$0xf]
    %v3588 = vld [vmem:[#allocation12 + $0x64] sm:$0xf]
    %v3589 = vld [vmem:[#allocation12 + $0x68] sm:$0xf]
    %v3590 = vld [vmem:[#allocation12 + $0x6c] sm:$0xf]
    %v3591 = vld [vmem:[#allocation12 + $0x70] sm:$0xf]
    %v3592 = vld [vmem:[#allocation12 + $0x74] sm:$0xf]
    %v3593 = vld [vmem:[#allocation12 + $0x78] sm:$0xf]
    %v3594 = vld [vmem:[#allocation12 + $0x7c] sm:$0xf]
    %v3595 = vld [vmem:[%s14] sm:$0x1]
    %v3597 = vlaneseq
    %v3598 = vshrl.u32 %v3597, 7
    %v3599 = vsub.s32 0, %v3598
    %v3600 = vrot.slane %v3595, %v3599
    %v3634 = vunpack.c.l.b16 %v3563
    %v3635 = vunpack.c.l.b16 %v3564
    %v3636 = vunpack.c.l.b16 %v3565
    %v3637 = vunpack.c.l.b16 %v3566
    %v3638 = vunpack.c.l.b16 %v3567
    %v3639 = vunpack.c.l.b16 %v3568
    %v3640 = vunpack.c.l.b16 %v3569
    %v3641 = vunpack.c.l.b16 %v3570
    %v3642 = vunpack.c.l.b16 %v3571
    %v3643 = vunpack.c.l.b16 %v3572
    %v3644 = vunpack.c.l.b16 %v3573
    %v3645 = vunpack.c.l.b16 %v3574
    %v3646 = vunpack.c.l.b16 %v3575
    %v3647 = vunpack.c.l.b16 %v3576
    %v3648 = vunpack.c.l.b16 %v3577
    %v3649 = vunpack.c.l.b16 %v3578
    %v3650 = vunpack.c.l.b16 %v3579
    %v3651 = vunpack.c.l.b16 %v3580
    %v3652 = vunpack.c.l.b16 %v3581
    %v3653 = vunpack.c.l.b16 %v3582
    %v3654 = vunpack.c.l.b16 %v3583
    %v3655 = vunpack.c.l.b16 %v3584
    %v3656 = vunpack.c.l.b16 %v3585
    %v3657 = vunpack.c.l.b16 %v3586
    %v3658 = vunpack.c.l.b16 %v3587
    %v3659 = vunpack.c.l.b16 %v3588
    %v3660 = vunpack.c.l.b16 %v3589
    %v3661 = vunpack.c.l.b16 %v3590
    %v3662 = vunpack.c.l.b16 %v3591
    %v3663 = vunpack.c.l.b16 %v3592
    %v3664 = vunpack.c.l.b16 %v3593
    %v3665 = vunpack.c.l.b16 %v3594
    %v3666 = vpack.c.b16 %v3635, %v3634
    %v3667 = vpack.c.b16 %v3637, %v3636
    %v3668 = vpack.c.b16 %v3639, %v3638
    %v3669 = vpack.c.b16 %v3641, %v3640
    %v3670 = vpack.c.b16 %v3643, %v3642
    %v3671 = vpack.c.b16 %v3645, %v3644
    %v3672 = vpack.c.b16 %v3647, %v3646
    %v3673 = vpack.c.b16 %v3649, %v3648
    %v3674 = vpack.c.b16 %v3651, %v3650
    %v3675 = vpack.c.b16 %v3653, %v3652
    %v3676 = vpack.c.b16 %v3655, %v3654
    %v3677 = vpack.c.b16 %v3657, %v3656
    %v3678 = vpack.c.b16 %v3659, %v3658
    %v3679 = vpack.c.b16 %v3661, %v3660
    %v3680 = vpack.c.b16 %v3663, %v3662
    %v3681 = vpack.c.b16 %v3665, %v3664
    %3698 = vmatprep.subr.bf16.mxu0 0
    %3699 = vmatpush1.bf16.msra.mxu0 %v3666
    %3700 = vmatprep.subr.bf16.mxu0 0
    %3701 = vmatpush1.bf16.msra.mxu0 %v3667
    %3702 = vmatprep.subr.bf16.mxu0 0
    %3703 = vmatpush1.bf16.msra.mxu0 %v3668
    %3704 = vmatprep.subr.bf16.mxu0 0
    %3705 = vmatpush1.bf16.msra.mxu0 %v3669
    %3706 = vmatprep.subr.bf16.mxu0 0
    %3707 = vmatpush1.bf16.msra.mxu0 %v3670
    %3708 = vmatprep.subr.bf16.mxu0 0
    %3709 = vmatpush1.bf16.msra.mxu0 %v3671
    %3710 = vmatprep.subr.bf16.mxu0 0
    %3711 = vmatpush1.bf16.msra.mxu0 %v3672
    %3712 = vmatprep.subr.bf16.mxu0 0
    %3713 = vmatpush1.bf16.msra.mxu0 %v3673
    %3714 = vmatprep.subr.bf16.mxu0 0
    %3715 = vmatpush1.bf16.msra.mxu0 %v3674
    %3716 = vmatprep.subr.bf16.mxu0 0
    %3717 = vmatpush1.bf16.msra.mxu0 %v3675
    %3718 = vmatprep.subr.bf16.mxu0 0
    %3719 = vmatpush1.bf16.msra.mxu0 %v3676
    %3720 = vmatprep.subr.bf16.mxu0 0
    %3721 = vmatpush1.bf16.msra.mxu0 %v3677
    %3722 = vmatprep.subr.bf16.mxu0 0
    %3723 = vmatpush1.bf16.msra.mxu0 %v3678
    %3724 = vmatprep.subr.bf16.mxu0 0
    %3725 = vmatpush1.bf16.msra.mxu0 %v3679
    %3726 = vmatprep.subr.bf16.mxu0 0
    %3727 = vmatpush1.bf16.msra.mxu0 %v3680
    %3728 = vmatprep.subr.bf16.mxu0 0
    %3729 = vmatpush1.bf16.msra.mxu0 %v3681
    %3730 = vmatprep.mubr.bf16.mxu0 %v3562
    %3731 = vmatmul.mubr.bf16.gmra.mrb[0].mxu0 %v3561
    %v3732 = vpop.f32.mrb[0].mxu0
    %v3733 = vadd.f32 %v3600, %v3732
    %v3734 = vpop.f32.mrb[0].mxu0
    %v3735 = vpop.f32.mrb[0].mxu0
    %v3736 = vpop.f32.mrb[0].mxu0
    %3737 = vdwg.mxu0
    %vm3738 = vcmask 15360
    %3739 = vst.msk [vmem:[%s15] sm:$0xff] %vm3738, %v3733
    // Predicated region
    $region90: #{tpu_custom_call.1} parent=1 // pred_check
      _
    $region91: #{tpu_custom_call.1} parent=1 // pred_check_branch
      %3741 = sbr.rel (0) target = $region93
    $region92: #{tpu_custom_call.1} parent=1 // pred_region
      _
    $region93: #{tpu_custom_call.1} parent=1 // pred_fallthru
      _
    // Predicated region
    $region94: #{tpu_custom_call.1} parent=1 // pred_check
      _
    $region95: #{tpu_custom_call.1} parent=1 // pred_check_branch
      %3743 = sbr.rel (0) target = $region97
    $region96: #{tpu_custom_call.1} parent=1 // pred_region
      _
    $region97: #{tpu_custom_call.1} parent=1 // pred_fallthru
      _
    %3744 = vsyncpa [#allocation3], 1
    %3745 = vsyncpa [#allocation5], 1
    %3746 = vsyncpa [#allocation8], 1
    %3747 = vsyncpa [#allocation11], 1

</llo_original>
